<compile_context>
chip_gen: v7x
topology: tpu7x:2x2x1
jax: 0.10.0
libtpu: 0.0.40
codegen_flags: <defaults>
</compile_context>

<pallas_src>
import jax
import jax.numpy as jnp
from jax import lax
from jax.experimental import pallas as pl
from jax.experimental.pallas import tpu as pltpu

BERT_HIDDEN = 768
VOCAB = 1000

_VMEM_SPEC = pl.BlockSpec(memory_space=pltpu.MemorySpace.VMEM)


# ----------------------------------------------------------------------------
# Fused kernel: pooler(tanh) -> text features(ReLU, lane-dense) -> mask/price
#               -> 2-layer LSTM (time-major, fully unrolled) -> final Linear.
# PyTorch gate order: [i, f, g, o].
# ----------------------------------------------------------------------------
def _fused_forward_kernel(mean_ref, poolw_ref, poolb_ref, tfw_ref, tfb_ref,
                          mask_ref, price_ref,
                          wih0_ref, whh0_ref, b0_ref, w1_ref, b1_ref,
                          wout_ref, bout_ref,
                          y_ref, h_ref, c_ref):
    TB = mean_ref.shape[0]
    B = y_ref.shape[0]
    H = h_ref.shape[2]
    T = TB // B

    # --- BERT pooler: tanh(mean_emb @ W_pool^T + b_pool) ---------------------
    pooled = jnp.tanh(
        jnp.dot(mean_ref[...], poolw_ref[...], preferred_element_type=jnp.float32)
        + poolb_ref[...])                                          # (TB, 768)

    # --- text features, lane-dense: column 0 of tfw/tfb is zero --------------
    feat = jnp.maximum(
        jnp.dot(pooled, tfw_ref[...], preferred_element_type=jnp.float32)
        + tfb_ref[...], 0.0)                                       # (TB, H), col 0 == 0

    # per-timestep news mask + stock price inserted into lane 0
    lane = lax.broadcasted_iota(jnp.int32, (TB, H), 1)
    x = feat * mask_ref[...] + jnp.where(lane == 0, price_ref[...], 0.0)   # (TB, H)

    # --- hoisted layer-0 input projection (no recurrence dependency) ---------
    g0_pre = (jnp.dot(x, wih0_ref[...], preferred_element_type=jnp.float32)
              + b0_ref[...])                                       # (TB, 4H)

    whh0 = whh0_ref[...]          # (H, 4H)
    w1 = w1_ref[...]              # (2H, 4H) = [Wih1; Whh1] stacked
    b1 = b1_ref[...]              # (1, 4H)

    def cell_act(g, c):
        # 2 full-width EUP pushes instead of 4 per-gate pushes.
        sg = jax.nn.sigmoid(g)                                     # (B, 4H)
        th = jnp.tanh(g)                                           # (B, 4H)
        i_g = sg[:, 0 * H:1 * H]
        f_g = sg[:, 1 * H:2 * H]
        g_g = th[:, 2 * H:3 * H]
        o_g = sg[:, 3 * H:4 * H]
        c_new = f_g * c + i_g * g_g
        h_new = o_g * jnp.tanh(c_new)
        return h_new, c_new

    zero = jnp.zeros((B, H), jnp.float32)
    h0, c0, h1, c1 = zero, zero, zero, zero

    # fully unrolled recurrence (T is small & static); data is time-major so the
    # per-step block of g0_pre is a contiguous, statically-sliced row range.
    for t in range(T):
        g0 = g0_pre[t * B:(t + 1) * B, :] + jnp.dot(
            h0, whh0, preferred_element_type=jnp.float32)
        h0, c0 = cell_act(g0, c0)

        xh = jnp.concatenate([h0, h1], axis=1)                     # (B, 2H)
        g1 = jnp.dot(xh, w1, preferred_element_type=jnp.float32) + b1
        h1, c1 = cell_act(g1, c1)

    # final Linear on layer-1 output at the last timestep
    y_ref[...] = (jnp.dot(h1, wout_ref[...], preferred_element_type=jnp.float32)
                  + bout_ref[...]).astype(y_ref.dtype)
    h_ref[0] = h0
    h_ref[1] = h1
    c_ref[0] = c0
    c_ref[1] = c1


def fused_forward(mean_tm, pool_w_t, pool_b, tf_w_pad, tf_b_pad,
                  mask_tm, price_tm,
                  wih0_t, whh0_t, b0, w1_stacked, b1, wout_t, bout,
                  *, B, T, H):
    TB = T * B
    D = BERT_HIDDEN

    # advisory cost estimate so XLA overlaps the embedding/mean glue with the kernel
    flops = (2 * TB * D * D + 2 * TB * D * H + 2 * TB * H * 4 * H
             + T * (2 * B * H * 4 * H + 2 * B * 2 * H * 4 * H) + 2 * B * H)
    transcendentals = TB * D + T * 2 * B * 9 * H
    bytes_accessed = 4 * (TB * D + D * D + D + D * H + H + 2 * TB
                          + 2 * H * 4 * H + 2 * H * 4 * H + 2 * 4 * H
                          + H + 1 + B + 4 * B * H)

    # TODO(synk): if B or T ever grows (real BERT batches), add a batch-parallel grid
    # axis (dimension_semantics=("parallel",)) so v7x's second TensorCore is used and
    # tile the 768-dim matmuls; at (B=2, T=8) a single grid-less program is optimal.
    return pl.pallas_call(
        _fused_forward_kernel,
        out_shape=(
            jax.ShapeDtypeStruct((B, 1), jnp.float32),      # y
            jax.ShapeDtypeStruct((2, B, H), jnp.float32),   # h_n
            jax.ShapeDtypeStruct((2, B, H), jnp.float32),   # c_n
        ),
        in_specs=[_VMEM_SPEC] * 14,
        out_specs=(_VMEM_SPEC, _VMEM_SPEC, _VMEM_SPEC),
        compiler_params=pltpu.CompilerParams(vmem_limit_bytes=32 << 20),
        cost_estimate=pl.CostEstimate(flops=flops,
                                      transcendentals=transcendentals,
                                      bytes_accessed=bytes_accessed),
    )(mean_tm, pool_w_t, pool_b, tf_w_pad, tf_b_pad, mask_tm, price_tm,
      wih0_t, whh0_t, b0, w1_stacked, b1, wout_t, bout)


# ----------------------------------------------------------------------------
# Parameter init (deterministic, PyTorch-shaped) and full forward
# ----------------------------------------------------------------------------
def init_params(key, n_news_features):
    F = n_news_features
    H = F + 1
    ks = jax.random.split(key, 16)

    def u(k, shape, fan_in):
        bound = 1.0 / jnp.sqrt(jnp.float32(fan_in))
        return jax.random.uniform(k, shape, jnp.float32, -bound, bound)

    p = {}
    # synthetic BERT stand-in
    p["emb"] = jax.random.normal(ks[0], (VOCAB, BERT_HIDDEN), jnp.float32) * 0.02
    p["pool_w"] = u(ks[1], (BERT_HIDDEN, BERT_HIDDEN), BERT_HIDDEN)   # (out, in)
    p["pool_b"] = u(ks[2], (BERT_HIDDEN,), BERT_HIDDEN)
    # text_feature_ext: Linear(768, F)
    p["tf_w"] = u(ks[3], (F, BERT_HIDDEN), BERT_HIDDEN)
    p["tf_b"] = u(ks[4], (F,), BERT_HIDDEN)
    # LSTM layer 0 (input D=H) and layer 1 (input H)
    p["wih0"] = u(ks[5], (4 * H, H), H)
    p["whh0"] = u(ks[6], (4 * H, H), H)
    p["bih0"] = u(ks[7], (4 * H,), H)
    p["bhh0"] = u(ks[8], (4 * H,), H)
    p["wih1"] = u(ks[9], (4 * H, H), H)
    p["whh1"] = u(ks[10], (4 * H, H), H)
    p["bih1"] = u(ks[11], (4 * H,), H)
    p["bhh1"] = u(ks[12], (4 * H,), H)
    # final Linear(H, 1)
    p["out_w"] = u(ks[13], (1, H), H)
    p["out_b"] = u(ks[14], (1,), H)
    return p


def stock_price_model_forward(params, news_input_ids, news_attention_mask,
                              stock_price, n_news_features):
    B, T, L = news_input_ids.shape
    F = n_news_features
    H = F + 1

    # --- synthetic BERT embedding + masked mean (plain-JAX glue, see TODO) ---
    emb = jnp.take(params["emb"], news_input_ids, axis=0)            # (B,T,L,768)
    m = news_attention_mask.astype(jnp.float32)[..., None]           # (B,T,L,1)
    denom = jnp.maximum(m.sum(axis=2), 1.0)                          # (B,T,1)
    mean_emb = (emb * m).sum(axis=2) / denom                         # (B,T,768)

    # time-major flattening (row = t*B + b): per-step blocks are contiguous in the kernel
    mean_tm = mean_emb.transpose(1, 0, 2).reshape(T * B, BERT_HIDDEN)
    price_tm = stock_price.transpose(1, 0, 2).reshape(T * B, 1).astype(jnp.float32)

    # per-timestep condition `if news_input_ids[:, i, :].sum() > 0` -> global mask per t
    step_mask = (news_input_ids.sum(axis=(0, 2)) > 0).astype(jnp.float32)   # (T,)
    mask_tm = jnp.repeat(step_mask, B).reshape(T * B, 1)

    # --- weights: pre-transposed / lane-padded / stacked for the fused kernel ---
    pool_w_t = params["pool_w"].T                                    # (768, 768)
    pool_b = params["pool_b"].reshape(1, BERT_HIDDEN)
    # lane-dense text feature: zero column 0 so lane 0 stays free for stock_price
    tf_w_pad = jnp.concatenate(
        [jnp.zeros((BERT_HIDDEN, 1), jnp.float32), params["tf_w"].T], axis=1)   # (768, H)
    tf_b_pad = jnp.concatenate(
        [jnp.zeros((1,), jnp.float32), params["tf_b"]]).reshape(1, H)
    wih0_t = params["wih0"].T                                        # (H, 4H)
    whh0_t = params["whh0"].T                                        # (H, 4H)
    b0 = (params["bih0"] + params["bhh0"]).reshape(1, 4 * H)
    w1_stacked = jnp.concatenate(
        [params["wih1"].T, params["whh1"].T], axis=0)                # (2H, 4H)
    b1 = (params["bih1"] + params["bhh1"]).reshape(1, 4 * H)
    wout_t = params["out_w"].T                                       # (H, 1)
    bout = params["out_b"].reshape(1, 1)

    y, h_n, c_n = fused_forward(
        mean_tm, pool_w_t, pool_b, tf_w_pad, tf_b_pad, mask_tm, price_tm,
        wih0_t, whh0_t, b0, w1_stacked, b1, wout_t, bout,
        B=B, T=T, H=H)
    return y, (h_n, c_n)


if __name__ == "__main__":
    n_news_features = 31                    # hidden size = 32, 4*H = 128 (lane friendly)
    B, T, L = 2, 8, 8

    key = jax.random.PRNGKey(0)
    k_par, k_ids, k_mask, k_price = jax.random.split(key, 4)
    params = init_params(k_par, n_news_features)

    news_input_ids = jax.random.randint(k_ids, (B, T, L), 0, VOCAB, dtype=jnp.int32)
    # make one timestep have no news to exercise the masked branch
    news_input_ids = news_input_ids.at[:, 3, :].set(0)
    news_attention_mask = (news_input_ids > 0).astype(jnp.int32)
    stock_price = jax.random.normal(k_price, (B, T, 1), jnp.float32)

    y, (h_n, c_n) = stock_price_model_forward(
        params, news_input_ids, news_attention_mask, stock_price, n_news_features)
    jax.block_until_ready((y, h_n, c_n))

    assert y.shape == (B, 1)
    assert h_n.shape == (2, B, n_news_features + 1)
    assert c_n.shape == (2, B, n_news_features + 1)
    print("KERNEL_OK")
</pallas_src>

<mosaic_0001>
module attributes {stable_mosaic.version = 11 : i64} {
  func.func @_fused_forward_kernel(%arg0: memref<16x768xf32, #tpu.memory_space<vmem>>, %arg1: memref<768x768xf32, #tpu.memory_space<vmem>>, %arg2: memref<1x768xf32, #tpu.memory_space<vmem>>, %arg3: memref<768x32xf32, #tpu.memory_space<vmem>>, %arg4: memref<1x32xf32, #tpu.memory_space<vmem>>, %arg5: memref<16x1xf32, #tpu.memory_space<vmem>>, %arg6: memref<16x1xf32, #tpu.memory_space<vmem>>, %arg7: memref<32x128xf32, #tpu.memory_space<vmem>>, %arg8: memref<32x128xf32, #tpu.memory_space<vmem>>, %arg9: memref<1x128xf32, #tpu.memory_space<vmem>>, %arg10: memref<64x128xf32, #tpu.memory_space<vmem>>, %arg11: memref<1x128xf32, #tpu.memory_space<vmem>>, %arg12: memref<32x1xf32, #tpu.memory_space<vmem>>, %arg13: memref<1x1xf32, #tpu.memory_space<vmem>>, %arg14: memref<2x1xf32, #tpu.memory_space<vmem>>, %arg15: memref<2x2x32xf32, #tpu.memory_space<vmem>>, %arg16: memref<2x2x32xf32, #tpu.memory_space<vmem>>) attributes {dimension_semantics = [], scalar_prefetch = 0 : i64, scratch_operands = 0 : i64, tpu.core_type = #tpu.core_type<tc>} {
    %c0 = arith.constant 0 : index
    %c0_0 = arith.constant 0 : index
    %0 = vector.load %arg0[%c0, %c0_0] : memref<16x768xf32, #tpu.memory_space<vmem>>, vector<16x768xf32>
    %c0_1 = arith.constant 0 : index
    %c0_2 = arith.constant 0 : index
    %1 = vector.load %arg1[%c0_1, %c0_2] : memref<768x768xf32, #tpu.memory_space<vmem>>, vector<768x768xf32>
    %cst = arith.constant dense<0.000000e+00> : vector<16x768xf32>
    %2 = tpu.matmul %0, %1, %cst {dimension_numbers = #tpu.dot_dimension_numbers<[1], [0], [0], [1], [0, 0, 1, 1], [], []>} : vector<16x768xf32>, vector<768x768xf32>, vector<16x768xf32> -> vector<16x768xf32>
    %c0_3 = arith.constant 0 : index
    %c0_4 = arith.constant 0 : index
    %3 = vector.load %arg2[%c0_3, %c0_4] : memref<1x768xf32, #tpu.memory_space<vmem>>, vector<1x768xf32>
    %4 = vector.broadcast %3 : vector<1x768xf32> to vector<16x768xf32>
    %5 = arith.addf %2, %4 : vector<16x768xf32>
    %6 = math.tanh %5 : vector<16x768xf32>
    %c0_5 = arith.constant 0 : index
    %c0_6 = arith.constant 0 : index
    %7 = vector.load %arg3[%c0_5, %c0_6] : memref<768x32xf32, #tpu.memory_space<vmem>>, vector<768x32xf32>
    %cst_7 = arith.constant dense<0.000000e+00> : vector<16x32xf32>
    %8 = tpu.matmul %6, %7, %cst_7 {dimension_numbers = #tpu.dot_dimension_numbers<[1], [0], [0], [1], [0, 0, 1, 1], [], []>} : vector<16x768xf32>, vector<768x32xf32>, vector<16x32xf32> -> vector<16x32xf32>
    %c0_8 = arith.constant 0 : index
    %c0_9 = arith.constant 0 : index
    %9 = vector.load %arg4[%c0_8, %c0_9] : memref<1x32xf32, #tpu.memory_space<vmem>>, vector<1x32xf32>
    %10 = vector.broadcast %9 : vector<1x32xf32> to vector<16x32xf32>
    %11 = arith.addf %8, %10 : vector<16x32xf32>
    %cst_10 = arith.constant 0.000000e+00 : f32
    %12 = vector.broadcast %cst_10 : f32 to vector<16x32xf32>
    %13 = arith.maximumf %11, %12 : vector<16x32xf32>
    %14 = tpu.iota {dimensions = array<i32: 1>} : vector<16x32xi32>
    %c0_11 = arith.constant 0 : index
    %c0_12 = arith.constant 0 : index
    %15 = vector.load %arg5[%c0_11, %c0_12] : memref<16x1xf32, #tpu.memory_space<vmem>>, vector<16x1xf32>
    %16 = vector.broadcast %15 : vector<16x1xf32> to vector<16x32xf32>
    %17 = arith.mulf %13, %16 : vector<16x32xf32>
    %c0_i32 = arith.constant 0 : i32
    %18 = vector.broadcast %c0_i32 : i32 to vector<16x32xi32>
    %19 = arith.cmpi eq, %14, %18 : vector<16x32xi32>
    %c0_13 = arith.constant 0 : index
    %c0_14 = arith.constant 0 : index
    %20 = vector.load %arg6[%c0_13, %c0_14] : memref<16x1xf32, #tpu.memory_space<vmem>>, vector<16x1xf32>
    %cst_15 = arith.constant 0.000000e+00 : f32
    %21 = vector.shape_cast %20 : vector<16x1xf32> to vector<16x1xf32>
    %22 = vector.broadcast %21 : vector<16x1xf32> to vector<16x32xf32>
    %23 = vector.broadcast %cst_15 : f32 to vector<16x32xf32>
    %24 = arith.select %19, %22, %23 : vector<16x32xi1>, vector<16x32xf32>
    %25 = arith.addf %17, %24 : vector<16x32xf32>
    %c0_16 = arith.constant 0 : index
    %c0_17 = arith.constant 0 : index
    %26 = vector.load %arg7[%c0_16, %c0_17] : memref<32x128xf32, #tpu.memory_space<vmem>>, vector<32x128xf32>
    %cst_18 = arith.constant dense<0.000000e+00> : vector<16x128xf32>
    %27 = tpu.matmul %25, %26, %cst_18 {dimension_numbers = #tpu.dot_dimension_numbers<[1], [0], [0], [1], [0, 0, 1, 1], [], []>} : vector<16x32xf32>, vector<32x128xf32>, vector<16x128xf32> -> vector<16x128xf32>
    %c0_19 = arith.constant 0 : index
    %c0_20 = arith.constant 0 : index
    %28 = vector.load %arg9[%c0_19, %c0_20] : memref<1x128xf32, #tpu.memory_space<vmem>>, vector<1x128xf32>
    %29 = vector.broadcast %28 : vector<1x128xf32> to vector<16x128xf32>
    %30 = arith.addf %27, %29 : vector<16x128xf32>
    %c0_21 = arith.constant 0 : index
    %c0_22 = arith.constant 0 : index
    %31 = vector.load %arg8[%c0_21, %c0_22] : memref<32x128xf32, #tpu.memory_space<vmem>>, vector<32x128xf32>
    %c0_23 = arith.constant 0 : index
    %c0_24 = arith.constant 0 : index
    %32 = vector.load %arg10[%c0_23, %c0_24] : memref<64x128xf32, #tpu.memory_space<vmem>>, vector<64x128xf32>
    %c0_25 = arith.constant 0 : index
    %c0_26 = arith.constant 0 : index
    %33 = vector.load %arg11[%c0_25, %c0_26] : memref<1x128xf32, #tpu.memory_space<vmem>>, vector<1x128xf32>
    %cst_27 = arith.constant 0.000000e+00 : f32
    %34 = vector.broadcast %cst_27 : f32 to vector<2x32xf32>
    %35 = vector.extract_strided_slice %30 {offsets = [0, 0], sizes = [2, 128], strides = [1, 1]} : vector<16x128xf32> to vector<2x128xf32>
    %cst_28 = arith.constant dense<0.000000e+00> : vector<2x128xf32>
    %36 = tpu.matmul %34, %31, %cst_28 {dimension_numbers = #tpu.dot_dimension_numbers<[1], [0], [0], [1], [0, 0, 1, 1], [], []>} : vector<2x32xf32>, vector<32x128xf32>, vector<2x128xf32> -> vector<2x128xf32>
    %37 = arith.addf %35, %36 : vector<2x128xf32>
    %38 = arith.negf %37 : vector<2x128xf32>
    %39 = math.exp %38 : vector<2x128xf32>
    %cst_29 = arith.constant 1.000000e+00 : f32
    %40 = vector.broadcast %cst_29 : f32 to vector<2x128xf32>
    %41 = arith.addf %40, %39 : vector<2x128xf32>
    %42 = arith.divf %40, %41 : vector<2x128xf32>
    %43 = math.tanh %37 : vector<2x128xf32>
    %44 = vector.extract_strided_slice %42 {offsets = [0, 0], sizes = [2, 32], strides = [1, 1]} : vector<2x128xf32> to vector<2x32xf32>
    %45 = vector.extract_strided_slice %42 {offsets = [0, 32], sizes = [2, 32], strides = [1, 1]} : vector<2x128xf32> to vector<2x32xf32>
    %46 = vector.extract_strided_slice %43 {offsets = [0, 64], sizes = [2, 32], strides = [1, 1]} : vector<2x128xf32> to vector<2x32xf32>
    %47 = vector.extract_strided_slice %42 {offsets = [0, 96], sizes = [2, 32], strides = [1, 1]} : vector<2x128xf32> to vector<2x32xf32>
    %48 = arith.mulf %45, %34 : vector<2x32xf32>
    %49 = arith.mulf %44, %46 : vector<2x32xf32>
    %50 = arith.addf %48, %49 : vector<2x32xf32>
    %51 = math.tanh %50 : vector<2x32xf32>
    %52 = arith.mulf %47, %51 : vector<2x32xf32>
    %53 = tpu.concatenate %52, %34 in 1 : vector<2x32xf32>, vector<2x32xf32> -> vector<2x64xf32>
    %cst_30 = arith.constant dense<0.000000e+00> : vector<2x128xf32>
    %54 = tpu.matmul %53, %32, %cst_30 {dimension_numbers = #tpu.dot_dimension_numbers<[1], [0], [0], [1], [0, 0, 1, 1], [], []>} : vector<2x64xf32>, vector<64x128xf32>, vector<2x128xf32> -> vector<2x128xf32>
    %55 = vector.broadcast %33 : vector<1x128xf32> to vector<2x128xf32>
    %56 = arith.addf %54, %55 : vector<2x128xf32>
    %57 = arith.negf %56 : vector<2x128xf32>
    %58 = math.exp %57 : vector<2x128xf32>
    %cst_31 = arith.constant 1.000000e+00 : f32
    %59 = vector.broadcast %cst_31 : f32 to vector<2x128xf32>
    %60 = arith.addf %59, %58 : vector<2x128xf32>
    %61 = arith.divf %59, %60 : vector<2x128xf32>
    %62 = math.tanh %56 : vector<2x128xf32>
    %63 = vector.extract_strided_slice %61 {offsets = [0, 0], sizes = [2, 32], strides = [1, 1]} : vector<2x128xf32> to vector<2x32xf32>
    %64 = vector.extract_strided_slice %61 {offsets = [0, 32], sizes = [2, 32], strides = [1, 1]} : vector<2x128xf32> to vector<2x32xf32>
    %65 = vector.extract_strided_slice %62 {offsets = [0, 64], sizes = [2, 32], strides = [1, 1]} : vector<2x128xf32> to vector<2x32xf32>
    %66 = vector.extract_strided_slice %61 {offsets = [0, 96], sizes = [2, 32], strides = [1, 1]} : vector<2x128xf32> to vector<2x32xf32>
    %67 = arith.mulf %64, %34 : vector<2x32xf32>
    %68 = arith.mulf %63, %65 : vector<2x32xf32>
    %69 = arith.addf %67, %68 : vector<2x32xf32>
    %70 = math.tanh %69 : vector<2x32xf32>
    %71 = arith.mulf %66, %70 : vector<2x32xf32>
    %72 = vector.extract_strided_slice %30 {offsets = [2, 0], sizes = [2, 128], strides = [1, 1]} : vector<16x128xf32> to vector<2x128xf32>
    %cst_32 = arith.constant dense<0.000000e+00> : vector<2x128xf32>
    %73 = tpu.matmul %52, %31, %cst_32 {dimension_numbers = #tpu.dot_dimension_numbers<[1], [0], [0], [1], [0, 0, 1, 1], [], []>} : vector<2x32xf32>, vector<32x128xf32>, vector<2x128xf32> -> vector<2x128xf32>
    %74 = arith.addf %72, %73 : vector<2x128xf32>
    %75 = arith.negf %74 : vector<2x128xf32>
    %76 = math.exp %75 : vector<2x128xf32>
    %cst_33 = arith.constant 1.000000e+00 : f32
    %77 = vector.broadcast %cst_33 : f32 to vector<2x128xf32>
    %78 = arith.addf %77, %76 : vector<2x128xf32>
    %79 = arith.divf %77, %78 : vector<2x128xf32>
    %80 = math.tanh %74 : vector<2x128xf32>
    %81 = vector.extract_strided_slice %79 {offsets = [0, 0], sizes = [2, 32], strides = [1, 1]} : vector<2x128xf32> to vector<2x32xf32>
    %82 = vector.extract_strided_slice %79 {offsets = [0, 32], sizes = [2, 32], strides = [1, 1]} : vector<2x128xf32> to vector<2x32xf32>
    %83 = vector.extract_strided_slice %80 {offsets = [0, 64], sizes = [2, 32], strides = [1, 1]} : vector<2x128xf32> to vector<2x32xf32>
    %84 = vector.extract_strided_slice %79 {offsets = [0, 96], sizes = [2, 32], strides = [1, 1]} : vector<2x128xf32> to vector<2x32xf32>
    %85 = arith.mulf %82, %50 : vector<2x32xf32>
    %86 = arith.mulf %81, %83 : vector<2x32xf32>
    %87 = arith.addf %85, %86 : vector<2x32xf32>
    %88 = math.tanh %87 : vector<2x32xf32>
    %89 = arith.mulf %84, %88 : vector<2x32xf32>
    %90 = tpu.concatenate %89, %71 in 1 : vector<2x32xf32>, vector<2x32xf32> -> vector<2x64xf32>
    %cst_34 = arith.constant dense<0.000000e+00> : vector<2x128xf32>
    %91 = tpu.matmul %90, %32, %cst_34 {dimension_numbers = #tpu.dot_dimension_numbers<[1], [0], [0], [1], [0, 0, 1, 1], [], []>} : vector<2x64xf32>, vector<64x128xf32>, vector<2x128xf32> -> vector<2x128xf32>
    %92 = vector.broadcast %33 : vector<1x128xf32> to vector<2x128xf32>
    %93 = arith.addf %91, %92 : vector<2x128xf32>
    %94 = arith.negf %93 : vector<2x128xf32>
    %95 = math.exp %94 : vector<2x128xf32>
    %cst_35 = arith.constant 1.000000e+00 : f32
    %96 = vector.broadcast %cst_35 : f32 to vector<2x128xf32>
    %97 = arith.addf %96, %95 : vector<2x128xf32>
    %98 = arith.divf %96, %97 : vector<2x128xf32>
    %99 = math.tanh %93 : vector<2x128xf32>
    %100 = vector.extract_strided_slice %98 {offsets = [0, 0], sizes = [2, 32], strides = [1, 1]} : vector<2x128xf32> to vector<2x32xf32>
    %101 = vector.extract_strided_slice %98 {offsets = [0, 32], sizes = [2, 32], strides = [1, 1]} : vector<2x128xf32> to vector<2x32xf32>
    %102 = vector.extract_strided_slice %99 {offsets = [0, 64], sizes = [2, 32], strides = [1, 1]} : vector<2x128xf32> to vector<2x32xf32>
    %103 = vector.extract_strided_slice %98 {offsets = [0, 96], sizes = [2, 32], strides = [1, 1]} : vector<2x128xf32> to vector<2x32xf32>
    %104 = arith.mulf %101, %69 : vector<2x32xf32>
    %105 = arith.mulf %100, %102 : vector<2x32xf32>
    %106 = arith.addf %104, %105 : vector<2x32xf32>
    %107 = math.tanh %106 : vector<2x32xf32>
    %108 = arith.mulf %103, %107 : vector<2x32xf32>
    %109 = vector.extract_strided_slice %30 {offsets = [4, 0], sizes = [2, 128], strides = [1, 1]} : vector<16x128xf32> to vector<2x128xf32>
    %cst_36 = arith.constant dense<0.000000e+00> : vector<2x128xf32>
    %110 = tpu.matmul %89, %31, %cst_36 {dimension_numbers = #tpu.dot_dimension_numbers<[1], [0], [0], [1], [0, 0, 1, 1], [], []>} : vector<2x32xf32>, vector<32x128xf32>, vector<2x128xf32> -> vector<2x128xf32>
    %111 = arith.addf %109, %110 : vector<2x128xf32>
    %112 = arith.negf %111 : vector<2x128xf32>
    %113 = math.exp %112 : vector<2x128xf32>
    %cst_37 = arith.constant 1.000000e+00 : f32
    %114 = vector.broadcast %cst_37 : f32 to vector<2x128xf32>
    %115 = arith.addf %114, %113 : vector<2x128xf32>
    %116 = arith.divf %114, %115 : vector<2x128xf32>
    %117 = math.tanh %111 : vector<2x128xf32>
    %118 = vector.extract_strided_slice %116 {offsets = [0, 0], sizes = [2, 32], strides = [1, 1]} : vector<2x128xf32> to vector<2x32xf32>
    %119 = vector.extract_strided_slice %116 {offsets = [0, 32], sizes = [2, 32], strides = [1, 1]} : vector<2x128xf32> to vector<2x32xf32>
    %120 = vector.extract_strided_slice %117 {offsets = [0, 64], sizes = [2, 32], strides = [1, 1]} : vector<2x128xf32> to vector<2x32xf32>
    %121 = vector.extract_strided_slice %116 {offsets = [0, 96], sizes = [2, 32], strides = [1, 1]} : vector<2x128xf32> to vector<2x32xf32>
    %122 = arith.mulf %119, %87 : vector<2x32xf32>
    %123 = arith.mulf %118, %120 : vector<2x32xf32>
    %124 = arith.addf %122, %123 : vector<2x32xf32>
    %125 = math.tanh %124 : vector<2x32xf32>
    %126 = arith.mulf %121, %125 : vector<2x32xf32>
    %127 = tpu.concatenate %126, %108 in 1 : vector<2x32xf32>, vector<2x32xf32> -> vector<2x64xf32>
    %cst_38 = arith.constant dense<0.000000e+00> : vector<2x128xf32>
    %128 = tpu.matmul %127, %32, %cst_38 {dimension_numbers = #tpu.dot_dimension_numbers<[1], [0], [0], [1], [0, 0, 1, 1], [], []>} : vector<2x64xf32>, vector<64x128xf32>, vector<2x128xf32> -> vector<2x128xf32>
    %129 = vector.broadcast %33 : vector<1x128xf32> to vector<2x128xf32>
    %130 = arith.addf %128, %129 : vector<2x128xf32>
    %131 = arith.negf %130 : vector<2x128xf32>
    %132 = math.exp %131 : vector<2x128xf32>
    %cst_39 = arith.constant 1.000000e+00 : f32
    %133 = vector.broadcast %cst_39 : f32 to vector<2x128xf32>
    %134 = arith.addf %133, %132 : vector<2x128xf32>
    %135 = arith.divf %133, %134 : vector<2x128xf32>
    %136 = math.tanh %130 : vector<2x128xf32>
    %137 = vector.extract_strided_slice %135 {offsets = [0, 0], sizes = [2, 32], strides = [1, 1]} : vector<2x128xf32> to vector<2x32xf32>
    %138 = vector.extract_strided_slice %135 {offsets = [0, 32], sizes = [2, 32], strides = [1, 1]} : vector<2x128xf32> to vector<2x32xf32>
    %139 = vector.extract_strided_slice %136 {offsets = [0, 64], sizes = [2, 32], strides = [1, 1]} : vector<2x128xf32> to vector<2x32xf32>
    %140 = vector.extract_strided_slice %135 {offsets = [0, 96], sizes = [2, 32], strides = [1, 1]} : vector<2x128xf32> to vector<2x32xf32>
    %141 = arith.mulf %138, %106 : vector<2x32xf32>
    %142 = arith.mulf %137, %139 : vector<2x32xf32>
    %143 = arith.addf %141, %142 : vector<2x32xf32>
    %144 = math.tanh %143 : vector<2x32xf32>
    %145 = arith.mulf %140, %144 : vector<2x32xf32>
    %146 = vector.extract_strided_slice %30 {offsets = [6, 0], sizes = [2, 128], strides = [1, 1]} : vector<16x128xf32> to vector<2x128xf32>
    %cst_40 = arith.constant dense<0.000000e+00> : vector<2x128xf32>
    %147 = tpu.matmul %126, %31, %cst_40 {dimension_numbers = #tpu.dot_dimension_numbers<[1], [0], [0], [1], [0, 0, 1, 1], [], []>} : vector<2x32xf32>, vector<32x128xf32>, vector<2x128xf32> -> vector<2x128xf32>
    %148 = arith.addf %146, %147 : vector<2x128xf32>
    %149 = arith.negf %148 : vector<2x128xf32>
    %150 = math.exp %149 : vector<2x128xf32>
    %cst_41 = arith.constant 1.000000e+00 : f32
    %151 = vector.broadcast %cst_41 : f32 to vector<2x128xf32>
    %152 = arith.addf %151, %150 : vector<2x128xf32>
    %153 = arith.divf %151, %152 : vector<2x128xf32>
    %154 = math.tanh %148 : vector<2x128xf32>
    %155 = vector.extract_strided_slice %153 {offsets = [0, 0], sizes = [2, 32], strides = [1, 1]} : vector<2x128xf32> to vector<2x32xf32>
    %156 = vector.extract_strided_slice %153 {offsets = [0, 32], sizes = [2, 32], strides = [1, 1]} : vector<2x128xf32> to vector<2x32xf32>
    %157 = vector.extract_strided_slice %154 {offsets = [0, 64], sizes = [2, 32], strides = [1, 1]} : vector<2x128xf32> to vector<2x32xf32>
    %158 = vector.extract_strided_slice %153 {offsets = [0, 96], sizes = [2, 32], strides = [1, 1]} : vector<2x128xf32> to vector<2x32xf32>
    %159 = arith.mulf %156, %124 : vector<2x32xf32>
    %160 = arith.mulf %155, %157 : vector<2x32xf32>
    %161 = arith.addf %159, %160 : vector<2x32xf32>
    %162 = math.tanh %161 : vector<2x32xf32>
    %163 = arith.mulf %158, %162 : vector<2x32xf32>
    %164 = tpu.concatenate %163, %145 in 1 : vector<2x32xf32>, vector<2x32xf32> -> vector<2x64xf32>
    %cst_42 = arith.constant dense<0.000000e+00> : vector<2x128xf32>
    %165 = tpu.matmul %164, %32, %cst_42 {dimension_numbers = #tpu.dot_dimension_numbers<[1], [0], [0], [1], [0, 0, 1, 1], [], []>} : vector<2x64xf32>, vector<64x128xf32>, vector<2x128xf32> -> vector<2x128xf32>
    %166 = vector.broadcast %33 : vector<1x128xf32> to vector<2x128xf32>
    %167 = arith.addf %165, %166 : vector<2x128xf32>
    %168 = arith.negf %167 : vector<2x128xf32>
    %169 = math.exp %168 : vector<2x128xf32>
    %cst_43 = arith.constant 1.000000e+00 : f32
    %170 = vector.broadcast %cst_43 : f32 to vector<2x128xf32>
    %171 = arith.addf %170, %169 : vector<2x128xf32>
    %172 = arith.divf %170, %171 : vector<2x128xf32>
    %173 = math.tanh %167 : vector<2x128xf32>
    %174 = vector.extract_strided_slice %172 {offsets = [0, 0], sizes = [2, 32], strides = [1, 1]} : vector<2x128xf32> to vector<2x32xf32>
    %175 = vector.extract_strided_slice %172 {offsets = [0, 32], sizes = [2, 32], strides = [1, 1]} : vector<2x128xf32> to vector<2x32xf32>
    %176 = vector.extract_strided_slice %173 {offsets = [0, 64], sizes = [2, 32], strides = [1, 1]} : vector<2x128xf32> to vector<2x32xf32>
    %177 = vector.extract_strided_slice %172 {offsets = [0, 96], sizes = [2, 32], strides = [1, 1]} : vector<2x128xf32> to vector<2x32xf32>
    %178 = arith.mulf %175, %143 : vector<2x32xf32>
    %179 = arith.mulf %174, %176 : vector<2x32xf32>
    %180 = arith.addf %178, %179 : vector<2x32xf32>
    %181 = math.tanh %180 : vector<2x32xf32>
    %182 = arith.mulf %177, %181 : vector<2x32xf32>
    %183 = vector.extract_strided_slice %30 {offsets = [8, 0], sizes = [2, 128], strides = [1, 1]} : vector<16x128xf32> to vector<2x128xf32>
    %cst_44 = arith.constant dense<0.000000e+00> : vector<2x128xf32>
    %184 = tpu.matmul %163, %31, %cst_44 {dimension_numbers = #tpu.dot_dimension_numbers<[1], [0], [0], [1], [0, 0, 1, 1], [], []>} : vector<2x32xf32>, vector<32x128xf32>, vector<2x128xf32> -> vector<2x128xf32>
    %185 = arith.addf %183, %184 : vector<2x128xf32>
    %186 = arith.negf %185 : vector<2x128xf32>
    %187 = math.exp %186 : vector<2x128xf32>
    %cst_45 = arith.constant 1.000000e+00 : f32
    %188 = vector.broadcast %cst_45 : f32 to vector<2x128xf32>
    %189 = arith.addf %188, %187 : vector<2x128xf32>
    %190 = arith.divf %188, %189 : vector<2x128xf32>
    %191 = math.tanh %185 : vector<2x128xf32>
    %192 = vector.extract_strided_slice %190 {offsets = [0, 0], sizes = [2, 32], strides = [1, 1]} : vector<2x128xf32> to vector<2x32xf32>
    %193 = vector.extract_strided_slice %190 {offsets = [0, 32], sizes = [2, 32], strides = [1, 1]} : vector<2x128xf32> to vector<2x32xf32>
    %194 = vector.extract_strided_slice %191 {offsets = [0, 64], sizes = [2, 32], strides = [1, 1]} : vector<2x128xf32> to vector<2x32xf32>
    %195 = vector.extract_strided_slice %190 {offsets = [0, 96], sizes = [2, 32], strides = [1, 1]} : vector<2x128xf32> to vector<2x32xf32>
    %196 = arith.mulf %193, %161 : vector<2x32xf32>
    %197 = arith.mulf %192, %194 : vector<2x32xf32>
    %198 = arith.addf %196, %197 : vector<2x32xf32>
    %199 = math.tanh %198 : vector<2x32xf32>
    %200 = arith.mulf %195, %199 : vector<2x32xf32>
    %201 = tpu.concatenate %200, %182 in 1 : vector<2x32xf32>, vector<2x32xf32> -> vector<2x64xf32>
    %cst_46 = arith.constant dense<0.000000e+00> : vector<2x128xf32>
    %202 = tpu.matmul %201, %32, %cst_46 {dimension_numbers = #tpu.dot_dimension_numbers<[1], [0], [0], [1], [0, 0, 1, 1], [], []>} : vector<2x64xf32>, vector<64x128xf32>, vector<2x128xf32> -> vector<2x128xf32>
    %203 = vector.broadcast %33 : vector<1x128xf32> to vector<2x128xf32>
    %204 = arith.addf %202, %203 : vector<2x128xf32>
    %205 = arith.negf %204 : vector<2x128xf32>
    %206 = math.exp %205 : vector<2x128xf32>
    %cst_47 = arith.constant 1.000000e+00 : f32
    %207 = vector.broadcast %cst_47 : f32 to vector<2x128xf32>
    %208 = arith.addf %207, %206 : vector<2x128xf32>
    %209 = arith.divf %207, %208 : vector<2x128xf32>
    %210 = math.tanh %204 : vector<2x128xf32>
    %211 = vector.extract_strided_slice %209 {offsets = [0, 0], sizes = [2, 32], strides = [1, 1]} : vector<2x128xf32> to vector<2x32xf32>
    %212 = vector.extract_strided_slice %209 {offsets = [0, 32], sizes = [2, 32], strides = [1, 1]} : vector<2x128xf32> to vector<2x32xf32>
    %213 = vector.extract_strided_slice %210 {offsets = [0, 64], sizes = [2, 32], strides = [1, 1]} : vector<2x128xf32> to vector<2x32xf32>
    %214 = vector.extract_strided_slice %209 {offsets = [0, 96], sizes = [2, 32], strides = [1, 1]} : vector<2x128xf32> to vector<2x32xf32>
    %215 = arith.mulf %212, %180 : vector<2x32xf32>
    %216 = arith.mulf %211, %213 : vector<2x32xf32>
    %217 = arith.addf %215, %216 : vector<2x32xf32>
    %218 = math.tanh %217 : vector<2x32xf32>
    %219 = arith.mulf %214, %218 : vector<2x32xf32>
    %220 = vector.extract_strided_slice %30 {offsets = [10, 0], sizes = [2, 128], strides = [1, 1]} : vector<16x128xf32> to vector<2x128xf32>
    %cst_48 = arith.constant dense<0.000000e+00> : vector<2x128xf32>
    %221 = tpu.matmul %200, %31, %cst_48 {dimension_numbers = #tpu.dot_dimension_numbers<[1], [0], [0], [1], [0, 0, 1, 1], [], []>} : vector<2x32xf32>, vector<32x128xf32>, vector<2x128xf32> -> vector<2x128xf32>
    %222 = arith.addf %220, %221 : vector<2x128xf32>
    %223 = arith.negf %222 : vector<2x128xf32>
    %224 = math.exp %223 : vector<2x128xf32>
    %cst_49 = arith.constant 1.000000e+00 : f32
    %225 = vector.broadcast %cst_49 : f32 to vector<2x128xf32>
    %226 = arith.addf %225, %224 : vector<2x128xf32>
    %227 = arith.divf %225, %226 : vector<2x128xf32>
    %228 = math.tanh %222 : vector<2x128xf32>
    %229 = vector.extract_strided_slice %227 {offsets = [0, 0], sizes = [2, 32], strides = [1, 1]} : vector<2x128xf32> to vector<2x32xf32>
    %230 = vector.extract_strided_slice %227 {offsets = [0, 32], sizes = [2, 32], strides = [1, 1]} : vector<2x128xf32> to vector<2x32xf32>
    %231 = vector.extract_strided_slice %228 {offsets = [0, 64], sizes = [2, 32], strides = [1, 1]} : vector<2x128xf32> to vector<2x32xf32>
    %232 = vector.extract_strided_slice %227 {offsets = [0, 96], sizes = [2, 32], strides = [1, 1]} : vector<2x128xf32> to vector<2x32xf32>
    %233 = arith.mulf %230, %198 : vector<2x32xf32>
    %234 = arith.mulf %229, %231 : vector<2x32xf32>
    %235 = arith.addf %233, %234 : vector<2x32xf32>
    %236 = math.tanh %235 : vector<2x32xf32>
    %237 = arith.mulf %232, %236 : vector<2x32xf32>
    %238 = tpu.concatenate %237, %219 in 1 : vector<2x32xf32>, vector<2x32xf32> -> vector<2x64xf32>
    %cst_50 = arith.constant dense<0.000000e+00> : vector<2x128xf32>
    %239 = tpu.matmul %238, %32, %cst_50 {dimension_numbers = #tpu.dot_dimension_numbers<[1], [0], [0], [1], [0, 0, 1, 1], [], []>} : vector<2x64xf32>, vector<64x128xf32>, vector<2x128xf32> -> vector<2x128xf32>
    %240 = vector.broadcast %33 : vector<1x128xf32> to vector<2x128xf32>
    %241 = arith.addf %239, %240 : vector<2x128xf32>
    %242 = arith.negf %241 : vector<2x128xf32>
    %243 = math.exp %242 : vector<2x128xf32>
    %cst_51 = arith.constant 1.000000e+00 : f32
    %244 = vector.broadcast %cst_51 : f32 to vector<2x128xf32>
    %245 = arith.addf %244, %243 : vector<2x128xf32>
    %246 = arith.divf %244, %245 : vector<2x128xf32>
    %247 = math.tanh %241 : vector<2x128xf32>
    %248 = vector.extract_strided_slice %246 {offsets = [0, 0], sizes = [2, 32], strides = [1, 1]} : vector<2x128xf32> to vector<2x32xf32>
    %249 = vector.extract_strided_slice %246 {offsets = [0, 32], sizes = [2, 32], strides = [1, 1]} : vector<2x128xf32> to vector<2x32xf32>
    %250 = vector.extract_strided_slice %247 {offsets = [0, 64], sizes = [2, 32], strides = [1, 1]} : vector<2x128xf32> to vector<2x32xf32>
    %251 = vector.extract_strided_slice %246 {offsets = [0, 96], sizes = [2, 32], strides = [1, 1]} : vector<2x128xf32> to vector<2x32xf32>
    %252 = arith.mulf %249, %217 : vector<2x32xf32>
    %253 = arith.mulf %248, %250 : vector<2x32xf32>
    %254 = arith.addf %252, %253 : vector<2x32xf32>
    %255 = math.tanh %254 : vector<2x32xf32>
    %256 = arith.mulf %251, %255 : vector<2x32xf32>
    %257 = vector.extract_strided_slice %30 {offsets = [12, 0], sizes = [2, 128], strides = [1, 1]} : vector<16x128xf32> to vector<2x128xf32>
    %cst_52 = arith.constant dense<0.000000e+00> : vector<2x128xf32>
    %258 = tpu.matmul %237, %31, %cst_52 {dimension_numbers = #tpu.dot_dimension_numbers<[1], [0], [0], [1], [0, 0, 1, 1], [], []>} : vector<2x32xf32>, vector<32x128xf32>, vector<2x128xf32> -> vector<2x128xf32>
    %259 = arith.addf %257, %258 : vector<2x128xf32>
    %260 = arith.negf %259 : vector<2x128xf32>
    %261 = math.exp %260 : vector<2x128xf32>
    %cst_53 = arith.constant 1.000000e+00 : f32
    %262 = vector.broadcast %cst_53 : f32 to vector<2x128xf32>
    %263 = arith.addf %262, %261 : vector<2x128xf32>
    %264 = arith.divf %262, %263 : vector<2x128xf32>
    %265 = math.tanh %259 : vector<2x128xf32>
    %266 = vector.extract_strided_slice %264 {offsets = [0, 0], sizes = [2, 32], strides = [1, 1]} : vector<2x128xf32> to vector<2x32xf32>
    %267 = vector.extract_strided_slice %264 {offsets = [0, 32], sizes = [2, 32], strides = [1, 1]} : vector<2x128xf32> to vector<2x32xf32>
    %268 = vector.extract_strided_slice %265 {offsets = [0, 64], sizes = [2, 32], strides = [1, 1]} : vector<2x128xf32> to vector<2x32xf32>
    %269 = vector.extract_strided_slice %264 {offsets = [0, 96], sizes = [2, 32], strides = [1, 1]} : vector<2x128xf32> to vector<2x32xf32>
    %270 = arith.mulf %267, %235 : vector<2x32xf32>
    %271 = arith.mulf %266, %268 : vector<2x32xf32>
    %272 = arith.addf %270, %271 : vector<2x32xf32>
    %273 = math.tanh %272 : vector<2x32xf32>
    %274 = arith.mulf %269, %273 : vector<2x32xf32>
    %275 = tpu.concatenate %274, %256 in 1 : vector<2x32xf32>, vector<2x32xf32> -> vector<2x64xf32>
    %cst_54 = arith.constant dense<0.000000e+00> : vector<2x128xf32>
    %276 = tpu.matmul %275, %32, %cst_54 {dimension_numbers = #tpu.dot_dimension_numbers<[1], [0], [0], [1], [0, 0, 1, 1], [], []>} : vector<2x64xf32>, vector<64x128xf32>, vector<2x128xf32> -> vector<2x128xf32>
    %277 = vector.broadcast %33 : vector<1x128xf32> to vector<2x128xf32>
    %278 = arith.addf %276, %277 : vector<2x128xf32>
    %279 = arith.negf %278 : vector<2x128xf32>
    %280 = math.exp %279 : vector<2x128xf32>
    %cst_55 = arith.constant 1.000000e+00 : f32
    %281 = vector.broadcast %cst_55 : f32 to vector<2x128xf32>
    %282 = arith.addf %281, %280 : vector<2x128xf32>
    %283 = arith.divf %281, %282 : vector<2x128xf32>
    %284 = math.tanh %278 : vector<2x128xf32>
    %285 = vector.extract_strided_slice %283 {offsets = [0, 0], sizes = [2, 32], strides = [1, 1]} : vector<2x128xf32> to vector<2x32xf32>
    %286 = vector.extract_strided_slice %283 {offsets = [0, 32], sizes = [2, 32], strides = [1, 1]} : vector<2x128xf32> to vector<2x32xf32>
    %287 = vector.extract_strided_slice %284 {offsets = [0, 64], sizes = [2, 32], strides = [1, 1]} : vector<2x128xf32> to vector<2x32xf32>
    %288 = vector.extract_strided_slice %283 {offsets = [0, 96], sizes = [2, 32], strides = [1, 1]} : vector<2x128xf32> to vector<2x32xf32>
    %289 = arith.mulf %286, %254 : vector<2x32xf32>
    %290 = arith.mulf %285, %287 : vector<2x32xf32>
    %291 = arith.addf %289, %290 : vector<2x32xf32>
    %292 = math.tanh %291 : vector<2x32xf32>
    %293 = arith.mulf %288, %292 : vector<2x32xf32>
    %294 = vector.extract_strided_slice %30 {offsets = [14, 0], sizes = [2, 128], strides = [1, 1]} : vector<16x128xf32> to vector<2x128xf32>
    %cst_56 = arith.constant dense<0.000000e+00> : vector<2x128xf32>
    %295 = tpu.matmul %274, %31, %cst_56 {dimension_numbers = #tpu.dot_dimension_numbers<[1], [0], [0], [1], [0, 0, 1, 1], [], []>} : vector<2x32xf32>, vector<32x128xf32>, vector<2x128xf32> -> vector<2x128xf32>
    %296 = arith.addf %294, %295 : vector<2x128xf32>
    %297 = arith.negf %296 : vector<2x128xf32>
    %298 = math.exp %297 : vector<2x128xf32>
    %cst_57 = arith.constant 1.000000e+00 : f32
    %299 = vector.broadcast %cst_57 : f32 to vector<2x128xf32>
    %300 = arith.addf %299, %298 : vector<2x128xf32>
    %301 = arith.divf %299, %300 : vector<2x128xf32>
    %302 = math.tanh %296 : vector<2x128xf32>
    %303 = vector.extract_strided_slice %301 {offsets = [0, 0], sizes = [2, 32], strides = [1, 1]} : vector<2x128xf32> to vector<2x32xf32>
    %304 = vector.extract_strided_slice %301 {offsets = [0, 32], sizes = [2, 32], strides = [1, 1]} : vector<2x128xf32> to vector<2x32xf32>
    %305 = vector.extract_strided_slice %302 {offsets = [0, 64], sizes = [2, 32], strides = [1, 1]} : vector<2x128xf32> to vector<2x32xf32>
    %306 = vector.extract_strided_slice %301 {offsets = [0, 96], sizes = [2, 32], strides = [1, 1]} : vector<2x128xf32> to vector<2x32xf32>
    %307 = arith.mulf %304, %272 : vector<2x32xf32>
    %308 = arith.mulf %303, %305 : vector<2x32xf32>
    %309 = arith.addf %307, %308 : vector<2x32xf32>
    %310 = math.tanh %309 : vector<2x32xf32>
    %311 = arith.mulf %306, %310 : vector<2x32xf32>
    %312 = tpu.concatenate %311, %293 in 1 : vector<2x32xf32>, vector<2x32xf32> -> vector<2x64xf32>
    %cst_58 = arith.constant dense<0.000000e+00> : vector<2x128xf32>
    %313 = tpu.matmul %312, %32, %cst_58 {dimension_numbers = #tpu.dot_dimension_numbers<[1], [0], [0], [1], [0, 0, 1, 1], [], []>} : vector<2x64xf32>, vector<64x128xf32>, vector<2x128xf32> -> vector<2x128xf32>
    %314 = vector.broadcast %33 : vector<1x128xf32> to vector<2x128xf32>
    %315 = arith.addf %313, %314 : vector<2x128xf32>
    %316 = arith.negf %315 : vector<2x128xf32>
    %317 = math.exp %316 : vector<2x128xf32>
    %cst_59 = arith.constant 1.000000e+00 : f32
    %318 = vector.broadcast %cst_59 : f32 to vector<2x128xf32>
    %319 = arith.addf %318, %317 : vector<2x128xf32>
    %320 = arith.divf %318, %319 : vector<2x128xf32>
    %321 = math.tanh %315 : vector<2x128xf32>
    %322 = vector.extract_strided_slice %320 {offsets = [0, 0], sizes = [2, 32], strides = [1, 1]} : vector<2x128xf32> to vector<2x32xf32>
    %323 = vector.extract_strided_slice %320 {offsets = [0, 32], sizes = [2, 32], strides = [1, 1]} : vector<2x128xf32> to vector<2x32xf32>
    %324 = vector.extract_strided_slice %321 {offsets = [0, 64], sizes = [2, 32], strides = [1, 1]} : vector<2x128xf32> to vector<2x32xf32>
    %325 = vector.extract_strided_slice %320 {offsets = [0, 96], sizes = [2, 32], strides = [1, 1]} : vector<2x128xf32> to vector<2x32xf32>
    %326 = arith.mulf %323, %291 : vector<2x32xf32>
    %327 = arith.mulf %322, %324 : vector<2x32xf32>
    %328 = arith.addf %326, %327 : vector<2x32xf32>
    %329 = math.tanh %328 : vector<2x32xf32>
    %330 = arith.mulf %325, %329 : vector<2x32xf32>
    %c0_60 = arith.constant 0 : index
    %c0_61 = arith.constant 0 : index
    %331 = vector.load %arg12[%c0_60, %c0_61] : memref<32x1xf32, #tpu.memory_space<vmem>>, vector<32x1xf32>
    %cst_62 = arith.constant dense<0.000000e+00> : vector<2x1xf32>
    %332 = tpu.matmul %330, %331, %cst_62 {dimension_numbers = #tpu.dot_dimension_numbers<[1], [0], [0], [1], [0, 0, 1, 1], [], []>} : vector<2x32xf32>, vector<32x1xf32>, vector<2x1xf32> -> vector<2x1xf32>
    %c0_63 = arith.constant 0 : index
    %c0_64 = arith.constant 0 : index
    %333 = vector.load %arg13[%c0_63, %c0_64] : memref<1x1xf32, #tpu.memory_space<vmem>>, vector<1x1xf32>
    %334 = vector.broadcast %333 : vector<1x1xf32> to vector<2x1xf32>
    %335 = arith.addf %332, %334 : vector<2x1xf32>
    %c0_65 = arith.constant 0 : index
    %c0_66 = arith.constant 0 : index
    %336 = vector.load %arg14[%c0_65, %c0_66] : memref<2x1xf32, #tpu.memory_space<vmem>>, vector<2x1xf32>
    tpu.vector_store %arg14[%c0_65, %c0_66], %335 {strides = array<i32>} : memref<2x1xf32, #tpu.memory_space<vmem>>, vector<2x1xf32>,
    %c0_67 = arith.constant 0 : index
    %c0_68 = arith.constant 0 : index
    %c0_69 = arith.constant 0 : index
    %337 = vector.load %arg15[%c0_67, %c0_68, %c0_69] : memref<2x2x32xf32, #tpu.memory_space<vmem>>, vector<1x2x32xf32>
    %338 = vector.shape_cast %337 : vector<1x2x32xf32> to vector<2x32xf32>
    %339 = vector.shape_cast %311 : vector<2x32xf32> to vector<1x2x32xf32>
    tpu.vector_store %arg15[%c0_67, %c0_68, %c0_69], %339 {strides = array<i32>} : memref<2x2x32xf32, #tpu.memory_space<vmem>>, vector<1x2x32xf32>,
    %c1 = arith.constant 1 : index
    %c0_70 = arith.constant 0 : index
    %c0_71 = arith.constant 0 : index
    %340 = vector.load %arg15[%c1, %c0_70, %c0_71] : memref<2x2x32xf32, #tpu.memory_space<vmem>>, vector<1x2x32xf32>
    %341 = vector.shape_cast %340 : vector<1x2x32xf32> to vector<2x32xf32>
    %342 = vector.shape_cast %330 : vector<2x32xf32> to vector<1x2x32xf32>
    tpu.vector_store %arg15[%c1, %c0_70, %c0_71], %342 {strides = array<i32>} : memref<2x2x32xf32, #tpu.memory_space<vmem>>, vector<1x2x32xf32>,
    %c0_72 = arith.constant 0 : index
    %c0_73 = arith.constant 0 : index
    %c0_74 = arith.constant 0 : index
    %343 = vector.load %arg16[%c0_72, %c0_73, %c0_74] : memref<2x2x32xf32, #tpu.memory_space<vmem>>, vector<1x2x32xf32>
    %344 = vector.shape_cast %343 : vector<1x2x32xf32> to vector<2x32xf32>
    %345 = vector.shape_cast %309 : vector<2x32xf32> to vector<1x2x32xf32>
    tpu.vector_store %arg16[%c0_72, %c0_73, %c0_74], %345 {strides = array<i32>} : memref<2x2x32xf32, #tpu.memory_space<vmem>>, vector<1x2x32xf32>,
    %c1_75 = arith.constant 1 : index
    %c0_76 = arith.constant 0 : index
    %c0_77 = arith.constant 0 : index
    %346 = vector.load %arg16[%c1_75, %c0_76, %c0_77] : memref<2x2x32xf32, #tpu.memory_space<vmem>>, vector<1x2x32xf32>
    %347 = vector.shape_cast %346 : vector<1x2x32xf32> to vector<2x32xf32>
    %348 = vector.shape_cast %328 : vector<2x32xf32> to vector<1x2x32xf32>
    tpu.vector_store %arg16[%c1_75, %c0_76, %c0_77], %348 {strides = array<i32>} : memref<2x2x32xf32, #tpu.memory_space<vmem>>, vector<1x2x32xf32>,
    return
  }
}

</mosaic_0001>

<llo_original>
// kernel: tpu_custom_call.1
$region0: #{tpu_custom_call.1}
  #allocation0 [shape = 'u32[]', space=smem, size = 0x4, offset = 0x4, fixed_abs, tag = 'smem constant byte address 0x4 - core index']
  #allocation1 [shape = 'u32[144,128]{1,0:T(1,128)}', space=vmem, size = 0x12000, scoped, tag = 'internal scratch']
  #allocation2 [shape = 'f32[1,1]{1,0:T(1,128)S(1)}', space=vmem, size = 0x200, scoped, tag = 'scoped memory for tpu_custom_call.1']
  %s0 = inlined_call_operand.hbm [shape: f32[16,768], index: 0, kind: input, shape index: {}]
  %s1 = inlined_call_operand.hbm [shape: f32[768,768], index: 1, kind: input, shape index: {}]
  %s2 = inlined_call_operand.hbm [shape: f32[1,768], index: 2, kind: input, shape index: {}]
  %s3 = inlined_call_operand.vmem [shape: f32[768,32], index: 3, kind: input, shape index: {}]
  %s4 = inlined_call_operand.hbm [shape: f32[1,32], index: 4, kind: input, shape index: {}]
  %s5 = inlined_call_operand.vmem [shape: f32[16,1], index: 5, kind: input, shape index: {}]
  %s6 = inlined_call_operand.vmem [shape: f32[16,1], index: 6, kind: input, shape index: {}]
  %s7 = inlined_call_operand.hbm [shape: f32[32,128], index: 7, kind: input, shape index: {}]
  %s8 = inlined_call_operand.hbm [shape: f32[32,128], index: 8, kind: input, shape index: {}]
  %s9 = inlined_call_operand.hbm [shape: f32[1,128], index: 9, kind: input, shape index: {}]
  %s10 = inlined_call_operand.hbm [shape: f32[64,128], index: 10, kind: input, shape index: {}]
  %s11 = inlined_call_operand.hbm [shape: f32[1,128], index: 11, kind: input, shape index: {}]
  %s12 = inlined_call_operand.vmem [shape: f32[32,1], index: 12, kind: input, shape index: {}]
  %s13 = inlined_call_operand.<no memory space> [shape: f32[1,1], index: 13, kind: input, shape index: {}]
  %s14 = inlined_call_operand.vmem [shape: f32[2,1], index: 14, kind: output, shape index: {0}]
  %s15 = inlined_call_operand.hbm [shape: f32[2,2,32], index: 15, kind: output, shape index: {1}]
  %s16 = inlined_call_operand.hbm [shape: f32[2,2,32], index: 16, kind: output, shape index: {2}]
  %17 = xla_tuple %s14, %s15, %s16
  %s18 = sld [smem:[#allocation0]]
  $region118: #{tpu_custom_call.1} parent=0
    _
  %s20 = ssub.s32 1, %s18
  %s21 = scalar_select 0, %s20, %s18
  %v22 = vstv %s13
  %23 = vst [vmem:[#allocation2] sm:$0x1] %v22
  $region1: #{tpu_custom_call.1} parent=0
    #allocation3 [shape = 'u8[49152]{0}', space=vmem, size = 0xc000, scoped, tag = 'input window, operand 0, single buffered']
    #allocation4 [shape = 's32[1]{0}', space=sflag, size = 0x4, scoped, tag = 'scoped memory for tpu_custom_call.1']
    #allocation5 [shape = 's32[1]{0}', space=sflag, size = 0x4, scoped, tag = 'scoped memory for tpu_custom_call.1']
    #allocation6 [shape = 'u8[2359296]{0}', space=vmem, size = 0x240000, scoped, tag = 'input window, operand 1, single buffered']
    #allocation7 [shape = 's32[1]{0}', space=sflag, size = 0x4, scoped, tag = 'scoped memory for tpu_custom_call.1']
    #allocation8 [shape = 'u8[3072]{0}', space=vmem, size = 0xc00, scoped, tag = 'input window, operand 2, single buffered']
    #allocation9 [shape = 'u8[512]{0}', space=vmem, size = 0x400, scoped, tag = 'input window, operand 4, single buffered']
    #allocation10 [shape = 's32[1]{0}', space=sflag, size = 0x4, scoped, tag = 'scoped memory for tpu_custom_call.1']
    #allocation11 [shape = 'u8[16384]{0}', space=vmem, size = 0x4000, scoped, tag = 'input window, operand 7, single buffered']
    #allocation12 [shape = 'u8[16384]{0}', space=vmem, size = 0x4000, scoped, tag = 'input window, operand 8, single buffered']
    #allocation13 [shape = 's32[1]{0}', space=sflag, size = 0x4, scoped, tag = 'scoped memory for tpu_custom_call.1']
    #allocation14 [shape = 'u8[512]{0}', space=vmem, size = 0x400, scoped, tag = 'input window, operand 9, single buffered']
    #allocation15 [shape = 'u8[32768]{0}', space=vmem, size = 0x8000, scoped, tag = 'input window, operand 10, single buffered']
    #allocation16 [shape = 's32[1]{0}', space=sflag, size = 0x4, scoped, tag = 'scoped memory for tpu_custom_call.1']
    #allocation17 [shape = 'u8[512]{0}', space=vmem, size = 0x400, scoped, tag = 'input window, operand 11, single buffered']
    #allocation18 [shape = 'u8[2048]{0}', space=vmem, size = 0x800, scoped, tag = 'output window, operand 1, single buffered']
    #allocation19 [shape = 'u8[2048]{0}', space=vmem, size = 0x800, scoped, tag = 'output window, operand 2, single buffered']
    #allocation20 [shape = 's32[1]{0}', space=sflag, size = 0x4, scoped, tag = 'scoped memory for tpu_custom_call.1']
    %24 = vsyncpa [#allocation4], 0
    %25 = vsyncpa [#allocation7], 0
    %26 = vsyncpa [#allocation10], 0
    %27 = vsyncpa [#allocation13], 0
    %28 = vsyncpa [#allocation16], 0
    %29 = vsyncpa [#allocation5], 0
    %30 = vsyncpa [#allocation20], 0
    // Predicated region
    $region2: #{tpu_custom_call.1} parent=1 // pred_check
      _
    $region3: #{tpu_custom_call.1} parent=1 // pred_check_branch
      %32 = sbr.rel (0) target = $region5
    $region4: #{tpu_custom_call.1} parent=1 // pred_region
      %s34 = ssub.s32 1536, 1536
      %35 = vsyncadd [#allocation4], %s34
      %s36 = sshll.u32 [#allocation3], 4
      %s37 = int_to_ptr.vmem [resolvable:$true] %s36
      %42 = dma.hbm_to_vmem [thread:$0]  %s0, 1536, %s37, [#allocation4], 768, 768, 48
    $region5: #{tpu_custom_call.1} parent=1 // pred_fallthru
      _
    // Predicated region
    $region6: #{tpu_custom_call.1} parent=1 // pred_check
      _
    $region7: #{tpu_custom_call.1} parent=1 // pred_check_branch
      %44 = sbr.rel (0) target = $region9
    $region8: #{tpu_custom_call.1} parent=1 // pred_region
      %s46 = ssub.s32 73728, 73728
      %47 = vsyncadd [#allocation7], %s46
      %s48 = sshll.u32 [#allocation6], 4
      %s49 = int_to_ptr.vmem [resolvable:$true] %s48
      %54 = dma.hbm_to_vmem [thread:$0]  %s1, 73728, %s49, [#allocation7], 768, 768, 48
    $region9: #{tpu_custom_call.1} parent=1 // pred_fallthru
      _
    // Predicated region
    $region10: #{tpu_custom_call.1} parent=1 // pred_check
      _
    $region11: #{tpu_custom_call.1} parent=1 // pred_check_branch
      %56 = sbr.rel (0) target = $region13
    $region12: #{tpu_custom_call.1} parent=1 // pred_region
      %s58 = ssub.s32 96, 96
      %59 = vsyncadd [#allocation7], %s58
      %s61 = sshll.u32 [#allocation8], 4
      %s62 = int_to_ptr.vmem [resolvable:$true] %s61
      %64 = dma.hbm_to_vmem [thread:$0]  %s2, 96, %s62, [#allocation7]
    $region13: #{tpu_custom_call.1} parent=1 // pred_fallthru
      _
    // Predicated region
    $region14: #{tpu_custom_call.1} parent=1 // pred_check
      _
    $region15: #{tpu_custom_call.1} parent=1 // pred_check_branch
      %66 = sbr.rel (0) target = $region17
    $region16: #{tpu_custom_call.1} parent=1 // pred_region
      _
    $region17: #{tpu_custom_call.1} parent=1 // pred_fallthru
      _
    // Predicated region
    $region18: #{tpu_custom_call.1} parent=1 // pred_check
      _
    $region19: #{tpu_custom_call.1} parent=1 // pred_check_branch
      %68 = sbr.rel (0) target = $region21
    $region20: #{tpu_custom_call.1} parent=1 // pred_region
      %s70 = ssub.s32 16, 16
      %71 = vsyncadd [#allocation10], %s70
      %s73 = sshll.u32 [#allocation9], 4
      %s74 = int_to_ptr.vmem [resolvable:$true] %s73
      %76 = dma.hbm_to_vmem [thread:$0]  %s4, 16, %s74, [#allocation10]
    $region21: #{tpu_custom_call.1} parent=1 // pred_fallthru
      _
    // Predicated region
    $region22: #{tpu_custom_call.1} parent=1 // pred_check
      _
    $region23: #{tpu_custom_call.1} parent=1 // pred_check_branch
      %78 = sbr.rel (0) target = $region25
    $region24: #{tpu_custom_call.1} parent=1 // pred_region
      _
    $region25: #{tpu_custom_call.1} parent=1 // pred_fallthru
      _
    // Predicated region
    $region26: #{tpu_custom_call.1} parent=1 // pred_check
      _
    $region27: #{tpu_custom_call.1} parent=1 // pred_check_branch
      %80 = sbr.rel (0) target = $region29
    $region28: #{tpu_custom_call.1} parent=1 // pred_region
      _
    $region29: #{tpu_custom_call.1} parent=1 // pred_fallthru
      _
    // Predicated region
    $region30: #{tpu_custom_call.1} parent=1 // pred_check
      _
    $region31: #{tpu_custom_call.1} parent=1 // pred_check_branch
      %82 = sbr.rel (0) target = $region33
    $region32: #{tpu_custom_call.1} parent=1 // pred_region
      %s84 = ssub.s32 512, 512
      %85 = vsyncadd [#allocation10], %s84
      %s86 = sshll.u32 [#allocation11], 4
      %s87 = int_to_ptr.vmem [resolvable:$true] %s86
      %92 = dma.hbm_to_vmem [thread:$0]  %s7, 512, %s87, [#allocation10], 128, 128, 8
    $region33: #{tpu_custom_call.1} parent=1 // pred_fallthru
      _
    // Predicated region
    $region34: #{tpu_custom_call.1} parent=1 // pred_check
      _
    $region35: #{tpu_custom_call.1} parent=1 // pred_check_branch
      %94 = sbr.rel (0) target = $region37
    $region36: #{tpu_custom_call.1} parent=1 // pred_region
      %s96 = ssub.s32 512, 512
      %97 = vsyncadd [#allocation13], %s96
      %s98 = sshll.u32 [#allocation12], 4
      %s99 = int_to_ptr.vmem [resolvable:$true] %s98
      %104 = dma.hbm_to_vmem [thread:$0]  %s8, 512, %s99, [#allocation13], 128, 128, 8
    $region37: #{tpu_custom_call.1} parent=1 // pred_fallthru
      _
    // Predicated region
    $region38: #{tpu_custom_call.1} parent=1 // pred_check
      _
    $region39: #{tpu_custom_call.1} parent=1 // pred_check_branch
      %106 = sbr.rel (0) target = $region41
    $region40: #{tpu_custom_call.1} parent=1 // pred_region
      %s108 = ssub.s32 16, 16
      %109 = vsyncadd [#allocation13], %s108
      %s111 = sshll.u32 [#allocation14], 4
      %s112 = int_to_ptr.vmem [resolvable:$true] %s111
      %114 = dma.hbm_to_vmem [thread:$0]  %s9, 16, %s112, [#allocation13]
    $region41: #{tpu_custom_call.1} parent=1 // pred_fallthru
      _
    // Predicated region
    $region42: #{tpu_custom_call.1} parent=1 // pred_check
      _
    $region43: #{tpu_custom_call.1} parent=1 // pred_check_branch
      %116 = sbr.rel (0) target = $region45
    $region44: #{tpu_custom_call.1} parent=1 // pred_region
      %s118 = ssub.s32 1024, 1024
      %119 = vsyncadd [#allocation16], %s118
      %s120 = sshll.u32 [#allocation15], 4
      %s121 = int_to_ptr.vmem [resolvable:$true] %s120
      %126 = dma.hbm_to_vmem [thread:$0]  %s10, 1024, %s121, [#allocation16], 128, 128, 8
    $region45: #{tpu_custom_call.1} parent=1 // pred_fallthru
      _
    // Predicated region
    $region46: #{tpu_custom_call.1} parent=1 // pred_check
      _
    $region47: #{tpu_custom_call.1} parent=1 // pred_check_branch
      %128 = sbr.rel (0) target = $region49
    $region48: #{tpu_custom_call.1} parent=1 // pred_region
      %s130 = ssub.s32 16, 16
      %131 = vsyncadd [#allocation16], %s130
      %s133 = sshll.u32 [#allocation17], 4
      %s134 = int_to_ptr.vmem [resolvable:$true] %s133
      %136 = dma.hbm_to_vmem [thread:$0]  %s11, 16, %s134, [#allocation16]
    $region49: #{tpu_custom_call.1} parent=1 // pred_fallthru
      _
    // Predicated region
    $region50: #{tpu_custom_call.1} parent=1 // pred_check
      _
    $region51: #{tpu_custom_call.1} parent=1 // pred_check_branch
      %138 = sbr.rel (0) target = $region53
    $region52: #{tpu_custom_call.1} parent=1 // pred_region
      _
    $region53: #{tpu_custom_call.1} parent=1 // pred_fallthru
      _
    // Predicated region
    $region54: #{tpu_custom_call.1} parent=1 // pred_check
      _
    $region55: #{tpu_custom_call.1} parent=1 // pred_check_branch
      %140 = sbr.rel (0) target = $region57
    $region56: #{tpu_custom_call.1} parent=1 // pred_region
      _
    $region57: #{tpu_custom_call.1} parent=1 // pred_fallthru
      _
    // Predicated region
    $region58: #{tpu_custom_call.1} parent=1 // pred_check
      _
    $region59: #{tpu_custom_call.1} parent=1 // pred_check_branch
      %142 = sbr.rel (0) target = $region61
    $region60: #{tpu_custom_call.1} parent=1 // pred_region
      %143 = dma.done [#allocation4], 1536
    $region61: #{tpu_custom_call.1} parent=1 // pred_fallthru
      _
    // Predicated region
    $region62: #{tpu_custom_call.1} parent=1 // pred_check
      _
    $region63: #{tpu_custom_call.1} parent=1 // pred_check_branch
      %145 = sbr.rel (0) target = $region65
    $region64: #{tpu_custom_call.1} parent=1 // pred_region
      %146 = dma.done [#allocation7], 73728
    $region65: #{tpu_custom_call.1} parent=1 // pred_fallthru
      _
    // Predicated region
    $region66: #{tpu_custom_call.1} parent=1 // pred_check
      _
    $region67: #{tpu_custom_call.1} parent=1 // pred_check_branch
      %148 = sbr.rel (0) target = $region69
    $region68: #{tpu_custom_call.1} parent=1 // pred_region
      %149 = dma.done [#allocation7], 96
    $region69: #{tpu_custom_call.1} parent=1 // pred_fallthru
      _
    // Predicated region
    $region70: #{tpu_custom_call.1} parent=1 // pred_check
      _
    $region71: #{tpu_custom_call.1} parent=1 // pred_check_branch
      %151 = sbr.rel (0) target = $region73
    $region72: #{tpu_custom_call.1} parent=1 // pred_region
      %152 = dma.done [#allocation10], 16
    $region73: #{tpu_custom_call.1} parent=1 // pred_fallthru
      _
    // Predicated region
    $region74: #{tpu_custom_call.1} parent=1 // pred_check
      _
    $region75: #{tpu_custom_call.1} parent=1 // pred_check_branch
      %154 = sbr.rel (0) target = $region77
    $region76: #{tpu_custom_call.1} parent=1 // pred_region
      %155 = dma.done [#allocation10], 512
    $region77: #{tpu_custom_call.1} parent=1 // pred_fallthru
      _
    // Predicated region
    $region78: #{tpu_custom_call.1} parent=1 // pred_check
      _
    $region79: #{tpu_custom_call.1} parent=1 // pred_check_branch
      %157 = sbr.rel (0) target = $region81
    $region80: #{tpu_custom_call.1} parent=1 // pred_region
      %158 = dma.done [#allocation13], 512
    $region81: #{tpu_custom_call.1} parent=1 // pred_fallthru
      _
    // Predicated region
    $region82: #{tpu_custom_call.1} parent=1 // pred_check
      _
    $region83: #{tpu_custom_call.1} parent=1 // pred_check_branch
      %160 = sbr.rel (0) target = $region85
    $region84: #{tpu_custom_call.1} parent=1 // pred_region
      %161 = dma.done [#allocation13], 16
    $region85: #{tpu_custom_call.1} parent=1 // pred_fallthru
      _
    // Predicated region
    $region86: #{tpu_custom_call.1} parent=1 // pred_check
      _
    $region87: #{tpu_custom_call.1} parent=1 // pred_check_branch
      %163 = sbr.rel (0) target = $region89
    $region88: #{tpu_custom_call.1} parent=1 // pred_region
      %164 = dma.done [#allocation16], 1024
    $region89: #{tpu_custom_call.1} parent=1 // pred_fallthru
      _
    // Predicated region
    $region90: #{tpu_custom_call.1} parent=1 // pred_check
      _
    $region91: #{tpu_custom_call.1} parent=1 // pred_check_branch
      %166 = sbr.rel (0) target = $region93
    $region92: #{tpu_custom_call.1} parent=1 // pred_region
      %167 = dma.done [#allocation16], 16
    $region93: #{tpu_custom_call.1} parent=1 // pred_fallthru
      _
    %v168 = vld [vmem:[#allocation3] sm:$0xff]
    %v169 = vld [vmem:[#allocation3 + $0x8] sm:$0xff]
    %v170 = vld [vmem:[#allocation3 + $0x10] sm:$0xff]
    %v171 = vld [vmem:[#allocation3 + $0x18] sm:$0xff]
    %v172 = vld [vmem:[#allocation3 + $0x20] sm:$0xff]
    %v173 = vld [vmem:[#allocation3 + $0x28] sm:$0xff]
    %v174 = vld [vmem:[#allocation3 + $0x30] sm:$0xff]
    %v175 = vld [vmem:[#allocation3 + $0x38] sm:$0xff]
    %v176 = vld [vmem:[#allocation3 + $0x40] sm:$0xff]
    %v177 = vld [vmem:[#allocation3 + $0x48] sm:$0xff]
    %v178 = vld [vmem:[#allocation3 + $0x50] sm:$0xff]
    %v179 = vld [vmem:[#allocation3 + $0x58] sm:$0xff]
    %v180 = vld [vmem:[#allocation6] sm:$0xff]
    %v181 = vld [vmem:[#allocation6 + $0x8] sm:$0xff]
    %v182 = vld [vmem:[#allocation6 + $0x10] sm:$0xff]
    %v183 = vld [vmem:[#allocation6 + $0x18] sm:$0xff]
    %v184 = vld [vmem:[#allocation6 + $0x20] sm:$0xff]
    %v185 = vld [vmem:[#allocation6 + $0x28] sm:$0xff]
    %v186 = vld [vmem:[#allocation6 + $0x30] sm:$0xff]
    %v187 = vld [vmem:[#allocation6 + $0x38] sm:$0xff]
    %v188 = vld [vmem:[#allocation6 + $0x40] sm:$0xff]
    %v189 = vld [vmem:[#allocation6 + $0x48] sm:$0xff]
    %v190 = vld [vmem:[#allocation6 + $0x50] sm:$0xff]
    %v191 = vld [vmem:[#allocation6 + $0x58] sm:$0xff]
    %v192 = vld [vmem:[#allocation6 + $0x60] sm:$0xff]
    %v193 = vld [vmem:[#allocation6 + $0x68] sm:$0xff]
    %v194 = vld [vmem:[#allocation6 + $0x70] sm:$0xff]
    %v195 = vld [vmem:[#allocation6 + $0x78] sm:$0xff]
    %v196 = vld [vmem:[#allocation6 + $0x80] sm:$0xff]
    %v197 = vld [vmem:[#allocation6 + $0x88] sm:$0xff]
    %v198 = vld [vmem:[#allocation6 + $0x90] sm:$0xff]
    %v199 = vld [vmem:[#allocation6 + $0x98] sm:$0xff]
    %v200 = vld [vmem:[#allocation6 + $0xa0] sm:$0xff]
    %v201 = vld [vmem:[#allocation6 + $0xa8] sm:$0xff]
    %v202 = vld [vmem:[#allocation6 + $0xb0] sm:$0xff]
    %v203 = vld [vmem:[#allocation6 + $0xb8] sm:$0xff]
    %v204 = vld [vmem:[#allocation6 + $0xc0] sm:$0xff]
    %v205 = vld [vmem:[#allocation6 + $0xc8] sm:$0xff]
    %v206 = vld [vmem:[#allocation6 + $0xd0] sm:$0xff]
    %v207 = vld [vmem:[#allocation6 + $0xd8] sm:$0xff]
    %v208 = vld [vmem:[#allocation6 + $0xe0] sm:$0xff]
    %v209 = vld [vmem:[#allocation6 + $0xe8] sm:$0xff]
    %v210 = vld [vmem:[#allocation6 + $0xf0] sm:$0xff]
    %v211 = vld [vmem:[#allocation6 + $0xf8] sm:$0xff]
    %v212 = vld [vmem:[#allocation6 + $0x100] sm:$0xff]
    %v213 = vld [vmem:[#allocation6 + $0x108] sm:$0xff]
    %v214 = vld [vmem:[#allocation6 + $0x110] sm:$0xff]
    %v215 = vld [vmem:[#allocation6 + $0x118] sm:$0xff]
    %v216 = vld [vmem:[#allocation6 + $0x120] sm:$0xff]
    %v217 = vld [vmem:[#allocation6 + $0x128] sm:$0xff]
    %v218 = vld [vmem:[#allocation6 + $0x130] sm:$0xff]
    %v219 = vld [vmem:[#allocation6 + $0x138] sm:$0xff]
    %v220 = vld [vmem:[#allocation6 + $0x140] sm:$0xff]
    %v221 = vld [vmem:[#allocation6 + $0x148] sm:$0xff]
    %v222 = vld [vmem:[#allocation6 + $0x150] sm:$0xff]
    %v223 = vld [vmem:[#allocation6 + $0x158] sm:$0xff]
    %v224 = vld [vmem:[#allocation6 + $0x160] sm:$0xff]
    %v225 = vld [vmem:[#allocation6 + $0x168] sm:$0xff]
    %v226 = vld [vmem:[#allocation6 + $0x170] sm:$0xff]
    %v227 = vld [vmem:[#allocation6 + $0x178] sm:$0xff]
    %v228 = vld [vmem:[#allocation6 + $0x180] sm:$0xff]
    %v229 = vld [vmem:[#allocation6 + $0x188] sm:$0xff]
    %v230 = vld [vmem:[#allocation6 + $0x190] sm:$0xff]
    %v231 = vld [vmem:[#allocation6 + $0x198] sm:$0xff]
    %v232 = vld [vmem:[#allocation6 + $0x1a0] sm:$0xff]
    %v233 = vld [vmem:[#allocation6 + $0x1a8] sm:$0xff]
    %v234 = vld [vmem:[#allocation6 + $0x1b0] sm:$0xff]
    %v235 = vld [vmem:[#allocation6 + $0x1b8] sm:$0xff]
    %v236 = vld [vmem:[#allocation6 + $0x1c0] sm:$0xff]
    %v237 = vld [vmem:[#allocation6 + $0x1c8] sm:$0xff]
    %v238 = vld [vmem:[#allocation6 + $0x1d0] sm:$0xff]
    %v239 = vld [vmem:[#allocation6 + $0x1d8] sm:$0xff]
    %v240 = vld [vmem:[#allocation6 + $0x1e0] sm:$0xff]
    %v241 = vld [vmem:[#allocation6 + $0x1e8] sm:$0xff]
    %v242 = vld [vmem:[#allocation6 + $0x1f0] sm:$0xff]
    %v243 = vld [vmem:[#allocation6 + $0x1f8] sm:$0xff]
    %v244 = vld [vmem:[#allocation6 + $0x200] sm:$0xff]
    %v245 = vld [vmem:[#allocation6 + $0x208] sm:$0xff]
    %v246 = vld [vmem:[#allocation6 + $0x210] sm:$0xff]
    %v247 = vld [vmem:[#allocation6 + $0x218] sm:$0xff]
    %v248 = vld [vmem:[#allocation6 + $0x220] sm:$0xff]
    %v249 = vld [vmem:[#allocation6 + $0x228] sm:$0xff]
    %v250 = vld [vmem:[#allocation6 + $0x230] sm:$0xff]
    %v251 = vld [vmem:[#allocation6 + $0x238] sm:$0xff]
    %v252 = vld [vmem:[#allocation6 + $0x240] sm:$0xff]
    %v253 = vld [vmem:[#allocation6 + $0x248] sm:$0xff]
    %v254 = vld [vmem:[#allocation6 + $0x250] sm:$0xff]
    %v255 = vld [vmem:[#allocation6 + $0x258] sm:$0xff]
    %v256 = vld [vmem:[#allocation6 + $0x260] sm:$0xff]
    %v257 = vld [vmem:[#allocation6 + $0x268] sm:$0xff]
    %v258 = vld [vmem:[#allocation6 + $0x270] sm:$0xff]
    %v259 = vld [vmem:[#allocation6 + $0x278] sm:$0xff]
    %v260 = vld [vmem:[#allocation6 + $0x280] sm:$0xff]
    %v261 = vld [vmem:[#allocation6 + $0x288] sm:$0xff]
    %v262 = vld [vmem:[#allocation6 + $0x290] sm:$0xff]
    %v263 = vld [vmem:[#allocation6 + $0x298] sm:$0xff]
    %v264 = vld [vmem:[#allocation6 + $0x2a0] sm:$0xff]
    %v265 = vld [vmem:[#allocation6 + $0x2a8] sm:$0xff]
    %v266 = vld [vmem:[#allocation6 + $0x2b0] sm:$0xff]
    %v267 = vld [vmem:[#allocation6 + $0x2b8] sm:$0xff]
    %v268 = vld [vmem:[#allocation6 + $0x2c0] sm:$0xff]
    %v269 = vld [vmem:[#allocation6 + $0x2c8] sm:$0xff]
    %v270 = vld [vmem:[#allocation6 + $0x2d0] sm:$0xff]
    %v271 = vld [vmem:[#allocation6 + $0x2d8] sm:$0xff]
    %v272 = vld [vmem:[#allocation6 + $0x2e0] sm:$0xff]
    %v273 = vld [vmem:[#allocation6 + $0x2e8] sm:$0xff]
    %v274 = vld [vmem:[#allocation6 + $0x2f0] sm:$0xff]
    %v275 = vld [vmem:[#allocation6 + $0x2f8] sm:$0xff]
    %v276 = vld [vmem:[#allocation6 + $0x300] sm:$0xff]
    %v277 = vld [vmem:[#allocation6 + $0x308] sm:$0xff]
    %v278 = vld [vmem:[#allocation6 + $0x310] sm:$0xff]
    %v279 = vld [vmem:[#allocation6 + $0x318] sm:$0xff]
    %v280 = vld [vmem:[#allocation6 + $0x320] sm:$0xff]
    %v281 = vld [vmem:[#allocation6 + $0x328] sm:$0xff]
    %v282 = vld [vmem:[#allocation6 + $0x330] sm:$0xff]
    %v283 = vld [vmem:[#allocation6 + $0x338] sm:$0xff]
    %v284 = vld [vmem:[#allocation6 + $0x340] sm:$0xff]
    %v285 = vld [vmem:[#allocation6 + $0x348] sm:$0xff]
    %v286 = vld [vmem:[#allocation6 + $0x350] sm:$0xff]
    %v287 = vld [vmem:[#allocation6 + $0x358] sm:$0xff]
    %v288 = vld [vmem:[#allocation6 + $0x360] sm:$0xff]
    %v289 = vld [vmem:[#allocation6 + $0x368] sm:$0xff]
    %v290 = vld [vmem:[#allocation6 + $0x370] sm:$0xff]
    %v291 = vld [vmem:[#allocation6 + $0x378] sm:$0xff]
    %v292 = vld [vmem:[#allocation6 + $0x380] sm:$0xff]
    %v293 = vld [vmem:[#allocation6 + $0x388] sm:$0xff]
    %v294 = vld [vmem:[#allocation6 + $0x390] sm:$0xff]
    %v295 = vld [vmem:[#allocation6 + $0x398] sm:$0xff]
    %v296 = vld [vmem:[#allocation6 + $0x3a0] sm:$0xff]
    %v297 = vld [vmem:[#allocation6 + $0x3a8] sm:$0xff]
    %v298 = vld [vmem:[#allocation6 + $0x3b0] sm:$0xff]
    %v299 = vld [vmem:[#allocation6 + $0x3b8] sm:$0xff]
    %v300 = vld [vmem:[#allocation6 + $0x3c0] sm:$0xff]
    %v301 = vld [vmem:[#allocation6 + $0x3c8] sm:$0xff]
    %v302 = vld [vmem:[#allocation6 + $0x3d0] sm:$0xff]
    %v303 = vld [vmem:[#allocation6 + $0x3d8] sm:$0xff]
    %v304 = vld [vmem:[#allocation6 + $0x3e0] sm:$0xff]
    %v305 = vld [vmem:[#allocation6 + $0x3e8] sm:$0xff]
    %v306 = vld [vmem:[#allocation6 + $0x3f0] sm:$0xff]
    %v307 = vld [vmem:[#allocation6 + $0x3f8] sm:$0xff]
    %v308 = vld [vmem:[#allocation6 + $0x400] sm:$0xff]
    %v309 = vld [vmem:[#allocation6 + $0x408] sm:$0xff]
    %v310 = vld [vmem:[#allocation6 + $0x410] sm:$0xff]
    %v311 = vld [vmem:[#allocation6 + $0x418] sm:$0xff]
    %v312 = vld [vmem:[#allocation6 + $0x420] sm:$0xff]
    %v313 = vld [vmem:[#allocation6 + $0x428] sm:$0xff]
    %v314 = vld [vmem:[#allocation6 + $0x430] sm:$0xff]
    %v315 = vld [vmem:[#allocation6 + $0x438] sm:$0xff]
    %v316 = vld [vmem:[#allocation6 + $0x440] sm:$0xff]
    %v317 = vld [vmem:[#allocation6 + $0x448] sm:$0xff]
    %v318 = vld [vmem:[#allocation6 + $0x450] sm:$0xff]
    %v319 = vld [vmem:[#allocation6 + $0x458] sm:$0xff]
    %v320 = vld [vmem:[#allocation6 + $0x460] sm:$0xff]
    %v321 = vld [vmem:[#allocation6 + $0x468] sm:$0xff]
    %v322 = vld [vmem:[#allocation6 + $0x470] sm:$0xff]
    %v323 = vld [vmem:[#allocation6 + $0x478] sm:$0xff]
    %v324 = vld [vmem:[#allocation6 + $0x480] sm:$0xff]
    %v325 = vld [vmem:[#allocation6 + $0x488] sm:$0xff]
    %v326 = vld [vmem:[#allocation6 + $0x490] sm:$0xff]
    %v327 = vld [vmem:[#allocation6 + $0x498] sm:$0xff]
    %v328 = vld [vmem:[#allocation6 + $0x4a0] sm:$0xff]
    %v329 = vld [vmem:[#allocation6 + $0x4a8] sm:$0xff]
    %v330 = vld [vmem:[#allocation6 + $0x4b0] sm:$0xff]
    %v331 = vld [vmem:[#allocation6 + $0x4b8] sm:$0xff]
    %v332 = vld [vmem:[#allocation6 + $0x4c0] sm:$0xff]
    %v333 = vld [vmem:[#allocation6 + $0x4c8] sm:$0xff]
    %v334 = vld [vmem:[#allocation6 + $0x4d0] sm:$0xff]
    %v335 = vld [vmem:[#allocation6 + $0x4d8] sm:$0xff]
    %v336 = vld [vmem:[#allocation6 + $0x4e0] sm:$0xff]
    %v337 = vld [vmem:[#allocation6 + $0x4e8] sm:$0xff]
    %v338 = vld [vmem:[#allocation6 + $0x4f0] sm:$0xff]
    %v339 = vld [vmem:[#allocation6 + $0x4f8] sm:$0xff]
    %v340 = vld [vmem:[#allocation6 + $0x500] sm:$0xff]
    %v341 = vld [vmem:[#allocation6 + $0x508] sm:$0xff]
    %v342 = vld [vmem:[#allocation6 + $0x510] sm:$0xff]
    %v343 = vld [vmem:[#allocation6 + $0x518] sm:$0xff]
    %v344 = vld [vmem:[#allocation6 + $0x520] sm:$0xff]
    %v345 = vld [vmem:[#allocation6 + $0x528] sm:$0xff]
    %v346 = vld [vmem:[#allocation6 + $0x530] sm:$0xff]
    %v347 = vld [vmem:[#allocation6 + $0x538] sm:$0xff]
    %v348 = vld [vmem:[#allocation6 + $0x540] sm:$0xff]
    %v349 = vld [vmem:[#allocation6 + $0x548] sm:$0xff]
    %v350 = vld [vmem:[#allocation6 + $0x550] sm:$0xff]
    %v351 = vld [vmem:[#allocation6 + $0x558] sm:$0xff]
    %v352 = vld [vmem:[#allocation6 + $0x560] sm:$0xff]
    %v353 = vld [vmem:[#allocation6 + $0x568] sm:$0xff]
    %v354 = vld [vmem:[#allocation6 + $0x570] sm:$0xff]
    %v355 = vld [vmem:[#allocation6 + $0x578] sm:$0xff]
    %v356 = vld [vmem:[#allocation6 + $0x580] sm:$0xff]
    %v357 = vld [vmem:[#allocation6 + $0x588] sm:$0xff]
    %v358 = vld [vmem:[#allocation6 + $0x590] sm:$0xff]
    %v359 = vld [vmem:[#allocation6 + $0x598] sm:$0xff]
    %v360 = vld [vmem:[#allocation6 + $0x5a0] sm:$0xff]
    %v361 = vld [vmem:[#allocation6 + $0x5a8] sm:$0xff]
    %v362 = vld [vmem:[#allocation6 + $0x5b0] sm:$0xff]
    %v363 = vld [vmem:[#allocation6 + $0x5b8] sm:$0xff]
    %v364 = vld [vmem:[#allocation6 + $0x5c0] sm:$0xff]
    %v365 = vld [vmem:[#allocation6 + $0x5c8] sm:$0xff]
    %v366 = vld [vmem:[#allocation6 + $0x5d0] sm:$0xff]
    %v367 = vld [vmem:[#allocation6 + $0x5d8] sm:$0xff]
    %v368 = vld [vmem:[#allocation6 + $0x5e0] sm:$0xff]
    %v369 = vld [vmem:[#allocation6 + $0x5e8] sm:$0xff]
    %v370 = vld [vmem:[#allocation6 + $0x5f0] sm:$0xff]
    %v371 = vld [vmem:[#allocation6 + $0x5f8] sm:$0xff]
    %v372 = vld [vmem:[#allocation6 + $0x600] sm:$0xff]
    %v373 = vld [vmem:[#allocation6 + $0x608] sm:$0xff]
    %v374 = vld [vmem:[#allocation6 + $0x610] sm:$0xff]
    %v375 = vld [vmem:[#allocation6 + $0x618] sm:$0xff]
    %v376 = vld [vmem:[#allocation6 + $0x620] sm:$0xff]
    %v377 = vld [vmem:[#allocation6 + $0x628] sm:$0xff]
    %v378 = vld [vmem:[#allocation6 + $0x630] sm:$0xff]
    %v379 = vld [vmem:[#allocation6 + $0x638] sm:$0xff]
    %v380 = vld [vmem:[#allocation6 + $0x640] sm:$0xff]
    %v381 = vld [vmem:[#allocation6 + $0x648] sm:$0xff]
    %v382 = vld [vmem:[#allocation6 + $0x650] sm:$0xff]
    %v383 = vld [vmem:[#allocation6 + $0x658] sm:$0xff]
    %v384 = vld [vmem:[#allocation6 + $0x660] sm:$0xff]
    %v385 = vld [vmem:[#allocation6 + $0x668] sm:$0xff]
    %v386 = vld [vmem:[#allocation6 + $0x670] sm:$0xff]
    %v387 = vld [vmem:[#allocation6 + $0x678] sm:$0xff]
    %v388 = vld [vmem:[#allocation6 + $0x680] sm:$0xff]
    %v389 = vld [vmem:[#allocation6 + $0x688] sm:$0xff]
    %v390 = vld [vmem:[#allocation6 + $0x690] sm:$0xff]
    %v391 = vld [vmem:[#allocation6 + $0x698] sm:$0xff]
    %v392 = vld [vmem:[#allocation6 + $0x6a0] sm:$0xff]
    %v393 = vld [vmem:[#allocation6 + $0x6a8] sm:$0xff]
    %v394 = vld [vmem:[#allocation6 + $0x6b0] sm:$0xff]
    %v395 = vld [vmem:[#allocation6 + $0x6b8] sm:$0xff]
    %v396 = vld [vmem:[#allocation6 + $0x6c0] sm:$0xff]
    %v397 = vld [vmem:[#allocation6 + $0x6c8] sm:$0xff]
    %v398 = vld [vmem:[#allocation6 + $0x6d0] sm:$0xff]
    %v399 = vld [vmem:[#allocation6 + $0x6d8] sm:$0xff]
    %v400 = vld [vmem:[#allocation6 + $0x6e0] sm:$0xff]
    %v401 = vld [vmem:[#allocation6 + $0x6e8] sm:$0xff]
    %v402 = vld [vmem:[#allocation6 + $0x6f0] sm:$0xff]
    %v403 = vld [vmem:[#allocation6 + $0x6f8] sm:$0xff]
    %v404 = vld [vmem:[#allocation6 + $0x700] sm:$0xff]
    %v405 = vld [vmem:[#allocation6 + $0x708] sm:$0xff]
    %v406 = vld [vmem:[#allocation6 + $0x710] sm:$0xff]
    %v407 = vld [vmem:[#allocation6 + $0x718] sm:$0xff]
    %v408 = vld [vmem:[#allocation6 + $0x720] sm:$0xff]
    %v409 = vld [vmem:[#allocation6 + $0x728] sm:$0xff]
    %v410 = vld [vmem:[#allocation6 + $0x730] sm:$0xff]
    %v411 = vld [vmem:[#allocation6 + $0x738] sm:$0xff]
    %v412 = vld [vmem:[#allocation6 + $0x740] sm:$0xff]
    %v413 = vld [vmem:[#allocation6 + $0x748] sm:$0xff]
    %v414 = vld [vmem:[#allocation6 + $0x750] sm:$0xff]
    %v415 = vld [vmem:[#allocation6 + $0x758] sm:$0xff]
    %v416 = vld [vmem:[#allocation6 + $0x760] sm:$0xff]
    %v417 = vld [vmem:[#allocation6 + $0x768] sm:$0xff]
    %v418 = vld [vmem:[#allocation6 + $0x770] sm:$0xff]
    %v419 = vld [vmem:[#allocation6 + $0x778] sm:$0xff]
    %v420 = vld [vmem:[#allocation6 + $0x780] sm:$0xff]
    %v421 = vld [vmem:[#allocation6 + $0x788] sm:$0xff]
    %v422 = vld [vmem:[#allocation6 + $0x790] sm:$0xff]
    %v423 = vld [vmem:[#allocation6 + $0x798] sm:$0xff]
    %v424 = vld [vmem:[#allocation6 + $0x7a0] sm:$0xff]
    %v425 = vld [vmem:[#allocation6 + $0x7a8] sm:$0xff]
    %v426 = vld [vmem:[#allocation6 + $0x7b0] sm:$0xff]
    %v427 = vld [vmem:[#allocation6 + $0x7b8] sm:$0xff]
    %v428 = vld [vmem:[#allocation6 + $0x7c0] sm:$0xff]
    %v429 = vld [vmem:[#allocation6 + $0x7c8] sm:$0xff]
    %v430 = vld [vmem:[#allocation6 + $0x7d0] sm:$0xff]
    %v431 = vld [vmem:[#allocation6 + $0x7d8] sm:$0xff]
    %v432 = vld [vmem:[#allocation6 + $0x7e0] sm:$0xff]
    %v433 = vld [vmem:[#allocation6 + $0x7e8] sm:$0xff]
    %v434 = vld [vmem:[#allocation6 + $0x7f0] sm:$0xff]
    %v435 = vld [vmem:[#allocation6 + $0x7f8] sm:$0xff]
    %v436 = vld [vmem:[#allocation6 + $0x800] sm:$0xff]
    %v437 = vld [vmem:[#allocation6 + $0x808] sm:$0xff]
    %v438 = vld [vmem:[#allocation6 + $0x810] sm:$0xff]
    %v439 = vld [vmem:[#allocation6 + $0x818] sm:$0xff]
    %v440 = vld [vmem:[#allocation6 + $0x820] sm:$0xff]
    %v441 = vld [vmem:[#allocation6 + $0x828] sm:$0xff]
    %v442 = vld [vmem:[#allocation6 + $0x830] sm:$0xff]
    %v443 = vld [vmem:[#allocation6 + $0x838] sm:$0xff]
    %v444 = vld [vmem:[#allocation6 + $0x840] sm:$0xff]
    %v445 = vld [vmem:[#allocation6 + $0x848] sm:$0xff]
    %v446 = vld [vmem:[#allocation6 + $0x850] sm:$0xff]
    %v447 = vld [vmem:[#allocation6 + $0x858] sm:$0xff]
    %v448 = vld [vmem:[#allocation6 + $0x860] sm:$0xff]
    %v449 = vld [vmem:[#allocation6 + $0x868] sm:$0xff]
    %v450 = vld [vmem:[#allocation6 + $0x870] sm:$0xff]
    %v451 = vld [vmem:[#allocation6 + $0x878] sm:$0xff]
    %v452 = vld [vmem:[#allocation6 + $0x880] sm:$0xff]
    %v453 = vld [vmem:[#allocation6 + $0x888] sm:$0xff]
    %v454 = vld [vmem:[#allocation6 + $0x890] sm:$0xff]
    %v455 = vld [vmem:[#allocation6 + $0x898] sm:$0xff]
    %v456 = vld [vmem:[#allocation6 + $0x8a0] sm:$0xff]
    %v457 = vld [vmem:[#allocation6 + $0x8a8] sm:$0xff]
    %v458 = vld [vmem:[#allocation6 + $0x8b0] sm:$0xff]
    %v459 = vld [vmem:[#allocation6 + $0x8b8] sm:$0xff]
    %v460 = vld [vmem:[#allocation6 + $0x8c0] sm:$0xff]
    %v461 = vld [vmem:[#allocation6 + $0x8c8] sm:$0xff]
    %v462 = vld [vmem:[#allocation6 + $0x8d0] sm:$0xff]
    %v463 = vld [vmem:[#allocation6 + $0x8d8] sm:$0xff]
    %v464 = vld [vmem:[#allocation6 + $0x8e0] sm:$0xff]
    %v465 = vld [vmem:[#allocation6 + $0x8e8] sm:$0xff]
    %v466 = vld [vmem:[#allocation6 + $0x8f0] sm:$0xff]
    %v467 = vld [vmem:[#allocation6 + $0x8f8] sm:$0xff]
    %v468 = vld [vmem:[#allocation6 + $0x900] sm:$0xff]
    %v469 = vld [vmem:[#allocation6 + $0x908] sm:$0xff]
    %v470 = vld [vmem:[#allocation6 + $0x910] sm:$0xff]
    %v471 = vld [vmem:[#allocation6 + $0x918] sm:$0xff]
    %v472 = vld [vmem:[#allocation6 + $0x920] sm:$0xff]
    %v473 = vld [vmem:[#allocation6 + $0x928] sm:$0xff]
    %v474 = vld [vmem:[#allocation6 + $0x930] sm:$0xff]
    %v475 = vld [vmem:[#allocation6 + $0x938] sm:$0xff]
    %v476 = vld [vmem:[#allocation6 + $0x940] sm:$0xff]
    %v477 = vld [vmem:[#allocation6 + $0x948] sm:$0xff]
    %v478 = vld [vmem:[#allocation6 + $0x950] sm:$0xff]
    %v479 = vld [vmem:[#allocation6 + $0x958] sm:$0xff]
    %v480 = vld [vmem:[#allocation6 + $0x960] sm:$0xff]
    %v481 = vld [vmem:[#allocation6 + $0x968] sm:$0xff]
    %v482 = vld [vmem:[#allocation6 + $0x970] sm:$0xff]
    %v483 = vld [vmem:[#allocation6 + $0x978] sm:$0xff]
    %v484 = vld [vmem:[#allocation6 + $0x980] sm:$0xff]
    %v485 = vld [vmem:[#allocation6 + $0x988] sm:$0xff]
    %v486 = vld [vmem:[#allocation6 + $0x990] sm:$0xff]
    %v487 = vld [vmem:[#allocation6 + $0x998] sm:$0xff]
    %v488 = vld [vmem:[#allocation6 + $0x9a0] sm:$0xff]
    %v489 = vld [vmem:[#allocation6 + $0x9a8] sm:$0xff]
    %v490 = vld [vmem:[#allocation6 + $0x9b0] sm:$0xff]
    %v491 = vld [vmem:[#allocation6 + $0x9b8] sm:$0xff]
    %v492 = vld [vmem:[#allocation6 + $0x9c0] sm:$0xff]
    %v493 = vld [vmem:[#allocation6 + $0x9c8] sm:$0xff]
    %v494 = vld [vmem:[#allocation6 + $0x9d0] sm:$0xff]
    %v495 = vld [vmem:[#allocation6 + $0x9d8] sm:$0xff]
    %v496 = vld [vmem:[#allocation6 + $0x9e0] sm:$0xff]
    %v497 = vld [vmem:[#allocation6 + $0x9e8] sm:$0xff]
    %v498 = vld [vmem:[#allocation6 + $0x9f0] sm:$0xff]
    %v499 = vld [vmem:[#allocation6 + $0x9f8] sm:$0xff]
    %v500 = vld [vmem:[#allocation6 + $0xa00] sm:$0xff]
    %v501 = vld [vmem:[#allocation6 + $0xa08] sm:$0xff]
    %v502 = vld [vmem:[#allocation6 + $0xa10] sm:$0xff]
    %v503 = vld [vmem:[#allocation6 + $0xa18] sm:$0xff]
    %v504 = vld [vmem:[#allocation6 + $0xa20] sm:$0xff]
    %v505 = vld [vmem:[#allocation6 + $0xa28] sm:$0xff]
    %v506 = vld [vmem:[#allocation6 + $0xa30] sm:$0xff]
    %v507 = vld [vmem:[#allocation6 + $0xa38] sm:$0xff]
    %v508 = vld [vmem:[#allocation6 + $0xa40] sm:$0xff]
    %v509 = vld [vmem:[#allocation6 + $0xa48] sm:$0xff]
    %v510 = vld [vmem:[#allocation6 + $0xa50] sm:$0xff]
    %v511 = vld [vmem:[#allocation6 + $0xa58] sm:$0xff]
    %v512 = vld [vmem:[#allocation6 + $0xa60] sm:$0xff]
    %v513 = vld [vmem:[#allocation6 + $0xa68] sm:$0xff]
    %v514 = vld [vmem:[#allocation6 + $0xa70] sm:$0xff]
    %v515 = vld [vmem:[#allocation6 + $0xa78] sm:$0xff]
    %v516 = vld [vmem:[#allocation6 + $0xa80] sm:$0xff]
    %v517 = vld [vmem:[#allocation6 + $0xa88] sm:$0xff]
    %v518 = vld [vmem:[#allocation6 + $0xa90] sm:$0xff]
    %v519 = vld [vmem:[#allocation6 + $0xa98] sm:$0xff]
    %v520 = vld [vmem:[#allocation6 + $0xaa0] sm:$0xff]
    %v521 = vld [vmem:[#allocation6 + $0xaa8] sm:$0xff]
    %v522 = vld [vmem:[#allocation6 + $0xab0] sm:$0xff]
    %v523 = vld [vmem:[#allocation6 + $0xab8] sm:$0xff]
    %v524 = vld [vmem:[#allocation6 + $0xac0] sm:$0xff]
    %v525 = vld [vmem:[#allocation6 + $0xac8] sm:$0xff]
    %v526 = vld [vmem:[#allocation6 + $0xad0] sm:$0xff]
    %v527 = vld [vmem:[#allocation6 + $0xad8] sm:$0xff]
    %v528 = vld [vmem:[#allocation6 + $0xae0] sm:$0xff]
    %v529 = vld [vmem:[#allocation6 + $0xae8] sm:$0xff]
    %v530 = vld [vmem:[#allocation6 + $0xaf0] sm:$0xff]
    %v531 = vld [vmem:[#allocation6 + $0xaf8] sm:$0xff]
    %v532 = vld [vmem:[#allocation6 + $0xb00] sm:$0xff]
    %v533 = vld [vmem:[#allocation6 + $0xb08] sm:$0xff]
    %v534 = vld [vmem:[#allocation6 + $0xb10] sm:$0xff]
    %v535 = vld [vmem:[#allocation6 + $0xb18] sm:$0xff]
    %v536 = vld [vmem:[#allocation6 + $0xb20] sm:$0xff]
    %v537 = vld [vmem:[#allocation6 + $0xb28] sm:$0xff]
    %v538 = vld [vmem:[#allocation6 + $0xb30] sm:$0xff]
    %v539 = vld [vmem:[#allocation6 + $0xb38] sm:$0xff]
    %v540 = vld [vmem:[#allocation6 + $0xb40] sm:$0xff]
    %v541 = vld [vmem:[#allocation6 + $0xb48] sm:$0xff]
    %v542 = vld [vmem:[#allocation6 + $0xb50] sm:$0xff]
    %v543 = vld [vmem:[#allocation6 + $0xb58] sm:$0xff]
    %v544 = vld [vmem:[#allocation6 + $0xb60] sm:$0xff]
    %v545 = vld [vmem:[#allocation6 + $0xb68] sm:$0xff]
    %v546 = vld [vmem:[#allocation6 + $0xb70] sm:$0xff]
    %v547 = vld [vmem:[#allocation6 + $0xb78] sm:$0xff]
    %v548 = vld [vmem:[#allocation6 + $0xb80] sm:$0xff]
    %v549 = vld [vmem:[#allocation6 + $0xb88] sm:$0xff]
    %v550 = vld [vmem:[#allocation6 + $0xb90] sm:$0xff]
    %v551 = vld [vmem:[#allocation6 + $0xb98] sm:$0xff]
    %v552 = vld [vmem:[#allocation6 + $0xba0] sm:$0xff]
    %v553 = vld [vmem:[#allocation6 + $0xba8] sm:$0xff]
    %v554 = vld [vmem:[#allocation6 + $0xbb0] sm:$0xff]
    %v555 = vld [vmem:[#allocation6 + $0xbb8] sm:$0xff]
    %v556 = vld [vmem:[#allocation6 + $0xbc0] sm:$0xff]
    %v557 = vld [vmem:[#allocation6 + $0xbc8] sm:$0xff]
    %v558 = vld [vmem:[#allocation6 + $0xbd0] sm:$0xff]
    %v559 = vld [vmem:[#allocation6 + $0xbd8] sm:$0xff]
    %v560 = vld [vmem:[#allocation6 + $0xbe0] sm:$0xff]
    %v561 = vld [vmem:[#allocation6 + $0xbe8] sm:$0xff]
    %v562 = vld [vmem:[#allocation6 + $0xbf0] sm:$0xff]
    %v563 = vld [vmem:[#allocation6 + $0xbf8] sm:$0xff]
    %v564 = vld [vmem:[#allocation6 + $0xc00] sm:$0xff]
    %v565 = vld [vmem:[#allocation6 + $0xc08] sm:$0xff]
    %v566 = vld [vmem:[#allocation6 + $0xc10] sm:$0xff]
    %v567 = vld [vmem:[#allocation6 + $0xc18] sm:$0xff]
    %v568 = vld [vmem:[#allocation6 + $0xc20] sm:$0xff]
    %v569 = vld [vmem:[#allocation6 + $0xc28] sm:$0xff]
    %v570 = vld [vmem:[#allocation6 + $0xc30] sm:$0xff]
    %v571 = vld [vmem:[#allocation6 + $0xc38] sm:$0xff]
    %v572 = vld [vmem:[#allocation6 + $0xc40] sm:$0xff]
    %v573 = vld [vmem:[#allocation6 + $0xc48] sm:$0xff]
    %v574 = vld [vmem:[#allocation6 + $0xc50] sm:$0xff]
    %v575 = vld [vmem:[#allocation6 + $0xc58] sm:$0xff]
    %v576 = vld [vmem:[#allocation6 + $0xc60] sm:$0xff]
    %v577 = vld [vmem:[#allocation6 + $0xc68] sm:$0xff]
    %v578 = vld [vmem:[#allocation6 + $0xc70] sm:$0xff]
    %v579 = vld [vmem:[#allocation6 + $0xc78] sm:$0xff]
    %v580 = vld [vmem:[#allocation6 + $0xc80] sm:$0xff]
    %v581 = vld [vmem:[#allocation6 + $0xc88] sm:$0xff]
    %v582 = vld [vmem:[#allocation6 + $0xc90] sm:$0xff]
    %v583 = vld [vmem:[#allocation6 + $0xc98] sm:$0xff]
    %v584 = vld [vmem:[#allocation6 + $0xca0] sm:$0xff]
    %v585 = vld [vmem:[#allocation6 + $0xca8] sm:$0xff]
    %v586 = vld [vmem:[#allocation6 + $0xcb0] sm:$0xff]
    %v587 = vld [vmem:[#allocation6 + $0xcb8] sm:$0xff]
    %v588 = vld [vmem:[#allocation6 + $0xcc0] sm:$0xff]
    %v589 = vld [vmem:[#allocation6 + $0xcc8] sm:$0xff]
    %v590 = vld [vmem:[#allocation6 + $0xcd0] sm:$0xff]
    %v591 = vld [vmem:[#allocation6 + $0xcd8] sm:$0xff]
    %v592 = vld [vmem:[#allocation6 + $0xce0] sm:$0xff]
    %v593 = vld [vmem:[#allocation6 + $0xce8] sm:$0xff]
    %v594 = vld [vmem:[#allocation6 + $0xcf0] sm:$0xff]
    %v595 = vld [vmem:[#allocation6 + $0xcf8] sm:$0xff]
    %v596 = vld [vmem:[#allocation6 + $0xd00] sm:$0xff]
    %v597 = vld [vmem:[#allocation6 + $0xd08] sm:$0xff]
    %v598 = vld [vmem:[#allocation6 + $0xd10] sm:$0xff]
    %v599 = vld [vmem:[#allocation6 + $0xd18] sm:$0xff]
    %v600 = vld [vmem:[#allocation6 + $0xd20] sm:$0xff]
    %v601 = vld [vmem:[#allocation6 + $0xd28] sm:$0xff]
    %v602 = vld [vmem:[#allocation6 + $0xd30] sm:$0xff]
    %v603 = vld [vmem:[#allocation6 + $0xd38] sm:$0xff]
    %v604 = vld [vmem:[#allocation6 + $0xd40] sm:$0xff]
    %v605 = vld [vmem:[#allocation6 + $0xd48] sm:$0xff]
    %v606 = vld [vmem:[#allocation6 + $0xd50] sm:$0xff]
    %v607 = vld [vmem:[#allocation6 + $0xd58] sm:$0xff]
    %v608 = vld [vmem:[#allocation6 + $0xd60] sm:$0xff]
    %v609 = vld [vmem:[#allocation6 + $0xd68] sm:$0xff]
    %v610 = vld [vmem:[#allocation6 + $0xd70] sm:$0xff]
    %v611 = vld [vmem:[#allocation6 + $0xd78] sm:$0xff]
    %v612 = vld [vmem:[#allocation6 + $0xd80] sm:$0xff]
    %v613 = vld [vmem:[#allocation6 + $0xd88] sm:$0xff]
    %v614 = vld [vmem:[#allocation6 + $0xd90] sm:$0xff]
    %v615 = vld [vmem:[#allocation6 + $0xd98] sm:$0xff]
    %v616 = vld [vmem:[#allocation6 + $0xda0] sm:$0xff]
    %v617 = vld [vmem:[#allocation6 + $0xda8] sm:$0xff]
    %v618 = vld [vmem:[#allocation6 + $0xdb0] sm:$0xff]
    %v619 = vld [vmem:[#allocation6 + $0xdb8] sm:$0xff]
    %v620 = vld [vmem:[#allocation6 + $0xdc0] sm:$0xff]
    %v621 = vld [vmem:[#allocation6 + $0xdc8] sm:$0xff]
    %v622 = vld [vmem:[#allocation6 + $0xdd0] sm:$0xff]
    %v623 = vld [vmem:[#allocation6 + $0xdd8] sm:$0xff]
    %v624 = vld [vmem:[#allocation6 + $0xde0] sm:$0xff]
    %v625 = vld [vmem:[#allocation6 + $0xde8] sm:$0xff]
    %v626 = vld [vmem:[#allocation6 + $0xdf0] sm:$0xff]
    %v627 = vld [vmem:[#allocation6 + $0xdf8] sm:$0xff]
    %v628 = vld [vmem:[#allocation6 + $0xe00] sm:$0xff]
    %v629 = vld [vmem:[#allocation6 + $0xe08] sm:$0xff]
    %v630 = vld [vmem:[#allocation6 + $0xe10] sm:$0xff]
    %v631 = vld [vmem:[#allocation6 + $0xe18] sm:$0xff]
    %v632 = vld [vmem:[#allocation6 + $0xe20] sm:$0xff]
    %v633 = vld [vmem:[#allocation6 + $0xe28] sm:$0xff]
    %v634 = vld [vmem:[#allocation6 + $0xe30] sm:$0xff]
    %v635 = vld [vmem:[#allocation6 + $0xe38] sm:$0xff]
    %v636 = vld [vmem:[#allocation6 + $0xe40] sm:$0xff]
    %v637 = vld [vmem:[#allocation6 + $0xe48] sm:$0xff]
    %v638 = vld [vmem:[#allocation6 + $0xe50] sm:$0xff]
    %v639 = vld [vmem:[#allocation6 + $0xe58] sm:$0xff]
    %v640 = vld [vmem:[#allocation6 + $0xe60] sm:$0xff]
    %v641 = vld [vmem:[#allocation6 + $0xe68] sm:$0xff]
    %v642 = vld [vmem:[#allocation6 + $0xe70] sm:$0xff]
    %v643 = vld [vmem:[#allocation6 + $0xe78] sm:$0xff]
    %v644 = vld [vmem:[#allocation6 + $0xe80] sm:$0xff]
    %v645 = vld [vmem:[#allocation6 + $0xe88] sm:$0xff]
    %v646 = vld [vmem:[#allocation6 + $0xe90] sm:$0xff]
    %v647 = vld [vmem:[#allocation6 + $0xe98] sm:$0xff]
    %v648 = vld [vmem:[#allocation6 + $0xea0] sm:$0xff]
    %v649 = vld [vmem:[#allocation6 + $0xea8] sm:$0xff]
    %v650 = vld [vmem:[#allocation6 + $0xeb0] sm:$0xff]
    %v651 = vld [vmem:[#allocation6 + $0xeb8] sm:$0xff]
    %v652 = vld [vmem:[#allocation6 + $0xec0] sm:$0xff]
    %v653 = vld [vmem:[#allocation6 + $0xec8] sm:$0xff]
    %v654 = vld [vmem:[#allocation6 + $0xed0] sm:$0xff]
    %v655 = vld [vmem:[#allocation6 + $0xed8] sm:$0xff]
    %v656 = vld [vmem:[#allocation6 + $0xee0] sm:$0xff]
    %v657 = vld [vmem:[#allocation6 + $0xee8] sm:$0xff]
    %v658 = vld [vmem:[#allocation6 + $0xef0] sm:$0xff]
    %v659 = vld [vmem:[#allocation6 + $0xef8] sm:$0xff]
    %v660 = vld [vmem:[#allocation6 + $0xf00] sm:$0xff]
    %v661 = vld [vmem:[#allocation6 + $0xf08] sm:$0xff]
    %v662 = vld [vmem:[#allocation6 + $0xf10] sm:$0xff]
    %v663 = vld [vmem:[#allocation6 + $0xf18] sm:$0xff]
    %v664 = vld [vmem:[#allocation6 + $0xf20] sm:$0xff]
    %v665 = vld [vmem:[#allocation6 + $0xf28] sm:$0xff]
    %v666 = vld [vmem:[#allocation6 + $0xf30] sm:$0xff]
    %v667 = vld [vmem:[#allocation6 + $0xf38] sm:$0xff]
    %v668 = vld [vmem:[#allocation6 + $0xf40] sm:$0xff]
    %v669 = vld [vmem:[#allocation6 + $0xf48] sm:$0xff]
    %v670 = vld [vmem:[#allocation6 + $0xf50] sm:$0xff]
    %v671 = vld [vmem:[#allocation6 + $0xf58] sm:$0xff]
    %v672 = vld [vmem:[#allocation6 + $0xf60] sm:$0xff]
    %v673 = vld [vmem:[#allocation6 + $0xf68] sm:$0xff]
    %v674 = vld [vmem:[#allocation6 + $0xf70] sm:$0xff]
    %v675 = vld [vmem:[#allocation6 + $0xf78] sm:$0xff]
    %v676 = vld [vmem:[#allocation6 + $0xf80] sm:$0xff]
    %v677 = vld [vmem:[#allocation6 + $0xf88] sm:$0xff]
    %v678 = vld [vmem:[#allocation6 + $0xf90] sm:$0xff]
    %v679 = vld [vmem:[#allocation6 + $0xf98] sm:$0xff]
    %v680 = vld [vmem:[#allocation6 + $0xfa0] sm:$0xff]
    %v681 = vld [vmem:[#allocation6 + $0xfa8] sm:$0xff]
    %v682 = vld [vmem:[#allocation6 + $0xfb0] sm:$0xff]
    %v683 = vld [vmem:[#allocation6 + $0xfb8] sm:$0xff]
    %v684 = vld [vmem:[#allocation6 + $0xfc0] sm:$0xff]
    %v685 = vld [vmem:[#allocation6 + $0xfc8] sm:$0xff]
    %v686 = vld [vmem:[#allocation6 + $0xfd0] sm:$0xff]
    %v687 = vld [vmem:[#allocation6 + $0xfd8] sm:$0xff]
    %v688 = vld [vmem:[#allocation6 + $0xfe0] sm:$0xff]
    %v689 = vld [vmem:[#allocation6 + $0xfe8] sm:$0xff]
    %v690 = vld [vmem:[#allocation6 + $0xff0] sm:$0xff]
    %v691 = vld [vmem:[#allocation6 + $0xff8] sm:$0xff]
    %v692 = vld [vmem:[#allocation6 + $0x1000] sm:$0xff]
    %v693 = vld [vmem:[#allocation6 + $0x1008] sm:$0xff]
    %v694 = vld [vmem:[#allocation6 + $0x1010] sm:$0xff]
    %v695 = vld [vmem:[#allocation6 + $0x1018] sm:$0xff]
    %v696 = vld [vmem:[#allocation6 + $0x1020] sm:$0xff]
    %v697 = vld [vmem:[#allocation6 + $0x1028] sm:$0xff]
    %v698 = vld [vmem:[#allocation6 + $0x1030] sm:$0xff]
    %v699 = vld [vmem:[#allocation6 + $0x1038] sm:$0xff]
    %v700 = vld [vmem:[#allocation6 + $0x1040] sm:$0xff]
    %v701 = vld [vmem:[#allocation6 + $0x1048] sm:$0xff]
    %v702 = vld [vmem:[#allocation6 + $0x1050] sm:$0xff]
    %v703 = vld [vmem:[#allocation6 + $0x1058] sm:$0xff]
    %v704 = vld [vmem:[#allocation6 + $0x1060] sm:$0xff]
    %v705 = vld [vmem:[#allocation6 + $0x1068] sm:$0xff]
    %v706 = vld [vmem:[#allocation6 + $0x1070] sm:$0xff]
    %v707 = vld [vmem:[#allocation6 + $0x1078] sm:$0xff]
    %v708 = vld [vmem:[#allocation6 + $0x1080] sm:$0xff]
    %v709 = vld [vmem:[#allocation6 + $0x1088] sm:$0xff]
    %v710 = vld [vmem:[#allocation6 + $0x1090] sm:$0xff]
    %v711 = vld [vmem:[#allocation6 + $0x1098] sm:$0xff]
    %v712 = vld [vmem:[#allocation6 + $0x10a0] sm:$0xff]
    %v713 = vld [vmem:[#allocation6 + $0x10a8] sm:$0xff]
    %v714 = vld [vmem:[#allocation6 + $0x10b0] sm:$0xff]
    %v715 = vld [vmem:[#allocation6 + $0x10b8] sm:$0xff]
    %v716 = vld [vmem:[#allocation6 + $0x10c0] sm:$0xff]
    %v717 = vld [vmem:[#allocation6 + $0x10c8] sm:$0xff]
    %v718 = vld [vmem:[#allocation6 + $0x10d0] sm:$0xff]
    %v719 = vld [vmem:[#allocation6 + $0x10d8] sm:$0xff]
    %v720 = vld [vmem:[#allocation6 + $0x10e0] sm:$0xff]
    %v721 = vld [vmem:[#allocation6 + $0x10e8] sm:$0xff]
    %v722 = vld [vmem:[#allocation6 + $0x10f0] sm:$0xff]
    %v723 = vld [vmem:[#allocation6 + $0x10f8] sm:$0xff]
    %v724 = vld [vmem:[#allocation6 + $0x1100] sm:$0xff]
    %v725 = vld [vmem:[#allocation6 + $0x1108] sm:$0xff]
    %v726 = vld [vmem:[#allocation6 + $0x1110] sm:$0xff]
    %v727 = vld [vmem:[#allocation6 + $0x1118] sm:$0xff]
    %v728 = vld [vmem:[#allocation6 + $0x1120] sm:$0xff]
    %v729 = vld [vmem:[#allocation6 + $0x1128] sm:$0xff]
    %v730 = vld [vmem:[#allocation6 + $0x1130] sm:$0xff]
    %v731 = vld [vmem:[#allocation6 + $0x1138] sm:$0xff]
    %v732 = vld [vmem:[#allocation6 + $0x1140] sm:$0xff]
    %v733 = vld [vmem:[#allocation6 + $0x1148] sm:$0xff]
    %v734 = vld [vmem:[#allocation6 + $0x1150] sm:$0xff]
    %v735 = vld [vmem:[#allocation6 + $0x1158] sm:$0xff]
    %v736 = vld [vmem:[#allocation6 + $0x1160] sm:$0xff]
    %v737 = vld [vmem:[#allocation6 + $0x1168] sm:$0xff]
    %v738 = vld [vmem:[#allocation6 + $0x1170] sm:$0xff]
    %v739 = vld [vmem:[#allocation6 + $0x1178] sm:$0xff]
    %v740 = vld [vmem:[#allocation6 + $0x1180] sm:$0xff]
    %v741 = vld [vmem:[#allocation6 + $0x1188] sm:$0xff]
    %v742 = vld [vmem:[#allocation6 + $0x1190] sm:$0xff]
    %v743 = vld [vmem:[#allocation6 + $0x1198] sm:$0xff]
    %v744 = vld [vmem:[#allocation6 + $0x11a0] sm:$0xff]
    %v745 = vld [vmem:[#allocation6 + $0x11a8] sm:$0xff]
    %v746 = vld [vmem:[#allocation6 + $0x11b0] sm:$0xff]
    %v747 = vld [vmem:[#allocation6 + $0x11b8] sm:$0xff]
    %v748 = vld [vmem:[#allocation6 + $0x11c0] sm:$0xff]
    %v749 = vld [vmem:[#allocation6 + $0x11c8] sm:$0xff]
    %v750 = vld [vmem:[#allocation6 + $0x11d0] sm:$0xff]
    %v751 = vld [vmem:[#allocation6 + $0x11d8] sm:$0xff]
    %v752 = vld [vmem:[#allocation6 + $0x11e0] sm:$0xff]
    %v753 = vld [vmem:[#allocation6 + $0x11e8] sm:$0xff]
    %v754 = vld [vmem:[#allocation6 + $0x11f0] sm:$0xff]
    %v755 = vld [vmem:[#allocation6 + $0x11f8] sm:$0xff]
    %v756 = vld [vmem:[#allocation8] sm:$0x3f]
    %v758 = vlaneseq
    %v759 = vshrl.u32 %v758, 7
    %v760 = vsub.s32 0, %v759
    %v761 = vrot.slane %v756, %v760
    %v762 = vlaneseq
    %v763 = vshrl.u32 %v762, 7
    %v764 = vsub.s32 1, %v763
    %v765 = vrot.slane %v756, %v764
    %v766 = vlaneseq
    %v767 = vshrl.u32 %v766, 7
    %v768 = vsub.s32 2, %v767
    %v769 = vrot.slane %v756, %v768
    %v770 = vlaneseq
    %v771 = vshrl.u32 %v770, 7
    %v772 = vsub.s32 3, %v771
    %v773 = vrot.slane %v756, %v772
    %v774 = vlaneseq
    %v775 = vshrl.u32 %v774, 7
    %v776 = vsub.s32 4, %v775
    %v777 = vrot.slane %v756, %v776
    %v778 = vlaneseq
    %v779 = vshrl.u32 %v778, 7
    %v780 = vsub.s32 5, %v779
    %v781 = vrot.slane %v756, %v780
    %788 = vmatprep.subr.mxu0 %v181
    %789 = vmatpush1.msra.mxu0 %v180
    %790 = vmatprep.subr.mxu0 %v187
    %791 = vmatpush1.msra.mxu0 %v186
    %792 = vmatprep.subr.mxu0 %v193
    %793 = vmatpush1.msra.mxu0 %v192
    %794 = vmatprep.subr.mxu0 %v199
    %795 = vmatpush1.msra.mxu0 %v198
    %796 = vmatprep.subr.mxu0 %v205
    %797 = vmatpush1.msra.mxu0 %v204
    %798 = vmatprep.subr.mxu0 %v211
    %799 = vmatpush1.msra.mxu0 %v210
    %800 = vmatprep.subr.mxu0 %v217
    %801 = vmatpush1.msra.mxu0 %v216
    %802 = vmatprep.subr.mxu0 %v223
    %803 = vmatpush1.msra.mxu0 %v222
    %804 = vmatprep.subr.mxu0 %v229
    %805 = vmatpush1.msra.mxu0 %v228
    %806 = vmatprep.subr.mxu0 %v235
    %807 = vmatpush1.msra.mxu0 %v234
    %808 = vmatprep.subr.mxu0 %v241
    %809 = vmatpush1.msra.mxu0 %v240
    %810 = vmatprep.subr.mxu0 %v247
    %811 = vmatpush1.msra.mxu0 %v246
    %812 = vmatprep.subr.mxu0 %v253
    %813 = vmatpush1.msra.mxu0 %v252
    %814 = vmatprep.subr.mxu0 %v259
    %815 = vmatpush1.msra.mxu0 %v258
    %816 = vmatprep.subr.mxu0 %v265
    %817 = vmatpush1.msra.mxu0 %v264
    %818 = vmatprep.subr.mxu0 %v271
    %819 = vmatpush1.msra.mxu0 %v270
    %820 = vmatprep.subr.mxu0 %v277
    %821 = vmatpush1.msra.mxu0 %v276
    %822 = vmatprep.subr.mxu0 %v283
    %823 = vmatpush1.msra.mxu0 %v282
    %824 = vmatprep.subr.mxu0 %v289
    %825 = vmatpush1.msra.mxu0 %v288
    %826 = vmatprep.subr.mxu0 %v295
    %827 = vmatpush1.msra.mxu0 %v294
    %828 = vmatprep.subr.mxu0 %v301
    %829 = vmatpush1.msra.mxu0 %v300
    %830 = vmatprep.subr.mxu0 %v307
    %831 = vmatpush1.msra.mxu0 %v306
    %832 = vmatprep.subr.mxu0 %v313
    %833 = vmatpush1.msra.mxu0 %v312
    %834 = vmatprep.subr.mxu0 %v319
    %835 = vmatpush1.msra.mxu0 %v318
    %836 = vmatprep.subr.mxu0 %v325
    %837 = vmatpush1.msra.mxu0 %v324
    %838 = vmatprep.subr.mxu0 %v331
    %839 = vmatpush1.msra.mxu0 %v330
    %840 = vmatprep.subr.mxu0 %v337
    %841 = vmatpush1.msra.mxu0 %v336
    %842 = vmatprep.subr.mxu0 %v343
    %843 = vmatpush1.msra.mxu0 %v342
    %844 = vmatprep.subr.mxu0 %v349
    %845 = vmatpush1.msra.mxu0 %v348
    %846 = vmatprep.subr.mxu0 %v355
    %847 = vmatpush1.msra.mxu0 %v354
    %848 = vmatprep.subr.mxu0 %v361
    %849 = vmatpush1.msra.mxu0 %v360
    %850 = vmatprep.subr.mxu0 %v367
    %851 = vmatpush1.msra.mxu0 %v366
    %852 = vmatprep.mubr.f32.mxu0 %v169
    %853 = vmatmul.mubr.f32.gmra.mrb[0].mxu0 %v168
    %v854 = vpop.f32.mrb[0].mxu0
    %v855 = vadd.f32 %v761, %v854
    %v856 = vpop.f32.mrb[0].mxu0
    %v857 = vadd.f32 %v765, %v856
    %858 = vmatprep.mubr.f32.mxu0 %v175
    %859 = vmatmul.mubr.f32.gmra.mrb[0].mxu0 %v174
    %v860 = vpop.f32.mrb[0].mxu0
    %v861 = vadd.f32 %v761, %v860
    %v862 = vpop.f32.mrb[0].mxu0
    %v863 = vadd.f32 %v765, %v862
    %864 = vdwg.mxu0
    %865 = vmatprep.subr.mxu0 %v373
    %866 = vmatpush1.msra.mxu0 %v372
    %867 = vmatprep.subr.mxu0 %v379
    %868 = vmatpush1.msra.mxu0 %v378
    %869 = vmatprep.subr.mxu0 %v385
    %870 = vmatpush1.msra.mxu0 %v384
    %871 = vmatprep.subr.mxu0 %v391
    %872 = vmatpush1.msra.mxu0 %v390
    %873 = vmatprep.subr.mxu0 %v397
    %874 = vmatpush1.msra.mxu0 %v396
    %875 = vmatprep.subr.mxu0 %v403
    %876 = vmatpush1.msra.mxu0 %v402
    %877 = vmatprep.subr.mxu0 %v409
    %878 = vmatpush1.msra.mxu0 %v408
    %879 = vmatprep.subr.mxu0 %v415
    %880 = vmatpush1.msra.mxu0 %v414
    %881 = vmatprep.subr.mxu0 %v421
    %882 = vmatpush1.msra.mxu0 %v420
    %883 = vmatprep.subr.mxu0 %v427
    %884 = vmatpush1.msra.mxu0 %v426
    %885 = vmatprep.subr.mxu0 %v433
    %886 = vmatpush1.msra.mxu0 %v432
    %887 = vmatprep.subr.mxu0 %v439
    %888 = vmatpush1.msra.mxu0 %v438
    %889 = vmatprep.subr.mxu0 %v445
    %890 = vmatpush1.msra.mxu0 %v444
    %891 = vmatprep.subr.mxu0 %v451
    %892 = vmatpush1.msra.mxu0 %v450
    %893 = vmatprep.subr.mxu0 %v457
    %894 = vmatpush1.msra.mxu0 %v456
    %895 = vmatprep.subr.mxu0 %v463
    %896 = vmatpush1.msra.mxu0 %v462
    %897 = vmatprep.subr.mxu0 %v469
    %898 = vmatpush1.msra.mxu0 %v468
    %899 = vmatprep.subr.mxu0 %v475
    %900 = vmatpush1.msra.mxu0 %v474
    %901 = vmatprep.subr.mxu0 %v481
    %902 = vmatpush1.msra.mxu0 %v480
    %903 = vmatprep.subr.mxu0 %v487
    %904 = vmatpush1.msra.mxu0 %v486
    %905 = vmatprep.subr.mxu0 %v493
    %906 = vmatpush1.msra.mxu0 %v492
    %907 = vmatprep.subr.mxu0 %v499
    %908 = vmatpush1.msra.mxu0 %v498
    %909 = vmatprep.subr.mxu0 %v505
    %910 = vmatpush1.msra.mxu0 %v504
    %911 = vmatprep.subr.mxu0 %v511
    %912 = vmatpush1.msra.mxu0 %v510
    %913 = vmatprep.subr.mxu0 %v517
    %914 = vmatpush1.msra.mxu0 %v516
    %915 = vmatprep.subr.mxu0 %v523
    %916 = vmatpush1.msra.mxu0 %v522
    %917 = vmatprep.subr.mxu0 %v529
    %918 = vmatpush1.msra.mxu0 %v528
    %919 = vmatprep.subr.mxu0 %v535
    %920 = vmatpush1.msra.mxu0 %v534
    %921 = vmatprep.subr.mxu0 %v541
    %922 = vmatpush1.msra.mxu0 %v540
    %923 = vmatprep.subr.mxu0 %v547
    %924 = vmatpush1.msra.mxu0 %v546
    %925 = vmatprep.subr.mxu0 %v553
    %926 = vmatpush1.msra.mxu0 %v552
    %927 = vmatprep.subr.mxu0 %v559
    %928 = vmatpush1.msra.mxu0 %v558
    %929 = vmatprep.mubr.f32.mxu0 %v171
    %930 = vmatmul.mubr.f32.gmra.mrb[0].mxu0 %v170
    %v931 = vpop.f32.mrb[0].mxu0
    %v932 = vadd.f32 %v855, %v931
    %v933 = vpop.f32.mrb[0].mxu0
    %v934 = vadd.f32 %v857, %v933
    %935 = vmatprep.mubr.f32.mxu0 %v177
    %936 = vmatmul.mubr.f32.gmra.mrb[0].mxu0 %v176
    %v937 = vpop.f32.mrb[0].mxu0
    %v938 = vadd.f32 %v861, %v937
    %v939 = vpop.f32.mrb[0].mxu0
    %v940 = vadd.f32 %v863, %v939
    %941 = vdwg.mxu0
    %942 = vmatprep.subr.mxu0 %v565
    %943 = vmatpush1.msra.mxu0 %v564
    %944 = vmatprep.subr.mxu0 %v571
    %945 = vmatpush1.msra.mxu0 %v570
    %946 = vmatprep.subr.mxu0 %v577
    %947 = vmatpush1.msra.mxu0 %v576
    %948 = vmatprep.subr.mxu0 %v583
    %949 = vmatpush1.msra.mxu0 %v582
    %950 = vmatprep.subr.mxu0 %v589
    %951 = vmatpush1.msra.mxu0 %v588
    %952 = vmatprep.subr.mxu0 %v595
    %953 = vmatpush1.msra.mxu0 %v594
    %954 = vmatprep.subr.mxu0 %v601
    %955 = vmatpush1.msra.mxu0 %v600
    %956 = vmatprep.subr.mxu0 %v607
    %957 = vmatpush1.msra.mxu0 %v606
    %958 = vmatprep.subr.mxu0 %v613
    %959 = vmatpush1.msra.mxu0 %v612
    %960 = vmatprep.subr.mxu0 %v619
    %961 = vmatpush1.msra.mxu0 %v618
    %962 = vmatprep.subr.mxu0 %v625
    %963 = vmatpush1.msra.mxu0 %v624
    %964 = vmatprep.subr.mxu0 %v631
    %965 = vmatpush1.msra.mxu0 %v630
    %966 = vmatprep.subr.mxu0 %v637
    %967 = vmatpush1.msra.mxu0 %v636
    %968 = vmatprep.subr.mxu0 %v643
    %969 = vmatpush1.msra.mxu0 %v642
    %970 = vmatprep.subr.mxu0 %v649
    %971 = vmatpush1.msra.mxu0 %v648
    %972 = vmatprep.subr.mxu0 %v655
    %973 = vmatpush1.msra.mxu0 %v654
    %974 = vmatprep.subr.mxu0 %v661
    %975 = vmatpush1.msra.mxu0 %v660
    %976 = vmatprep.subr.mxu0 %v667
    %977 = vmatpush1.msra.mxu0 %v666
    %978 = vmatprep.subr.mxu0 %v673
    %979 = vmatpush1.msra.mxu0 %v672
    %980 = vmatprep.subr.mxu0 %v679
    %981 = vmatpush1.msra.mxu0 %v678
    %982 = vmatprep.subr.mxu0 %v685
    %983 = vmatpush1.msra.mxu0 %v684
    %984 = vmatprep.subr.mxu0 %v691
    %985 = vmatpush1.msra.mxu0 %v690
    %986 = vmatprep.subr.mxu0 %v697
    %987 = vmatpush1.msra.mxu0 %v696
    %988 = vmatprep.subr.mxu0 %v703
    %989 = vmatpush1.msra.mxu0 %v702
    %990 = vmatprep.subr.mxu0 %v709
    %991 = vmatpush1.msra.mxu0 %v708
    %992 = vmatprep.subr.mxu0 %v715
    %993 = vmatpush1.msra.mxu0 %v714
    %994 = vmatprep.subr.mxu0 %v721
    %995 = vmatpush1.msra.mxu0 %v720
    %996 = vmatprep.subr.mxu0 %v727
    %997 = vmatpush1.msra.mxu0 %v726
    %998 = vmatprep.subr.mxu0 %v733
    %999 = vmatpush1.msra.mxu0 %v732
    %1000 = vmatprep.subr.mxu0 %v739
    %1001 = vmatpush1.msra.mxu0 %v738
    %1002 = vmatprep.subr.mxu0 %v745
    %1003 = vmatpush1.msra.mxu0 %v744
    %1004 = vmatprep.subr.mxu0 %v751
    %1005 = vmatpush1.msra.mxu0 %v750
    %1006 = vmatprep.mubr.f32.mxu0 %v173
    %1007 = vmatmul.mubr.f32.gmra.mrb[0].mxu0 %v172
    %v1008 = vpop.f32.mrb[0].mxu0
    %v1009 = vadd.f32 %v932, %v1008
    %v1010 = vpop.f32.mrb[0].mxu0
    %v1011 = vadd.f32 %v934, %v1010
    %1012 = vmatprep.mubr.f32.mxu0 %v179
    %1013 = vmatmul.mubr.f32.gmra.mrb[0].mxu0 %v178
    %v1014 = vpop.f32.mrb[0].mxu0
    %v1015 = vadd.f32 %v938, %v1014
    %v1016 = vpop.f32.mrb[0].mxu0
    %v1017 = vadd.f32 %v940, %v1016
    %1018 = vdwg.mxu0
    %1019 = vmatprep.subr.mxu0 %v183
    %1020 = vmatpush1.msra.mxu0 %v182
    %1021 = vmatprep.subr.mxu0 %v189
    %1022 = vmatpush1.msra.mxu0 %v188
    %1023 = vmatprep.subr.mxu0 %v195
    %1024 = vmatpush1.msra.mxu0 %v194
    %1025 = vmatprep.subr.mxu0 %v201
    %1026 = vmatpush1.msra.mxu0 %v200
    %1027 = vmatprep.subr.mxu0 %v207
    %1028 = vmatpush1.msra.mxu0 %v206
    %1029 = vmatprep.subr.mxu0 %v213
    %1030 = vmatpush1.msra.mxu0 %v212
    %1031 = vmatprep.subr.mxu0 %v219
    %1032 = vmatpush1.msra.mxu0 %v218
    %1033 = vmatprep.subr.mxu0 %v225
    %1034 = vmatpush1.msra.mxu0 %v224
    %1035 = vmatprep.subr.mxu0 %v231
    %1036 = vmatpush1.msra.mxu0 %v230
    %1037 = vmatprep.subr.mxu0 %v237
    %1038 = vmatpush1.msra.mxu0 %v236
    %1039 = vmatprep.subr.mxu0 %v243
    %1040 = vmatpush1.msra.mxu0 %v242
    %1041 = vmatprep.subr.mxu0 %v249
    %1042 = vmatpush1.msra.mxu0 %v248
    %1043 = vmatprep.subr.mxu0 %v255
    %1044 = vmatpush1.msra.mxu0 %v254
    %1045 = vmatprep.subr.mxu0 %v261
    %1046 = vmatpush1.msra.mxu0 %v260
    %1047 = vmatprep.subr.mxu0 %v267
    %1048 = vmatpush1.msra.mxu0 %v266
    %1049 = vmatprep.subr.mxu0 %v273
    %1050 = vmatpush1.msra.mxu0 %v272
    %1051 = vmatprep.subr.mxu0 %v279
    %1052 = vmatpush1.msra.mxu0 %v278
    %1053 = vmatprep.subr.mxu0 %v285
    %1054 = vmatpush1.msra.mxu0 %v284
    %1055 = vmatprep.subr.mxu0 %v291
    %1056 = vmatpush1.msra.mxu0 %v290
    %1057 = vmatprep.subr.mxu0 %v297
    %1058 = vmatpush1.msra.mxu0 %v296
    %1059 = vmatprep.subr.mxu0 %v303
    %1060 = vmatpush1.msra.mxu0 %v302
    %1061 = vmatprep.subr.mxu0 %v309
    %1062 = vmatpush1.msra.mxu0 %v308
    %1063 = vmatprep.subr.mxu0 %v315
    %1064 = vmatpush1.msra.mxu0 %v314
    %1065 = vmatprep.subr.mxu0 %v321
    %1066 = vmatpush1.msra.mxu0 %v320
    %1067 = vmatprep.subr.mxu0 %v327
    %1068 = vmatpush1.msra.mxu0 %v326
    %1069 = vmatprep.subr.mxu0 %v333
    %1070 = vmatpush1.msra.mxu0 %v332
    %1071 = vmatprep.subr.mxu0 %v339
    %1072 = vmatpush1.msra.mxu0 %v338
    %1073 = vmatprep.subr.mxu0 %v345
    %1074 = vmatpush1.msra.mxu0 %v344
    %1075 = vmatprep.subr.mxu0 %v351
    %1076 = vmatpush1.msra.mxu0 %v350
    %1077 = vmatprep.subr.mxu0 %v357
    %1078 = vmatpush1.msra.mxu0 %v356
    %1079 = vmatprep.subr.mxu0 %v363
    %1080 = vmatpush1.msra.mxu0 %v362
    %1081 = vmatprep.subr.mxu0 %v369
    %1082 = vmatpush1.msra.mxu0 %v368
    %1083 = vmatprep.mubr.f32.mxu0 %v169
    %1084 = vmatmul.mubr.f32.gmra.mrb[0].mxu0 %v168
    %v1085 = vpop.f32.mrb[0].mxu0
    %v1086 = vadd.f32 %v769, %v1085
    %v1087 = vpop.f32.mrb[0].mxu0
    %v1088 = vadd.f32 %v773, %v1087
    %1089 = vmatprep.mubr.f32.mxu0 %v175
    %1090 = vmatmul.mubr.f32.gmra.mrb[0].mxu0 %v174
    %v1091 = vpop.f32.mrb[0].mxu0
    %v1092 = vadd.f32 %v769, %v1091
    %v1093 = vpop.f32.mrb[0].mxu0
    %v1094 = vadd.f32 %v773, %v1093
    %1095 = vdwg.mxu0
    %1096 = vmatprep.subr.mxu0 %v375
    %1097 = vmatpush1.msra.mxu0 %v374
    %1098 = vmatprep.subr.mxu0 %v381
    %1099 = vmatpush1.msra.mxu0 %v380
    %1100 = vmatprep.subr.mxu0 %v387
    %1101 = vmatpush1.msra.mxu0 %v386
    %1102 = vmatprep.subr.mxu0 %v393
    %1103 = vmatpush1.msra.mxu0 %v392
    %1104 = vmatprep.subr.mxu0 %v399
    %1105 = vmatpush1.msra.mxu0 %v398
    %1106 = vmatprep.subr.mxu0 %v405
    %1107 = vmatpush1.msra.mxu0 %v404
    %1108 = vmatprep.subr.mxu0 %v411
    %1109 = vmatpush1.msra.mxu0 %v410
    %1110 = vmatprep.subr.mxu0 %v417
    %1111 = vmatpush1.msra.mxu0 %v416
    %1112 = vmatprep.subr.mxu0 %v423
    %1113 = vmatpush1.msra.mxu0 %v422
    %1114 = vmatprep.subr.mxu0 %v429
    %1115 = vmatpush1.msra.mxu0 %v428
    %1116 = vmatprep.subr.mxu0 %v435
    %1117 = vmatpush1.msra.mxu0 %v434
    %1118 = vmatprep.subr.mxu0 %v441
    %1119 = vmatpush1.msra.mxu0 %v440
    %1120 = vmatprep.subr.mxu0 %v447
    %1121 = vmatpush1.msra.mxu0 %v446
    %1122 = vmatprep.subr.mxu0 %v453
    %1123 = vmatpush1.msra.mxu0 %v452
    %1124 = vmatprep.subr.mxu0 %v459
    %1125 = vmatpush1.msra.mxu0 %v458
    %1126 = vmatprep.subr.mxu0 %v465
    %1127 = vmatpush1.msra.mxu0 %v464
    %1128 = vmatprep.subr.mxu0 %v471
    %1129 = vmatpush1.msra.mxu0 %v470
    %1130 = vmatprep.subr.mxu0 %v477
    %1131 = vmatpush1.msra.mxu0 %v476
    %1132 = vmatprep.subr.mxu0 %v483
    %1133 = vmatpush1.msra.mxu0 %v482
    %1134 = vmatprep.subr.mxu0 %v489
    %1135 = vmatpush1.msra.mxu0 %v488
    %1136 = vmatprep.subr.mxu0 %v495
    %1137 = vmatpush1.msra.mxu0 %v494
    %1138 = vmatprep.subr.mxu0 %v501
    %1139 = vmatpush1.msra.mxu0 %v500
    %1140 = vmatprep.subr.mxu0 %v507
    %1141 = vmatpush1.msra.mxu0 %v506
    %1142 = vmatprep.subr.mxu0 %v513
    %1143 = vmatpush1.msra.mxu0 %v512
    %1144 = vmatprep.subr.mxu0 %v519
    %1145 = vmatpush1.msra.mxu0 %v518
    %1146 = vmatprep.subr.mxu0 %v525
    %1147 = vmatpush1.msra.mxu0 %v524
    %1148 = vmatprep.subr.mxu0 %v531
    %1149 = vmatpush1.msra.mxu0 %v530
    %1150 = vmatprep.subr.mxu0 %v537
    %1151 = vmatpush1.msra.mxu0 %v536
    %1152 = vmatprep.subr.mxu0 %v543
    %1153 = vmatpush1.msra.mxu0 %v542
    %1154 = vmatprep.subr.mxu0 %v549
    %1155 = vmatpush1.msra.mxu0 %v548
    %1156 = vmatprep.subr.mxu0 %v555
    %1157 = vmatpush1.msra.mxu0 %v554
    %1158 = vmatprep.subr.mxu0 %v561
    %1159 = vmatpush1.msra.mxu0 %v560
    %1160 = vmatprep.mubr.f32.mxu0 %v171
    %1161 = vmatmul.mubr.f32.gmra.mrb[0].mxu0 %v170
    %v1162 = vpop.f32.mrb[0].mxu0
    %v1163 = vadd.f32 %v1086, %v1162
    %v1164 = vpop.f32.mrb[0].mxu0
    %v1165 = vadd.f32 %v1088, %v1164
    %1166 = vmatprep.mubr.f32.mxu0 %v177
    %1167 = vmatmul.mubr.f32.gmra.mrb[0].mxu0 %v176
    %v1168 = vpop.f32.mrb[0].mxu0
    %v1169 = vadd.f32 %v1092, %v1168
    %v1170 = vpop.f32.mrb[0].mxu0
    %v1171 = vadd.f32 %v1094, %v1170
    %1172 = vdwg.mxu0
    %1173 = vmatprep.subr.mxu0 %v567
    %1174 = vmatpush1.msra.mxu0 %v566
    %1175 = vmatprep.subr.mxu0 %v573
    %1176 = vmatpush1.msra.mxu0 %v572
    %1177 = vmatprep.subr.mxu0 %v579
    %1178 = vmatpush1.msra.mxu0 %v578
    %1179 = vmatprep.subr.mxu0 %v585
    %1180 = vmatpush1.msra.mxu0 %v584
    %1181 = vmatprep.subr.mxu0 %v591
    %1182 = vmatpush1.msra.mxu0 %v590
    %1183 = vmatprep.subr.mxu0 %v597
    %1184 = vmatpush1.msra.mxu0 %v596
    %1185 = vmatprep.subr.mxu0 %v603
    %1186 = vmatpush1.msra.mxu0 %v602
    %1187 = vmatprep.subr.mxu0 %v609
    %1188 = vmatpush1.msra.mxu0 %v608
    %1189 = vmatprep.subr.mxu0 %v615
    %1190 = vmatpush1.msra.mxu0 %v614
    %1191 = vmatprep.subr.mxu0 %v621
    %1192 = vmatpush1.msra.mxu0 %v620
    %1193 = vmatprep.subr.mxu0 %v627
    %1194 = vmatpush1.msra.mxu0 %v626
    %1195 = vmatprep.subr.mxu0 %v633
    %1196 = vmatpush1.msra.mxu0 %v632
    %1197 = vmatprep.subr.mxu0 %v639
    %1198 = vmatpush1.msra.mxu0 %v638
    %1199 = vmatprep.subr.mxu0 %v645
    %1200 = vmatpush1.msra.mxu0 %v644
    %1201 = vmatprep.subr.mxu0 %v651
    %1202 = vmatpush1.msra.mxu0 %v650
    %1203 = vmatprep.subr.mxu0 %v657
    %1204 = vmatpush1.msra.mxu0 %v656
    %1205 = vmatprep.subr.mxu0 %v663
    %1206 = vmatpush1.msra.mxu0 %v662
    %1207 = vmatprep.subr.mxu0 %v669
    %1208 = vmatpush1.msra.mxu0 %v668
    %1209 = vmatprep.subr.mxu0 %v675
    %1210 = vmatpush1.msra.mxu0 %v674
    %1211 = vmatprep.subr.mxu0 %v681
    %1212 = vmatpush1.msra.mxu0 %v680
    %1213 = vmatprep.subr.mxu0 %v687
    %1214 = vmatpush1.msra.mxu0 %v686
    %1215 = vmatprep.subr.mxu0 %v693
    %1216 = vmatpush1.msra.mxu0 %v692
    %1217 = vmatprep.subr.mxu0 %v699
    %1218 = vmatpush1.msra.mxu0 %v698
    %1219 = vmatprep.subr.mxu0 %v705
    %1220 = vmatpush1.msra.mxu0 %v704
    %1221 = vmatprep.subr.mxu0 %v711
    %1222 = vmatpush1.msra.mxu0 %v710
    %1223 = vmatprep.subr.mxu0 %v717
    %1224 = vmatpush1.msra.mxu0 %v716
    %1225 = vmatprep.subr.mxu0 %v723
    %1226 = vmatpush1.msra.mxu0 %v722
    %1227 = vmatprep.subr.mxu0 %v729
    %1228 = vmatpush1.msra.mxu0 %v728
    %1229 = vmatprep.subr.mxu0 %v735
    %1230 = vmatpush1.msra.mxu0 %v734
    %1231 = vmatprep.subr.mxu0 %v741
    %1232 = vmatpush1.msra.mxu0 %v740
    %1233 = vmatprep.subr.mxu0 %v747
    %1234 = vmatpush1.msra.mxu0 %v746
    %1235 = vmatprep.subr.mxu0 %v753
    %1236 = vmatpush1.msra.mxu0 %v752
    %1237 = vmatprep.mubr.f32.mxu0 %v173
    %1238 = vmatmul.mubr.f32.gmra.mrb[0].mxu0 %v172
    %v1239 = vpop.f32.mrb[0].mxu0
    %v1240 = vadd.f32 %v1163, %v1239
    %v1241 = vpop.f32.mrb[0].mxu0
    %v1242 = vadd.f32 %v1165, %v1241
    %1243 = vmatprep.mubr.f32.mxu0 %v179
    %1244 = vmatmul.mubr.f32.gmra.mrb[0].mxu0 %v178
    %v1245 = vpop.f32.mrb[0].mxu0
    %v1246 = vadd.f32 %v1169, %v1245
    %v1247 = vpop.f32.mrb[0].mxu0
    %v1248 = vadd.f32 %v1171, %v1247
    %1249 = vdwg.mxu0
    %1250 = vmatprep.subr.mxu0 %v185
    %1251 = vmatpush1.msra.mxu0 %v184
    %1252 = vmatprep.subr.mxu0 %v191
    %1253 = vmatpush1.msra.mxu0 %v190
    %1254 = vmatprep.subr.mxu0 %v197
    %1255 = vmatpush1.msra.mxu0 %v196
    %1256 = vmatprep.subr.mxu0 %v203
    %1257 = vmatpush1.msra.mxu0 %v202
    %1258 = vmatprep.subr.mxu0 %v209
    %1259 = vmatpush1.msra.mxu0 %v208
    %1260 = vmatprep.subr.mxu0 %v215
    %1261 = vmatpush1.msra.mxu0 %v214
    %1262 = vmatprep.subr.mxu0 %v221
    %1263 = vmatpush1.msra.mxu0 %v220
    %1264 = vmatprep.subr.mxu0 %v227
    %1265 = vmatpush1.msra.mxu0 %v226
    %1266 = vmatprep.subr.mxu0 %v233
    %1267 = vmatpush1.msra.mxu0 %v232
    %1268 = vmatprep.subr.mxu0 %v239
    %1269 = vmatpush1.msra.mxu0 %v238
    %1270 = vmatprep.subr.mxu0 %v245
    %1271 = vmatpush1.msra.mxu0 %v244
    %1272 = vmatprep.subr.mxu0 %v251
    %1273 = vmatpush1.msra.mxu0 %v250
    %1274 = vmatprep.subr.mxu0 %v257
    %1275 = vmatpush1.msra.mxu0 %v256
    %1276 = vmatprep.subr.mxu0 %v263
    %1277 = vmatpush1.msra.mxu0 %v262
    %1278 = vmatprep.subr.mxu0 %v269
    %1279 = vmatpush1.msra.mxu0 %v268
    %1280 = vmatprep.subr.mxu0 %v275
    %1281 = vmatpush1.msra.mxu0 %v274
    %1282 = vmatprep.subr.mxu0 %v281
    %1283 = vmatpush1.msra.mxu0 %v280
    %1284 = vmatprep.subr.mxu0 %v287
    %1285 = vmatpush1.msra.mxu0 %v286
    %1286 = vmatprep.subr.mxu0 %v293
    %1287 = vmatpush1.msra.mxu0 %v292
    %1288 = vmatprep.subr.mxu0 %v299
    %1289 = vmatpush1.msra.mxu0 %v298
    %1290 = vmatprep.subr.mxu0 %v305
    %1291 = vmatpush1.msra.mxu0 %v304
    %1292 = vmatprep.subr.mxu0 %v311
    %1293 = vmatpush1.msra.mxu0 %v310
    %1294 = vmatprep.subr.mxu0 %v317
    %1295 = vmatpush1.msra.mxu0 %v316
    %1296 = vmatprep.subr.mxu0 %v323
    %1297 = vmatpush1.msra.mxu0 %v322
    %1298 = vmatprep.subr.mxu0 %v329
    %1299 = vmatpush1.msra.mxu0 %v328
    %1300 = vmatprep.subr.mxu0 %v335
    %1301 = vmatpush1.msra.mxu0 %v334
    %1302 = vmatprep.subr.mxu0 %v341
    %1303 = vmatpush1.msra.mxu0 %v340
    %1304 = vmatprep.subr.mxu0 %v347
    %1305 = vmatpush1.msra.mxu0 %v346
    %1306 = vmatprep.subr.mxu0 %v353
    %1307 = vmatpush1.msra.mxu0 %v352
    %1308 = vmatprep.subr.mxu0 %v359
    %1309 = vmatpush1.msra.mxu0 %v358
    %1310 = vmatprep.subr.mxu0 %v365
    %1311 = vmatpush1.msra.mxu0 %v364
    %1312 = vmatprep.subr.mxu0 %v371
    %1313 = vmatpush1.msra.mxu0 %v370
    %1314 = vmatprep.mubr.f32.mxu0 %v169
    %1315 = vmatmul.mubr.f32.gmra.mrb[0].mxu0 %v168
    %v1316 = vpop.f32.mrb[0].mxu0
    %v1317 = vadd.f32 %v777, %v1316
    %v1318 = vpop.f32.mrb[0].mxu0
    %v1319 = vadd.f32 %v781, %v1318
    %1320 = vmatprep.mubr.f32.mxu0 %v175
    %1321 = vmatmul.mubr.f32.gmra.mrb[0].mxu0 %v174
    %v1322 = vpop.f32.mrb[0].mxu0
    %v1323 = vadd.f32 %v777, %v1322
    %v1324 = vpop.f32.mrb[0].mxu0
    %v1325 = vadd.f32 %v781, %v1324
    %1326 = vdwg.mxu0
    %1327 = vmatprep.subr.mxu0 %v377
    %1328 = vmatpush1.msra.mxu0 %v376
    %1329 = vmatprep.subr.mxu0 %v383
    %1330 = vmatpush1.msra.mxu0 %v382
    %1331 = vmatprep.subr.mxu0 %v389
    %1332 = vmatpush1.msra.mxu0 %v388
    %1333 = vmatprep.subr.mxu0 %v395
    %1334 = vmatpush1.msra.mxu0 %v394
    %1335 = vmatprep.subr.mxu0 %v401
    %1336 = vmatpush1.msra.mxu0 %v400
    %1337 = vmatprep.subr.mxu0 %v407
    %1338 = vmatpush1.msra.mxu0 %v406
    %1339 = vmatprep.subr.mxu0 %v413
    %1340 = vmatpush1.msra.mxu0 %v412
    %1341 = vmatprep.subr.mxu0 %v419
    %1342 = vmatpush1.msra.mxu0 %v418
    %1343 = vmatprep.subr.mxu0 %v425
    %1344 = vmatpush1.msra.mxu0 %v424
    %1345 = vmatprep.subr.mxu0 %v431
    %1346 = vmatpush1.msra.mxu0 %v430
    %1347 = vmatprep.subr.mxu0 %v437
    %1348 = vmatpush1.msra.mxu0 %v436
    %1349 = vmatprep.subr.mxu0 %v443
    %1350 = vmatpush1.msra.mxu0 %v442
    %1351 = vmatprep.subr.mxu0 %v449
    %1352 = vmatpush1.msra.mxu0 %v448
    %1353 = vmatprep.subr.mxu0 %v455
    %1354 = vmatpush1.msra.mxu0 %v454
    %1355 = vmatprep.subr.mxu0 %v461
    %1356 = vmatpush1.msra.mxu0 %v460
    %1357 = vmatprep.subr.mxu0 %v467
    %1358 = vmatpush1.msra.mxu0 %v466
    %1359 = vmatprep.subr.mxu0 %v473
    %1360 = vmatpush1.msra.mxu0 %v472
    %1361 = vmatprep.subr.mxu0 %v479
    %1362 = vmatpush1.msra.mxu0 %v478
    %1363 = vmatprep.subr.mxu0 %v485
    %1364 = vmatpush1.msra.mxu0 %v484
    %1365 = vmatprep.subr.mxu0 %v491
    %1366 = vmatpush1.msra.mxu0 %v490
    %1367 = vmatprep.subr.mxu0 %v497
    %1368 = vmatpush1.msra.mxu0 %v496
    %1369 = vmatprep.subr.mxu0 %v503
    %1370 = vmatpush1.msra.mxu0 %v502
    %1371 = vmatprep.subr.mxu0 %v509
    %1372 = vmatpush1.msra.mxu0 %v508
    %1373 = vmatprep.subr.mxu0 %v515
    %1374 = vmatpush1.msra.mxu0 %v514
    %1375 = vmatprep.subr.mxu0 %v521
    %1376 = vmatpush1.msra.mxu0 %v520
    %1377 = vmatprep.subr.mxu0 %v527
    %1378 = vmatpush1.msra.mxu0 %v526
    %1379 = vmatprep.subr.mxu0 %v533
    %1380 = vmatpush1.msra.mxu0 %v532
    %1381 = vmatprep.subr.mxu0 %v539
    %1382 = vmatpush1.msra.mxu0 %v538
    %1383 = vmatprep.subr.mxu0 %v545
    %1384 = vmatpush1.msra.mxu0 %v544
    %1385 = vmatprep.subr.mxu0 %v551
    %1386 = vmatpush1.msra.mxu0 %v550
    %1387 = vmatprep.subr.mxu0 %v557
    %1388 = vmatpush1.msra.mxu0 %v556
    %1389 = vmatprep.subr.mxu0 %v563
    %1390 = vmatpush1.msra.mxu0 %v562
    %1391 = vmatprep.mubr.f32.mxu0 %v171
    %1392 = vmatmul.mubr.f32.gmra.mrb[0].mxu0 %v170
    %v1393 = vpop.f32.mrb[0].mxu0
    %v1394 = vadd.f32 %v1317, %v1393
    %v1395 = vpop.f32.mrb[0].mxu0
    %v1396 = vadd.f32 %v1319, %v1395
    %1397 = vmatprep.mubr.f32.mxu0 %v177
    %1398 = vmatmul.mubr.f32.gmra.mrb[0].mxu0 %v176
    %v1399 = vpop.f32.mrb[0].mxu0
    %v1400 = vadd.f32 %v1323, %v1399
    %v1401 = vpop.f32.mrb[0].mxu0
    %v1402 = vadd.f32 %v1325, %v1401
    %1403 = vdwg.mxu0
    %1404 = vmatprep.subr.mxu0 %v569
    %1405 = vmatpush1.msra.mxu0 %v568
    %1406 = vmatprep.subr.mxu0 %v575
    %1407 = vmatpush1.msra.mxu0 %v574
    %1408 = vmatprep.subr.mxu0 %v581
    %1409 = vmatpush1.msra.mxu0 %v580
    %1410 = vmatprep.subr.mxu0 %v587
    %1411 = vmatpush1.msra.mxu0 %v586
    %1412 = vmatprep.subr.mxu0 %v593
    %1413 = vmatpush1.msra.mxu0 %v592
    %1414 = vmatprep.subr.mxu0 %v599
    %1415 = vmatpush1.msra.mxu0 %v598
    %1416 = vmatprep.subr.mxu0 %v605
    %1417 = vmatpush1.msra.mxu0 %v604
    %1418 = vmatprep.subr.mxu0 %v611
    %1419 = vmatpush1.msra.mxu0 %v610
    %1420 = vmatprep.subr.mxu0 %v617
    %1421 = vmatpush1.msra.mxu0 %v616
    %1422 = vmatprep.subr.mxu0 %v623
    %1423 = vmatpush1.msra.mxu0 %v622
    %1424 = vmatprep.subr.mxu0 %v629
    %1425 = vmatpush1.msra.mxu0 %v628
    %1426 = vmatprep.subr.mxu0 %v635
    %1427 = vmatpush1.msra.mxu0 %v634
    %1428 = vmatprep.subr.mxu0 %v641
    %1429 = vmatpush1.msra.mxu0 %v640
    %1430 = vmatprep.subr.mxu0 %v647
    %1431 = vmatpush1.msra.mxu0 %v646
    %1432 = vmatprep.subr.mxu0 %v653
    %1433 = vmatpush1.msra.mxu0 %v652
    %1434 = vmatprep.subr.mxu0 %v659
    %1435 = vmatpush1.msra.mxu0 %v658
    %1436 = vmatprep.subr.mxu0 %v665
    %1437 = vmatpush1.msra.mxu0 %v664
    %1438 = vmatprep.subr.mxu0 %v671
    %1439 = vmatpush1.msra.mxu0 %v670
    %1440 = vmatprep.subr.mxu0 %v677
    %1441 = vmatpush1.msra.mxu0 %v676
    %1442 = vmatprep.subr.mxu0 %v683
    %1443 = vmatpush1.msra.mxu0 %v682
    %1444 = vmatprep.subr.mxu0 %v689
    %1445 = vmatpush1.msra.mxu0 %v688
    %1446 = vmatprep.subr.mxu0 %v695
    %1447 = vmatpush1.msra.mxu0 %v694
    %1448 = vmatprep.subr.mxu0 %v701
    %1449 = vmatpush1.msra.mxu0 %v700
    %1450 = vmatprep.subr.mxu0 %v707
    %1451 = vmatpush1.msra.mxu0 %v706
    %1452 = vmatprep.subr.mxu0 %v713
    %1453 = vmatpush1.msra.mxu0 %v712
    %1454 = vmatprep.subr.mxu0 %v719
    %1455 = vmatpush1.msra.mxu0 %v718
    %1456 = vmatprep.subr.mxu0 %v725
    %1457 = vmatpush1.msra.mxu0 %v724
    %1458 = vmatprep.subr.mxu0 %v731
    %1459 = vmatpush1.msra.mxu0 %v730
    %1460 = vmatprep.subr.mxu0 %v737
    %1461 = vmatpush1.msra.mxu0 %v736
    %1462 = vmatprep.subr.mxu0 %v743
    %1463 = vmatpush1.msra.mxu0 %v742
    %1464 = vmatprep.subr.mxu0 %v749
    %1465 = vmatpush1.msra.mxu0 %v748
    %1466 = vmatprep.subr.mxu0 %v755
    %1467 = vmatpush1.msra.mxu0 %v754
    %1468 = vmatprep.mubr.f32.mxu0 %v173
    %1469 = vmatmul.mubr.f32.gmra.mrb[0].mxu0 %v172
    %v1470 = vpop.f32.mrb[0].mxu0
    %v1471 = vadd.f32 %v1394, %v1470
    %v1472 = vpop.f32.mrb[0].mxu0
    %v1473 = vadd.f32 %v1396, %v1472
    %1474 = vmatprep.mubr.f32.mxu0 %v179
    %1475 = vmatmul.mubr.f32.gmra.mrb[0].mxu0 %v178
    %v1476 = vpop.f32.mrb[0].mxu0
    %v1477 = vadd.f32 %v1400, %v1476
    %v1478 = vpop.f32.mrb[0].mxu0
    %v1479 = vadd.f32 %v1402, %v1478
    %1480 = vdwg.mxu0
    %v1481 = vtanh.pop %v1009
    %v1482 = vtanh.pop %v1011
    %v1483 = vtanh.pop %v1240
    %v1484 = vtanh.pop %v1242
    %v1485 = vtanh.pop %v1471
    %v1486 = vtanh.pop %v1473
    %v1487 = vtanh.pop %v1015
    %v1488 = vtanh.pop %v1017
    %v1489 = vtanh.pop %v1246
    %v1490 = vtanh.pop %v1248
    %v1491 = vtanh.pop %v1477
    %v1492 = vtanh.pop %v1479
    %v1493 = vld [vmem:[%s3] sm:$0xff]
    %v1494 = vld [vmem:[%s3 + $0x8] sm:$0xff]
    %v1495 = vld [vmem:[%s3 + $0x10] sm:$0xff]
    %v1496 = vld [vmem:[%s3 + $0x18] sm:$0xff]
    %v1497 = vld [vmem:[%s3 + $0x20] sm:$0xff]
    %v1498 = vld [vmem:[%s3 + $0x28] sm:$0xff]
    %v1499 = vld [vmem:[%s3 + $0x30] sm:$0xff]
    %v1500 = vld [vmem:[%s3 + $0x38] sm:$0xff]
    %v1501 = vld [vmem:[%s3 + $0x40] sm:$0xff]
    %v1502 = vld [vmem:[%s3 + $0x48] sm:$0xff]
    %v1503 = vld [vmem:[%s3 + $0x50] sm:$0xff]
    %v1504 = vld [vmem:[%s3 + $0x58] sm:$0xff]
    %v1505 = vld [vmem:[%s3 + $0x60] sm:$0xff]
    %v1506 = vld [vmem:[%s3 + $0x68] sm:$0xff]
    %v1507 = vld [vmem:[%s3 + $0x70] sm:$0xff]
    %v1508 = vld [vmem:[%s3 + $0x78] sm:$0xff]
    %v1509 = vld [vmem:[%s3 + $0x80] sm:$0xff]
    %v1510 = vld [vmem:[%s3 + $0x88] sm:$0xff]
    %v1511 = vld [vmem:[%s3 + $0x90] sm:$0xff]
    %v1512 = vld [vmem:[%s3 + $0x98] sm:$0xff]
    %v1513 = vld [vmem:[%s3 + $0xa0] sm:$0xff]
    %v1514 = vld [vmem:[%s3 + $0xa8] sm:$0xff]
    %v1515 = vld [vmem:[%s3 + $0xb0] sm:$0xff]
    %v1516 = vld [vmem:[%s3 + $0xb8] sm:$0xff]
    %v1517 = vld [vmem:[%s3 + $0xc0] sm:$0xff]
    %v1518 = vld [vmem:[%s3 + $0xc8] sm:$0xff]
    %v1519 = vld [vmem:[%s3 + $0xd0] sm:$0xff]
    %v1520 = vld [vmem:[%s3 + $0xd8] sm:$0xff]
    %v1521 = vld [vmem:[%s3 + $0xe0] sm:$0xff]
    %v1522 = vld [vmem:[%s3 + $0xe8] sm:$0xff]
    %v1523 = vld [vmem:[%s3 + $0xf0] sm:$0xff]
    %v1524 = vld [vmem:[%s3 + $0xf8] sm:$0xff]
    %v1525 = vld [vmem:[%s3 + $0x100] sm:$0xff]
    %v1526 = vld [vmem:[%s3 + $0x108] sm:$0xff]
    %v1527 = vld [vmem:[%s3 + $0x110] sm:$0xff]
    %v1528 = vld [vmem:[%s3 + $0x118] sm:$0xff]
    %v1529 = vld [vmem:[%s3 + $0x120] sm:$0xff]
    %v1530 = vld [vmem:[%s3 + $0x128] sm:$0xff]
    %v1531 = vld [vmem:[%s3 + $0x130] sm:$0xff]
    %v1532 = vld [vmem:[%s3 + $0x138] sm:$0xff]
    %v1533 = vld [vmem:[%s3 + $0x140] sm:$0xff]
    %v1534 = vld [vmem:[%s3 + $0x148] sm:$0xff]
    %v1535 = vld [vmem:[%s3 + $0x150] sm:$0xff]
    %v1536 = vld [vmem:[%s3 + $0x158] sm:$0xff]
    %v1537 = vld [vmem:[%s3 + $0x160] sm:$0xff]
    %v1538 = vld [vmem:[%s3 + $0x168] sm:$0xff]
    %v1539 = vld [vmem:[%s3 + $0x170] sm:$0xff]
    %v1540 = vld [vmem:[%s3 + $0x178] sm:$0xff]
    %v1541 = vld [vmem:[%s3 + $0x180] sm:$0xff]
    %v1542 = vld [vmem:[%s3 + $0x188] sm:$0xff]
    %v1543 = vld [vmem:[%s3 + $0x190] sm:$0xff]
    %v1544 = vld [vmem:[%s3 + $0x198] sm:$0xff]
    %v1545 = vld [vmem:[%s3 + $0x1a0] sm:$0xff]
    %v1546 = vld [vmem:[%s3 + $0x1a8] sm:$0xff]
    %v1547 = vld [vmem:[%s3 + $0x1b0] sm:$0xff]
    %v1548 = vld [vmem:[%s3 + $0x1b8] sm:$0xff]
    %v1549 = vld [vmem:[%s3 + $0x1c0] sm:$0xff]
    %v1550 = vld [vmem:[%s3 + $0x1c8] sm:$0xff]
    %v1551 = vld [vmem:[%s3 + $0x1d0] sm:$0xff]
    %v1552 = vld [vmem:[%s3 + $0x1d8] sm:$0xff]
    %v1553 = vld [vmem:[%s3 + $0x1e0] sm:$0xff]
    %v1554 = vld [vmem:[%s3 + $0x1e8] sm:$0xff]
    %v1555 = vld [vmem:[%s3 + $0x1f0] sm:$0xff]
    %v1556 = vld [vmem:[%s3 + $0x1f8] sm:$0xff]
    %v1557 = vld [vmem:[%s3 + $0x200] sm:$0xff]
    %v1558 = vld [vmem:[%s3 + $0x208] sm:$0xff]
    %v1559 = vld [vmem:[%s3 + $0x210] sm:$0xff]
    %v1560 = vld [vmem:[%s3 + $0x218] sm:$0xff]
    %v1561 = vld [vmem:[%s3 + $0x220] sm:$0xff]
    %v1562 = vld [vmem:[%s3 + $0x228] sm:$0xff]
    %v1563 = vld [vmem:[%s3 + $0x230] sm:$0xff]
    %v1564 = vld [vmem:[%s3 + $0x238] sm:$0xff]
    %v1565 = vld [vmem:[%s3 + $0x240] sm:$0xff]
    %v1566 = vld [vmem:[%s3 + $0x248] sm:$0xff]
    %v1567 = vld [vmem:[%s3 + $0x250] sm:$0xff]
    %v1568 = vld [vmem:[%s3 + $0x258] sm:$0xff]
    %v1569 = vld [vmem:[%s3 + $0x260] sm:$0xff]
    %v1570 = vld [vmem:[%s3 + $0x268] sm:$0xff]
    %v1571 = vld [vmem:[%s3 + $0x270] sm:$0xff]
    %v1572 = vld [vmem:[%s3 + $0x278] sm:$0xff]
    %v1573 = vld [vmem:[%s3 + $0x280] sm:$0xff]
    %v1574 = vld [vmem:[%s3 + $0x288] sm:$0xff]
    %v1575 = vld [vmem:[%s3 + $0x290] sm:$0xff]
    %v1576 = vld [vmem:[%s3 + $0x298] sm:$0xff]
    %v1577 = vld [vmem:[%s3 + $0x2a0] sm:$0xff]
    %v1578 = vld [vmem:[%s3 + $0x2a8] sm:$0xff]
    %v1579 = vld [vmem:[%s3 + $0x2b0] sm:$0xff]
    %v1580 = vld [vmem:[%s3 + $0x2b8] sm:$0xff]
    %v1581 = vld [vmem:[%s3 + $0x2c0] sm:$0xff]
    %v1582 = vld [vmem:[%s3 + $0x2c8] sm:$0xff]
    %v1583 = vld [vmem:[%s3 + $0x2d0] sm:$0xff]
    %v1584 = vld [vmem:[%s3 + $0x2d8] sm:$0xff]
    %v1585 = vld [vmem:[%s3 + $0x2e0] sm:$0xff]
    %v1586 = vld [vmem:[%s3 + $0x2e8] sm:$0xff]
    %v1587 = vld [vmem:[%s3 + $0x2f0] sm:$0xff]
    %v1588 = vld [vmem:[%s3 + $0x2f8] sm:$0xff]
    %v1589 = vld [vmem:[#allocation9] sm:$0x1]
    %v1591 = vlaneseq
    %v1592 = vshrl.u32 %v1591, 7
    %v1593 = vsub.s32 0, %v1592
    %v1594 = vrot.slane %v1589, %v1593
    %1596 = vmatprep.subr.mxu0 0.0
    %1597 = vmatpush1.msra.mxu0 %v1493
    %1598 = vmatprep.subr.mxu0 0.0
    %1599 = vmatpush1.msra.mxu0 %v1494
    %1600 = vmatprep.subr.mxu0 0.0
    %1601 = vmatpush1.msra.mxu0 %v1495
    %1602 = vmatprep.subr.mxu0 0.0
    %1603 = vmatpush1.msra.mxu0 %v1496
    %1604 = vmatprep.subr.mxu0 0.0
    %1605 = vmatpush1.msra.mxu0 %v1497
    %1606 = vmatprep.subr.mxu0 0.0
    %1607 = vmatpush1.msra.mxu0 %v1498
    %1608 = vmatprep.subr.mxu0 0.0
    %1609 = vmatpush1.msra.mxu0 %v1499
    %1610 = vmatprep.subr.mxu0 0.0
    %1611 = vmatpush1.msra.mxu0 %v1500
    %1612 = vmatprep.subr.mxu0 0.0
    %1613 = vmatpush1.msra.mxu0 %v1501
    %1614 = vmatprep.subr.mxu0 0.0
    %1615 = vmatpush1.msra.mxu0 %v1502
    %1616 = vmatprep.subr.mxu0 0.0
    %1617 = vmatpush1.msra.mxu0 %v1503
    %1618 = vmatprep.subr.mxu0 0.0
    %1619 = vmatpush1.msra.mxu0 %v1504
    %1620 = vmatprep.subr.mxu0 0.0
    %1621 = vmatpush1.msra.mxu0 %v1505
    %1622 = vmatprep.subr.mxu0 0.0
    %1623 = vmatpush1.msra.mxu0 %v1506
    %1624 = vmatprep.subr.mxu0 0.0
    %1625 = vmatpush1.msra.mxu0 %v1507
    %1626 = vmatprep.subr.mxu0 0.0
    %1627 = vmatpush1.msra.mxu0 %v1508
    %1628 = vmatprep.subr.mxu0 0.0
    %1629 = vmatpush1.msra.mxu0 %v1509
    %1630 = vmatprep.subr.mxu0 0.0
    %1631 = vmatpush1.msra.mxu0 %v1510
    %1632 = vmatprep.subr.mxu0 0.0
    %1633 = vmatpush1.msra.mxu0 %v1511
    %1634 = vmatprep.subr.mxu0 0.0
    %1635 = vmatpush1.msra.mxu0 %v1512
    %1636 = vmatprep.subr.mxu0 0.0
    %1637 = vmatpush1.msra.mxu0 %v1513
    %1638 = vmatprep.subr.mxu0 0.0
    %1639 = vmatpush1.msra.mxu0 %v1514
    %1640 = vmatprep.subr.mxu0 0.0
    %1641 = vmatpush1.msra.mxu0 %v1515
    %1642 = vmatprep.subr.mxu0 0.0
    %1643 = vmatpush1.msra.mxu0 %v1516
    %1644 = vmatprep.subr.mxu0 0.0
    %1645 = vmatpush1.msra.mxu0 %v1517
    %1646 = vmatprep.subr.mxu0 0.0
    %1647 = vmatpush1.msra.mxu0 %v1518
    %1648 = vmatprep.subr.mxu0 0.0
    %1649 = vmatpush1.msra.mxu0 %v1519
    %1650 = vmatprep.subr.mxu0 0.0
    %1651 = vmatpush1.msra.mxu0 %v1520
    %1652 = vmatprep.subr.mxu0 0.0
    %1653 = vmatpush1.msra.mxu0 %v1521
    %1654 = vmatprep.subr.mxu0 0.0
    %1655 = vmatpush1.msra.mxu0 %v1522
    %1656 = vmatprep.subr.mxu0 0.0
    %1657 = vmatpush1.msra.mxu0 %v1523
    %1658 = vmatprep.subr.mxu0 0.0
    %1659 = vmatpush1.msra.mxu0 %v1524
    %1660 = vmatprep.mubr.f32.mxu0 %v1482
    %1661 = vmatmul.mubr.f32.gmra.mrb[0].mxu0 %v1481
    %v1662 = vpop.f32.mrb[0].mxu0
    %v1663 = vadd.f32 %v1594, %v1662
    %v1664 = vpop.f32.mrb[0].mxu0
    %1665 = vmatprep.mubr.f32.mxu0 %v1488
    %1666 = vmatmul.mubr.f32.gmra.mrb[0].mxu0 %v1487
    %v1667 = vpop.f32.mrb[0].mxu0
    %v1668 = vadd.f32 %v1594, %v1667
    %v1669 = vpop.f32.mrb[0].mxu0
    %1670 = vdwg.mxu0
    %1671 = vmatprep.subr.mxu0 0.0
    %1672 = vmatpush1.msra.mxu0 %v1525
    %1673 = vmatprep.subr.mxu0 0.0
    %1674 = vmatpush1.msra.mxu0 %v1526
    %1675 = vmatprep.subr.mxu0 0.0
    %1676 = vmatpush1.msra.mxu0 %v1527
    %1677 = vmatprep.subr.mxu0 0.0
    %1678 = vmatpush1.msra.mxu0 %v1528
    %1679 = vmatprep.subr.mxu0 0.0
    %1680 = vmatpush1.msra.mxu0 %v1529
    %1681 = vmatprep.subr.mxu0 0.0
    %1682 = vmatpush1.msra.mxu0 %v1530
    %1683 = vmatprep.subr.mxu0 0.0
    %1684 = vmatpush1.msra.mxu0 %v1531
    %1685 = vmatprep.subr.mxu0 0.0
    %1686 = vmatpush1.msra.mxu0 %v1532
    %1687 = vmatprep.subr.mxu0 0.0
    %1688 = vmatpush1.msra.mxu0 %v1533
    %1689 = vmatprep.subr.mxu0 0.0
    %1690 = vmatpush1.msra.mxu0 %v1534
    %1691 = vmatprep.subr.mxu0 0.0
    %1692 = vmatpush1.msra.mxu0 %v1535
    %1693 = vmatprep.subr.mxu0 0.0
    %1694 = vmatpush1.msra.mxu0 %v1536
    %1695 = vmatprep.subr.mxu0 0.0
    %1696 = vmatpush1.msra.mxu0 %v1537
    %1697 = vmatprep.subr.mxu0 0.0
    %1698 = vmatpush1.msra.mxu0 %v1538
    %1699 = vmatprep.subr.mxu0 0.0
    %1700 = vmatpush1.msra.mxu0 %v1539
    %1701 = vmatprep.subr.mxu0 0.0
    %1702 = vmatpush1.msra.mxu0 %v1540
    %1703 = vmatprep.subr.mxu0 0.0
    %1704 = vmatpush1.msra.mxu0 %v1541
    %1705 = vmatprep.subr.mxu0 0.0
    %1706 = vmatpush1.msra.mxu0 %v1542
    %1707 = vmatprep.subr.mxu0 0.0
    %1708 = vmatpush1.msra.mxu0 %v1543
    %1709 = vmatprep.subr.mxu0 0.0
    %1710 = vmatpush1.msra.mxu0 %v1544
    %1711 = vmatprep.subr.mxu0 0.0
    %1712 = vmatpush1.msra.mxu0 %v1545
    %1713 = vmatprep.subr.mxu0 0.0
    %1714 = vmatpush1.msra.mxu0 %v1546
    %1715 = vmatprep.subr.mxu0 0.0
    %1716 = vmatpush1.msra.mxu0 %v1547
    %1717 = vmatprep.subr.mxu0 0.0
    %1718 = vmatpush1.msra.mxu0 %v1548
    %1719 = vmatprep.subr.mxu0 0.0
    %1720 = vmatpush1.msra.mxu0 %v1549
    %1721 = vmatprep.subr.mxu0 0.0
    %1722 = vmatpush1.msra.mxu0 %v1550
    %1723 = vmatprep.subr.mxu0 0.0
    %1724 = vmatpush1.msra.mxu0 %v1551
    %1725 = vmatprep.subr.mxu0 0.0
    %1726 = vmatpush1.msra.mxu0 %v1552
    %1727 = vmatprep.subr.mxu0 0.0
    %1728 = vmatpush1.msra.mxu0 %v1553
    %1729 = vmatprep.subr.mxu0 0.0
    %1730 = vmatpush1.msra.mxu0 %v1554
    %1731 = vmatprep.subr.mxu0 0.0
    %1732 = vmatpush1.msra.mxu0 %v1555
    %1733 = vmatprep.subr.mxu0 0.0
    %1734 = vmatpush1.msra.mxu0 %v1556
    %1735 = vmatprep.mubr.f32.mxu0 %v1484
    %1736 = vmatmul.mubr.f32.gmra.mrb[0].mxu0 %v1483
    %v1737 = vpop.f32.mrb[0].mxu0
    %v1738 = vadd.f32 %v1663, %v1737
    %v1739 = vpop.f32.mrb[0].mxu0
    %1740 = vmatprep.mubr.f32.mxu0 %v1490
    %1741 = vmatmul.mubr.f32.gmra.mrb[0].mxu0 %v1489
    %v1742 = vpop.f32.mrb[0].mxu0
    %v1743 = vadd.f32 %v1668, %v1742
    %v1744 = vpop.f32.mrb[0].mxu0
    %1745 = vdwg.mxu0
    %1746 = vmatprep.subr.mxu0 0.0
    %1747 = vmatpush1.msra.mxu0 %v1557
    %1748 = vmatprep.subr.mxu0 0.0
    %1749 = vmatpush1.msra.mxu0 %v1558
    %1750 = vmatprep.subr.mxu0 0.0
    %1751 = vmatpush1.msra.mxu0 %v1559
    %1752 = vmatprep.subr.mxu0 0.0
    %1753 = vmatpush1.msra.mxu0 %v1560
    %1754 = vmatprep.subr.mxu0 0.0
    %1755 = vmatpush1.msra.mxu0 %v1561
    %1756 = vmatprep.subr.mxu0 0.0
    %1757 = vmatpush1.msra.mxu0 %v1562
    %1758 = vmatprep.subr.mxu0 0.0
    %1759 = vmatpush1.msra.mxu0 %v1563
    %1760 = vmatprep.subr.mxu0 0.0
    %1761 = vmatpush1.msra.mxu0 %v1564
    %1762 = vmatprep.subr.mxu0 0.0
    %1763 = vmatpush1.msra.mxu0 %v1565
    %1764 = vmatprep.subr.mxu0 0.0
    %1765 = vmatpush1.msra.mxu0 %v1566
    %1766 = vmatprep.subr.mxu0 0.0
    %1767 = vmatpush1.msra.mxu0 %v1567
    %1768 = vmatprep.subr.mxu0 0.0
    %1769 = vmatpush1.msra.mxu0 %v1568
    %1770 = vmatprep.subr.mxu0 0.0
    %1771 = vmatpush1.msra.mxu0 %v1569
    %1772 = vmatprep.subr.mxu0 0.0
    %1773 = vmatpush1.msra.mxu0 %v1570
    %1774 = vmatprep.subr.mxu0 0.0
    %1775 = vmatpush1.msra.mxu0 %v1571
    %1776 = vmatprep.subr.mxu0 0.0
    %1777 = vmatpush1.msra.mxu0 %v1572
    %1778 = vmatprep.subr.mxu0 0.0
    %1779 = vmatpush1.msra.mxu0 %v1573
    %1780 = vmatprep.subr.mxu0 0.0
    %1781 = vmatpush1.msra.mxu0 %v1574
    %1782 = vmatprep.subr.mxu0 0.0
    %1783 = vmatpush1.msra.mxu0 %v1575
    %1784 = vmatprep.subr.mxu0 0.0
    %1785 = vmatpush1.msra.mxu0 %v1576
    %1786 = vmatprep.subr.mxu0 0.0
    %1787 = vmatpush1.msra.mxu0 %v1577
    %1788 = vmatprep.subr.mxu0 0.0
    %1789 = vmatpush1.msra.mxu0 %v1578
    %1790 = vmatprep.subr.mxu0 0.0
    %1791 = vmatpush1.msra.mxu0 %v1579
    %1792 = vmatprep.subr.mxu0 0.0
    %1793 = vmatpush1.msra.mxu0 %v1580
    %1794 = vmatprep.subr.mxu0 0.0
    %1795 = vmatpush1.msra.mxu0 %v1581
    %1796 = vmatprep.subr.mxu0 0.0
    %1797 = vmatpush1.msra.mxu0 %v1582
    %1798 = vmatprep.subr.mxu0 0.0
    %1799 = vmatpush1.msra.mxu0 %v1583
    %1800 = vmatprep.subr.mxu0 0.0
    %1801 = vmatpush1.msra.mxu0 %v1584
    %1802 = vmatprep.subr.mxu0 0.0
    %1803 = vmatpush1.msra.mxu0 %v1585
    %1804 = vmatprep.subr.mxu0 0.0
    %1805 = vmatpush1.msra.mxu0 %v1586
    %1806 = vmatprep.subr.mxu0 0.0
    %1807 = vmatpush1.msra.mxu0 %v1587
    %1808 = vmatprep.subr.mxu0 0.0
    %1809 = vmatpush1.msra.mxu0 %v1588
    %1810 = vmatprep.mubr.f32.mxu0 %v1486
    %1811 = vmatmul.mubr.f32.gmra.mrb[0].mxu0 %v1485
    %v1812 = vpop.f32.mrb[0].mxu0
    %v1813 = vadd.f32 %v1738, %v1812
    %v1814 = vpop.f32.mrb[0].mxu0
    %1815 = vmatprep.mubr.f32.mxu0 %v1492
    %1816 = vmatmul.mubr.f32.gmra.mrb[0].mxu0 %v1491
    %v1817 = vpop.f32.mrb[0].mxu0
    %v1818 = vadd.f32 %v1743, %v1817
    %v1819 = vpop.f32.mrb[0].mxu0
    %1820 = vdwg.mxu0
    %v1821 = vmax.f32 %v1813, 0.0
    %v1822 = vmax.f32 %v1818, 0.0
    %v1823 = vlaneseq
    %v1824 = vand.u32 %v1823, 127
    %v1825 = vld [vmem:[%s5] sm:$0xff]
    %v1826 = vld [vmem:[%s5 + $0x8] sm:$0xff]
    %1828 = vset.pattern.permute.xlu0 0
    %1829 = vperm.xlu0 %1828, %v1825
    %v1830 = vpop.permute.xlu0 %1829
    %1833 = vset.pattern.permute.xlu0 0
    %1834 = vperm.xlu0 %1833, %v1826
    %v1835 = vpop.permute.xlu0 %1834
    %v1837 = vmul.f32 %v1821, %v1830
    %v1838 = vmul.f32 %v1822, %v1835
    %vm1839 = vcmp.eq.s32.totalorder %v1824, 0
    %v1840 = vld [vmem:[%s6] sm:$0xff]
    %v1841 = vld [vmem:[%s6 + $0x8] sm:$0xff]
    %1843 = vset.pattern.permute.xlu0 0
    %1844 = vperm.xlu0 %1843, %v1840
    %v1845 = vpop.permute.xlu0 %1844
    %1848 = vset.pattern.permute.xlu0 0
    %1849 = vperm.xlu0 %1848, %v1841
    %v1850 = vpop.permute.xlu0 %1849
    %v1852 = vsel %vm1839, %v1845, 0.0
    %v1853 = vsel %vm1839, %v1850, 0.0
    %v1854 = vadd.f32 %v1837, %v1852
    %v1855 = vadd.f32 %v1838, %v1853
    %v1856 = vld [vmem:[#allocation11] sm:$0xff]
    %v1857 = vld [vmem:[#allocation11 + $0x8] sm:$0xff]
    %v1858 = vld [vmem:[#allocation11 + $0x10] sm:$0xff]
    %v1859 = vld [vmem:[#allocation11 + $0x18] sm:$0xff]
    %v1860 = vld [vmem:[#allocation14] sm:$0x1]
    %v1862 = vlaneseq
    %v1863 = vshrl.u32 %v1862, 7
    %v1864 = vsub.s32 0, %v1863
    %v1865 = vrot.slane %v1860, %v1864
    %vm1867 = vcmask 261120
    %v1869 = vsel %vm1867, %v1854, 0
    %v1872 = vsel %vm1867, %v1855, 0
    %1874 = vmatprep.subr.mxu0 0.0
    %1875 = vmatpush1.msra.mxu0 %v1856
    %1876 = vmatprep.subr.mxu0 0.0
    %1877 = vmatpush1.msra.mxu0 %v1857
    %1878 = vmatprep.subr.mxu0 0.0
    %1879 = vmatpush1.msra.mxu0 %v1858
    %1880 = vmatprep.subr.mxu0 0.0
    %1881 = vmatpush1.msra.mxu0 %v1859
    %1882 = vmatprep.subr.mxu0 0.0
    %1883 = vmatpush1.msra.mxu0 0.0
    %1884 = vmatprep.subr.mxu0 0.0
    %1885 = vmatpush1.msra.mxu0 0.0
    %1886 = vmatprep.subr.mxu0 0.0
    %1887 = vmatpush1.msra.mxu0 0.0
    %1888 = vmatprep.subr.mxu0 0.0
    %1889 = vmatpush1.msra.mxu0 0.0
    %1890 = vmatprep.subr.mxu0 0.0
    %1891 = vmatpush1.msra.mxu0 0.0
    %1892 = vmatprep.subr.mxu0 0.0
    %1893 = vmatpush1.msra.mxu0 0.0
    %1894 = vmatprep.subr.mxu0 0.0
    %1895 = vmatpush1.msra.mxu0 0.0
    %1896 = vmatprep.subr.mxu0 0.0
    %1897 = vmatpush1.msra.mxu0 0.0
    %1898 = vmatprep.subr.mxu0 0.0
    %1899 = vmatpush1.msra.mxu0 0.0
    %1900 = vmatprep.subr.mxu0 0.0
    %1901 = vmatpush1.msra.mxu0 0.0
    %1902 = vmatprep.subr.mxu0 0.0
    %1903 = vmatpush1.msra.mxu0 0.0
    %1904 = vmatprep.subr.mxu0 0.0
    %1905 = vmatpush1.msra.mxu0 0.0
    %1906 = vmatprep.subr.mxu0 0.0
    %1907 = vmatpush1.msra.mxu0 0.0
    %1908 = vmatprep.subr.mxu0 0.0
    %1909 = vmatpush1.msra.mxu0 0.0
    %1910 = vmatprep.subr.mxu0 0.0
    %1911 = vmatpush1.msra.mxu0 0.0
    %1912 = vmatprep.subr.mxu0 0.0
    %1913 = vmatpush1.msra.mxu0 0.0
    %1914 = vmatprep.subr.mxu0 0.0
    %1915 = vmatpush1.msra.mxu0 0.0
    %1916 = vmatprep.subr.mxu0 0.0
    %1917 = vmatpush1.msra.mxu0 0.0
    %1918 = vmatprep.subr.mxu0 0.0
    %1919 = vmatpush1.msra.mxu0 0.0
    %1920 = vmatprep.subr.mxu0 0.0
    %1921 = vmatpush1.msra.mxu0 0.0
    %1922 = vmatprep.subr.mxu0 0.0
    %1923 = vmatpush1.msra.mxu0 0.0
    %1924 = vmatprep.subr.mxu0 0.0
    %1925 = vmatpush1.msra.mxu0 0.0
    %1926 = vmatprep.subr.mxu0 0.0
    %1927 = vmatpush1.msra.mxu0 0.0
    %1928 = vmatprep.subr.mxu0 0.0
    %1929 = vmatpush1.msra.mxu0 0.0
    %1930 = vmatprep.subr.mxu0 0.0
    %1931 = vmatpush1.msra.mxu0 0.0
    %1932 = vmatprep.subr.mxu0 0.0
    %1933 = vmatpush1.msra.mxu0 0.0
    %1934 = vmatprep.subr.mxu0 0.0
    %1935 = vmatpush1.msra.mxu0 0.0
    %1936 = vmatprep.subr.mxu0 0.0
    %1937 = vmatpush1.msra.mxu0 0.0
    %1938 = vmatprep.mubr.f32.mxu0 0.0
    %1939 = vmatmul.mubr.f32.gmra.mrb[0].mxu0 %v1869
    %v1940 = vpop.f32.mrb[0].mxu0
    %v1941 = vadd.f32 %v1865, %v1940
    %v1942 = vpop.f32.mrb[0].mxu0
    %1943 = vmatprep.mubr.f32.mxu0 0.0
    %1944 = vmatmul.mubr.f32.gmra.mrb[0].mxu0 %v1872
    %v1945 = vpop.f32.mrb[0].mxu0
    %v1946 = vadd.f32 %v1865, %v1945
    %v1947 = vpop.f32.mrb[0].mxu0
    %1948 = vdwg.mxu0
    %v1949 = vld [vmem:[#allocation12] sm:$0xff]
    %v1950 = vld [vmem:[#allocation12 + $0x8] sm:$0xff]
    %v1951 = vld [vmem:[#allocation12 + $0x10] sm:$0xff]
    %v1952 = vld [vmem:[#allocation12 + $0x18] sm:$0xff]
    %v1953 = vld [vmem:[#allocation15] sm:$0xff]
    %v1954 = vld [vmem:[#allocation15 + $0x8] sm:$0xff]
    %v1955 = vld [vmem:[#allocation15 + $0x10] sm:$0xff]
    %v1956 = vld [vmem:[#allocation15 + $0x18] sm:$0xff]
    %v1957 = vld [vmem:[#allocation15 + $0x20] sm:$0xff]
    %v1958 = vld [vmem:[#allocation15 + $0x28] sm:$0xff]
    %v1959 = vld [vmem:[#allocation15 + $0x30] sm:$0xff]
    %v1960 = vld [vmem:[#allocation15 + $0x38] sm:$0xff]
    %v1961 = vld [vmem:[#allocation17] sm:$0x1]
    %v1963 = vsel %vm1867, 0.0, 0
    %1965 = vmatprep.subr.mxu0 0.0
    %1966 = vmatpush1.msra.mxu0 %v1949
    %1967 = vmatprep.subr.mxu0 0.0
    %1968 = vmatpush1.msra.mxu0 %v1950
    %1969 = vmatprep.subr.mxu0 0.0
    %1970 = vmatpush1.msra.mxu0 %v1951
    %1971 = vmatprep.subr.mxu0 0.0
    %1972 = vmatpush1.msra.mxu0 %v1952
    %1973 = vmatprep.subr.mxu0 0.0
    %1974 = vmatpush1.msra.mxu0 0.0
    %1975 = vmatprep.subr.mxu0 0.0
    %1976 = vmatpush1.msra.mxu0 0.0
    %1977 = vmatprep.subr.mxu0 0.0
    %1978 = vmatpush1.msra.mxu0 0.0
    %1979 = vmatprep.subr.mxu0 0.0
    %1980 = vmatpush1.msra.mxu0 0.0
    %1981 = vmatprep.subr.mxu0 0.0
    %1982 = vmatpush1.msra.mxu0 0.0
    %1983 = vmatprep.subr.mxu0 0.0
    %1984 = vmatpush1.msra.mxu0 0.0
    %1985 = vmatprep.subr.mxu0 0.0
    %1986 = vmatpush1.msra.mxu0 0.0
    %1987 = vmatprep.subr.mxu0 0.0
    %1988 = vmatpush1.msra.mxu0 0.0
    %1989 = vmatprep.subr.mxu0 0.0
    %1990 = vmatpush1.msra.mxu0 0.0
    %1991 = vmatprep.subr.mxu0 0.0
    %1992 = vmatpush1.msra.mxu0 0.0
    %1993 = vmatprep.subr.mxu0 0.0
    %1994 = vmatpush1.msra.mxu0 0.0
    %1995 = vmatprep.subr.mxu0 0.0
    %1996 = vmatpush1.msra.mxu0 0.0
    %1997 = vmatprep.subr.mxu0 0.0
    %1998 = vmatpush1.msra.mxu0 0.0
    %1999 = vmatprep.subr.mxu0 0.0
    %2000 = vmatpush1.msra.mxu0 0.0
    %2001 = vmatprep.subr.mxu0 0.0
    %2002 = vmatpush1.msra.mxu0 0.0
    %2003 = vmatprep.subr.mxu0 0.0
    %2004 = vmatpush1.msra.mxu0 0.0
    %2005 = vmatprep.subr.mxu0 0.0
    %2006 = vmatpush1.msra.mxu0 0.0
    %2007 = vmatprep.subr.mxu0 0.0
    %2008 = vmatpush1.msra.mxu0 0.0
    %2009 = vmatprep.subr.mxu0 0.0
    %2010 = vmatpush1.msra.mxu0 0.0
    %2011 = vmatprep.subr.mxu0 0.0
    %2012 = vmatpush1.msra.mxu0 0.0
    %2013 = vmatprep.subr.mxu0 0.0
    %2014 = vmatpush1.msra.mxu0 0.0
    %2015 = vmatprep.subr.mxu0 0.0
    %2016 = vmatpush1.msra.mxu0 0.0
    %2017 = vmatprep.subr.mxu0 0.0
    %2018 = vmatpush1.msra.mxu0 0.0
    %2019 = vmatprep.subr.mxu0 0.0
    %2020 = vmatpush1.msra.mxu0 0.0
    %2021 = vmatprep.subr.mxu0 0.0
    %2022 = vmatpush1.msra.mxu0 0.0
    %2023 = vmatprep.subr.mxu0 0.0
    %2024 = vmatpush1.msra.mxu0 0.0
    %2025 = vmatprep.subr.mxu0 0.0
    %2026 = vmatpush1.msra.mxu0 0.0
    %2027 = vmatprep.subr.mxu0 0.0
    %2028 = vmatpush1.msra.mxu0 0.0
    %2029 = vmatprep.mubr.f32.mxu0 0.0
    %2030 = vmatmul.mubr.f32.gmra.mrb[0].mxu0 %v1963
    %v2031 = vpop.f32.mrb[0].mxu0
    %v2032 = vadd.f32 0.0, %v2031
    %v2033 = vpop.f32.mrb[0].mxu0
    %2034 = vdwg.mxu0
    %v2035 = vadd.f32 %v1941, %v2032
    %v2036 = vxor.u32 %v2035, 2147483648
    %v2037 = vmul.f32 %v2036, 1.442695
    %v2038 = vpow.pop %v2037
    %v2039 = vadd.f32 %v2038, 1.0
    %v2040 = vrcp.pop %v2039
    %v2041 = vmul.f32 1.0, %v2040
    %v2042 = vtanh.pop %v2035
    %v2043 = vmul.f32 %v2041, 0.0
    %2045 = vrot.lane.b32.xlu0 %v2042, 64
    %v2046 = vpop.permute.xlu0 %2045
    %v2048 = vmul.f32 %v2041, %v2046
    %2050 = vrot.lane.b32.xlu0 %v2048, 32
    %v2051 = vpop.permute.xlu0 %2050
    %v2053 = vadd.f32 %v2043, %v2051
    %v2054 = vtanh.pop %v2053
    %2056 = vrot.lane.b32.xlu0 %v2054, 64
    %v2057 = vpop.permute.xlu0 %2056
    %v2059 = vmul.f32 %v2041, %v2057
    %2061 = vrot.lane.b32.xlu0 %v2059, 32
    %v2062 = vpop.permute.xlu0 %2061
    %v2064 = vsel %vm1867, %v2062, 0.0
    %v2066 = vlaneseq
    %v2067 = vshrl.u32 %v2066, 7
    %v2068 = vsub.s32 0, %v2067
    %v2069 = vrot.slane %v1961, %v2068
    %vm2071 = vcmask 523264
    %v2073 = vsel %vm2071, %v2064, 0
    %2075 = vmatprep.subr.mxu0 0.0
    %2076 = vmatpush1.msra.mxu0 %v1953
    %2077 = vmatprep.subr.mxu0 0.0
    %2078 = vmatpush1.msra.mxu0 %v1954
    %2079 = vmatprep.subr.mxu0 0.0
    %2080 = vmatpush1.msra.mxu0 %v1955
    %2081 = vmatprep.subr.mxu0 0.0
    %2082 = vmatpush1.msra.mxu0 %v1956
    %2083 = vmatprep.subr.mxu0 0.0
    %2084 = vmatpush1.msra.mxu0 %v1957
    %2085 = vmatprep.subr.mxu0 0.0
    %2086 = vmatpush1.msra.mxu0 %v1958
    %2087 = vmatprep.subr.mxu0 0.0
    %2088 = vmatpush1.msra.mxu0 %v1959
    %2089 = vmatprep.subr.mxu0 0.0
    %2090 = vmatpush1.msra.mxu0 %v1960
    %2091 = vmatprep.subr.mxu0 0.0
    %2092 = vmatpush1.msra.mxu0 0.0
    %2093 = vmatprep.subr.mxu0 0.0
    %2094 = vmatpush1.msra.mxu0 0.0
    %2095 = vmatprep.subr.mxu0 0.0
    %2096 = vmatpush1.msra.mxu0 0.0
    %2097 = vmatprep.subr.mxu0 0.0
    %2098 = vmatpush1.msra.mxu0 0.0
    %2099 = vmatprep.subr.mxu0 0.0
    %2100 = vmatpush1.msra.mxu0 0.0
    %2101 = vmatprep.subr.mxu0 0.0
    %2102 = vmatpush1.msra.mxu0 0.0
    %2103 = vmatprep.subr.mxu0 0.0
    %2104 = vmatpush1.msra.mxu0 0.0
    %2105 = vmatprep.subr.mxu0 0.0
    %2106 = vmatpush1.msra.mxu0 0.0
    %2107 = vmatprep.subr.mxu0 0.0
    %2108 = vmatpush1.msra.mxu0 0.0
    %2109 = vmatprep.subr.mxu0 0.0
    %2110 = vmatpush1.msra.mxu0 0.0
    %2111 = vmatprep.subr.mxu0 0.0
    %2112 = vmatpush1.msra.mxu0 0.0
    %2113 = vmatprep.subr.mxu0 0.0
    %2114 = vmatpush1.msra.mxu0 0.0
    %2115 = vmatprep.subr.mxu0 0.0
    %2116 = vmatpush1.msra.mxu0 0.0
    %2117 = vmatprep.subr.mxu0 0.0
    %2118 = vmatpush1.msra.mxu0 0.0
    %2119 = vmatprep.subr.mxu0 0.0
    %2120 = vmatpush1.msra.mxu0 0.0
    %2121 = vmatprep.subr.mxu0 0.0
    %2122 = vmatpush1.msra.mxu0 0.0
    %2123 = vmatprep.subr.mxu0 0.0
    %2124 = vmatpush1.msra.mxu0 0.0
    %2125 = vmatprep.subr.mxu0 0.0
    %2126 = vmatpush1.msra.mxu0 0.0
    %2127 = vmatprep.subr.mxu0 0.0
    %2128 = vmatpush1.msra.mxu0 0.0
    %2129 = vmatprep.subr.mxu0 0.0
    %2130 = vmatpush1.msra.mxu0 0.0
    %2131 = vmatprep.subr.mxu0 0.0
    %2132 = vmatpush1.msra.mxu0 0.0
    %2133 = vmatprep.subr.mxu0 0.0
    %2134 = vmatpush1.msra.mxu0 0.0
    %2135 = vmatprep.subr.mxu0 0.0
    %2136 = vmatpush1.msra.mxu0 0.0
    %2137 = vmatprep.subr.mxu0 0.0
    %2138 = vmatpush1.msra.mxu0 0.0
    %2139 = vmatprep.mubr.f32.mxu0 0.0
    %2140 = vmatmul.mubr.f32.gmra.mrb[0].mxu0 %v2073
    %v2141 = vpop.f32.mrb[0].mxu0
    %v2142 = vadd.f32 %v2069, %v2141
    %v2143 = vpop.f32.mrb[0].mxu0
    %2144 = vdwg.mxu0
    %v2145 = vxor.u32 %v2142, 2147483648
    %v2146 = vmul.f32 %v2145, 1.442695
    %v2147 = vpow.pop %v2146
    %v2148 = vadd.f32 %v2147, 1.0
    %v2149 = vrcp.pop %v2148
    %v2150 = vmul.f32 1.0, %v2149
    %v2151 = vtanh.pop %v2142
    %v2152 = vmul.f32 %v2150, 0.0
    %2154 = vrot.lane.b32.xlu0 %v2151, 64
    %v2155 = vpop.permute.xlu0 %2154
    %v2157 = vmul.f32 %v2150, %v2155
    %2159 = vrot.lane.b32.xlu0 %v2157, 32
    %v2160 = vpop.permute.xlu0 %2159
    %v2162 = vadd.f32 %v2152, %v2160
    %v2163 = vtanh.pop %v2162
    %2165 = vrot.lane.b32.xlu0 %v2163, 64
    %v2166 = vpop.permute.xlu0 %2165
    %v2168 = vmul.f32 %v2150, %v2166
    %v2169 = vsel %vm1867, %v2062, 0
    %2171 = vmatprep.subr.mxu0 0.0
    %2172 = vmatpush1.msra.mxu0 %v1949
    %2173 = vmatprep.subr.mxu0 0.0
    %2174 = vmatpush1.msra.mxu0 %v1950
    %2175 = vmatprep.subr.mxu0 0.0
    %2176 = vmatpush1.msra.mxu0 %v1951
    %2177 = vmatprep.subr.mxu0 0.0
    %2178 = vmatpush1.msra.mxu0 %v1952
    %2179 = vmatprep.subr.mxu0 0.0
    %2180 = vmatpush1.msra.mxu0 0.0
    %2181 = vmatprep.subr.mxu0 0.0
    %2182 = vmatpush1.msra.mxu0 0.0
    %2183 = vmatprep.subr.mxu0 0.0
    %2184 = vmatpush1.msra.mxu0 0.0
    %2185 = vmatprep.subr.mxu0 0.0
    %2186 = vmatpush1.msra.mxu0 0.0
    %2187 = vmatprep.subr.mxu0 0.0
    %2188 = vmatpush1.msra.mxu0 0.0
    %2189 = vmatprep.subr.mxu0 0.0
    %2190 = vmatpush1.msra.mxu0 0.0
    %2191 = vmatprep.subr.mxu0 0.0
    %2192 = vmatpush1.msra.mxu0 0.0
    %2193 = vmatprep.subr.mxu0 0.0
    %2194 = vmatpush1.msra.mxu0 0.0
    %2195 = vmatprep.subr.mxu0 0.0
    %2196 = vmatpush1.msra.mxu0 0.0
    %2197 = vmatprep.subr.mxu0 0.0
    %2198 = vmatpush1.msra.mxu0 0.0
    %2199 = vmatprep.subr.mxu0 0.0
    %2200 = vmatpush1.msra.mxu0 0.0
    %2201 = vmatprep.subr.mxu0 0.0
    %2202 = vmatpush1.msra.mxu0 0.0
    %2203 = vmatprep.subr.mxu0 0.0
    %2204 = vmatpush1.msra.mxu0 0.0
    %2205 = vmatprep.subr.mxu0 0.0
    %2206 = vmatpush1.msra.mxu0 0.0
    %2207 = vmatprep.subr.mxu0 0.0
    %2208 = vmatpush1.msra.mxu0 0.0
    %2209 = vmatprep.subr.mxu0 0.0
    %2210 = vmatpush1.msra.mxu0 0.0
    %2211 = vmatprep.subr.mxu0 0.0
    %2212 = vmatpush1.msra.mxu0 0.0
    %2213 = vmatprep.subr.mxu0 0.0
    %2214 = vmatpush1.msra.mxu0 0.0
    %2215 = vmatprep.subr.mxu0 0.0
    %2216 = vmatpush1.msra.mxu0 0.0
    %2217 = vmatprep.subr.mxu0 0.0
    %2218 = vmatpush1.msra.mxu0 0.0
    %2219 = vmatprep.subr.mxu0 0.0
    %2220 = vmatpush1.msra.mxu0 0.0
    %2221 = vmatprep.subr.mxu0 0.0
    %2222 = vmatpush1.msra.mxu0 0.0
    %2223 = vmatprep.subr.mxu0 0.0
    %2224 = vmatpush1.msra.mxu0 0.0
    %2225 = vmatprep.subr.mxu0 0.0
    %2226 = vmatpush1.msra.mxu0 0.0
    %2227 = vmatprep.subr.mxu0 0.0
    %2228 = vmatpush1.msra.mxu0 0.0
    %2229 = vmatprep.subr.mxu0 0.0
    %2230 = vmatpush1.msra.mxu0 0.0
    %2231 = vmatprep.subr.mxu0 0.0
    %2232 = vmatpush1.msra.mxu0 0.0
    %2233 = vmatprep.subr.mxu0 0.0
    %2234 = vmatpush1.msra.mxu0 0.0
    %2235 = vmatprep.mubr.f32.mxu0 0.0
    %2236 = vmatmul.mubr.f32.gmra.mrb[0].mxu0 %v2169
    %v2237 = vpop.f32.mrb[0].mxu0
    %v2238 = vadd.f32 0.0, %v2237
    %v2239 = vpop.f32.mrb[0].mxu0
    %2240 = vdwg.mxu0
    %v2242 = vrot.slane %v2238, 6
    %v2244 = vadd.f32 %v1941, %v2242
    %v2245 = vxor.u32 %v2244, 2147483648
    %v2246 = vmul.f32 %v2245, 1.442695
    %v2247 = vpow.pop %v2246
    %v2248 = vadd.f32 %v2247, 1.0
    %v2249 = vrcp.pop %v2248
    %v2250 = vmul.f32 1.0, %v2249
    %v2251 = vtanh.pop %v2244
    %v2253 = vrot.slane %v2053, 6
    %v2255 = vmul.f32 %v2250, %v2253
    %2257 = vrot.lane.b32.xlu0 %v2251, 64
    %v2258 = vpop.permute.xlu0 %2257
    %v2260 = vmul.f32 %v2250, %v2258
    %2262 = vrot.lane.b32.xlu0 %v2260, 32
    %v2263 = vpop.permute.xlu0 %2262
    %v2265 = vadd.f32 %v2255, %v2263
    %v2266 = vtanh.pop %v2265
    %2268 = vrot.lane.b32.xlu0 %v2266, 64
    %v2269 = vpop.permute.xlu0 %2268
    %v2271 = vmul.f32 %v2250, %v2269
    %2273 = vrot.lane.b32.xlu0 %v2271, 32
    %v2274 = vpop.permute.xlu0 %2273
    %v2277 = vrot.slane %v2168, 6
    %2278 = vrot.lane.b32.xlu0 %v2277, 64
    %v2279 = vpop.permute.xlu0 %2278
    %v2281 = vsel %vm1867, %v2274, %v2279
    %v2283 = vrot.slane %v2281, 2
    %v2284 = vsel %vm2071, %v2283, 0
    %2286 = vmatprep.subr.mxu0 0.0
    %2287 = vmatpush1.msra.mxu0 %v1953
    %2288 = vmatprep.subr.mxu0 0.0
    %2289 = vmatpush1.msra.mxu0 %v1954
    %2290 = vmatprep.subr.mxu0 0.0
    %2291 = vmatpush1.msra.mxu0 %v1955
    %2292 = vmatprep.subr.mxu0 0.0
    %2293 = vmatpush1.msra.mxu0 %v1956
    %2294 = vmatprep.subr.mxu0 0.0
    %2295 = vmatpush1.msra.mxu0 %v1957
    %2296 = vmatprep.subr.mxu0 0.0
    %2297 = vmatpush1.msra.mxu0 %v1958
    %2298 = vmatprep.subr.mxu0 0.0
    %2299 = vmatpush1.msra.mxu0 %v1959
    %2300 = vmatprep.subr.mxu0 0.0
    %2301 = vmatpush1.msra.mxu0 %v1960
    %2302 = vmatprep.subr.mxu0 0.0
    %2303 = vmatpush1.msra.mxu0 0.0
    %2304 = vmatprep.subr.mxu0 0.0
    %2305 = vmatpush1.msra.mxu0 0.0
    %2306 = vmatprep.subr.mxu0 0.0
    %2307 = vmatpush1.msra.mxu0 0.0
    %2308 = vmatprep.subr.mxu0 0.0
    %2309 = vmatpush1.msra.mxu0 0.0
    %2310 = vmatprep.subr.mxu0 0.0
    %2311 = vmatpush1.msra.mxu0 0.0
    %2312 = vmatprep.subr.mxu0 0.0
    %2313 = vmatpush1.msra.mxu0 0.0
    %2314 = vmatprep.subr.mxu0 0.0
    %2315 = vmatpush1.msra.mxu0 0.0
    %2316 = vmatprep.subr.mxu0 0.0
    %2317 = vmatpush1.msra.mxu0 0.0
    %2318 = vmatprep.subr.mxu0 0.0
    %2319 = vmatpush1.msra.mxu0 0.0
    %2320 = vmatprep.subr.mxu0 0.0
    %2321 = vmatpush1.msra.mxu0 0.0
    %2322 = vmatprep.subr.mxu0 0.0
    %2323 = vmatpush1.msra.mxu0 0.0
    %2324 = vmatprep.subr.mxu0 0.0
    %2325 = vmatpush1.msra.mxu0 0.0
    %2326 = vmatprep.subr.mxu0 0.0
    %2327 = vmatpush1.msra.mxu0 0.0
    %2328 = vmatprep.subr.mxu0 0.0
    %2329 = vmatpush1.msra.mxu0 0.0
    %2330 = vmatprep.subr.mxu0 0.0
    %2331 = vmatpush1.msra.mxu0 0.0
    %2332 = vmatprep.subr.mxu0 0.0
    %2333 = vmatpush1.msra.mxu0 0.0
    %2334 = vmatprep.subr.mxu0 0.0
    %2335 = vmatpush1.msra.mxu0 0.0
    %2336 = vmatprep.subr.mxu0 0.0
    %2337 = vmatpush1.msra.mxu0 0.0
    %2338 = vmatprep.subr.mxu0 0.0
    %2339 = vmatpush1.msra.mxu0 0.0
    %2340 = vmatprep.subr.mxu0 0.0
    %2341 = vmatpush1.msra.mxu0 0.0
    %2342 = vmatprep.subr.mxu0 0.0
    %2343 = vmatpush1.msra.mxu0 0.0
    %2344 = vmatprep.subr.mxu0 0.0
    %2345 = vmatpush1.msra.mxu0 0.0
    %2346 = vmatprep.subr.mxu0 0.0
    %2347 = vmatpush1.msra.mxu0 0.0
    %2348 = vmatprep.subr.mxu0 0.0
    %2349 = vmatpush1.msra.mxu0 0.0
    %2350 = vmatprep.mubr.f32.mxu0 0.0
    %2351 = vmatmul.mubr.f32.gmra.mrb[0].mxu0 %v2284
    %v2352 = vpop.f32.mrb[0].mxu0
    %v2353 = vadd.f32 %v2069, %v2352
    %v2354 = vpop.f32.mrb[0].mxu0
    %2355 = vdwg.mxu0
    %v2356 = vxor.u32 %v2353, 2147483648
    %v2357 = vmul.f32 %v2356, 1.442695
    %v2358 = vpow.pop %v2357
    %v2359 = vadd.f32 %v2358, 1.0
    %v2360 = vrcp.pop %v2359
    %v2361 = vmul.f32 1.0, %v2360
    %v2362 = vtanh.pop %v2353
    %v2363 = vmul.f32 %v2361, %v2162
    %2365 = vrot.lane.b32.xlu0 %v2362, 64
    %v2366 = vpop.permute.xlu0 %2365
    %v2368 = vmul.f32 %v2361, %v2366
    %2370 = vrot.lane.b32.xlu0 %v2368, 32
    %v2371 = vpop.permute.xlu0 %2370
    %v2373 = vadd.f32 %v2363, %v2371
    %v2374 = vtanh.pop %v2373
    %2376 = vrot.lane.b32.xlu0 %v2374, 64
    %v2377 = vpop.permute.xlu0 %2376
    %v2379 = vmul.f32 %v2361, %v2377
    %v2380 = vrot.slane %v2271, 2
    %2381 = vrot.lane.b32.xlu0 %v2380, 32
    %v2382 = vpop.permute.xlu0 %2381
    %v2383 = vsel %vm1867, %v2382, 0
    %2385 = vmatprep.subr.mxu0 0.0
    %2386 = vmatpush1.msra.mxu0 %v1949
    %2387 = vmatprep.subr.mxu0 0.0
    %2388 = vmatpush1.msra.mxu0 %v1950
    %2389 = vmatprep.subr.mxu0 0.0
    %2390 = vmatpush1.msra.mxu0 %v1951
    %2391 = vmatprep.subr.mxu0 0.0
    %2392 = vmatpush1.msra.mxu0 %v1952
    %2393 = vmatprep.subr.mxu0 0.0
    %2394 = vmatpush1.msra.mxu0 0.0
    %2395 = vmatprep.subr.mxu0 0.0
    %2396 = vmatpush1.msra.mxu0 0.0
    %2397 = vmatprep.subr.mxu0 0.0
    %2398 = vmatpush1.msra.mxu0 0.0
    %2399 = vmatprep.subr.mxu0 0.0
    %2400 = vmatpush1.msra.mxu0 0.0
    %2401 = vmatprep.subr.mxu0 0.0
    %2402 = vmatpush1.msra.mxu0 0.0
    %2403 = vmatprep.subr.mxu0 0.0
    %2404 = vmatpush1.msra.mxu0 0.0
    %2405 = vmatprep.subr.mxu0 0.0
    %2406 = vmatpush1.msra.mxu0 0.0
    %2407 = vmatprep.subr.mxu0 0.0
    %2408 = vmatpush1.msra.mxu0 0.0
    %2409 = vmatprep.subr.mxu0 0.0
    %2410 = vmatpush1.msra.mxu0 0.0
    %2411 = vmatprep.subr.mxu0 0.0
    %2412 = vmatpush1.msra.mxu0 0.0
    %2413 = vmatprep.subr.mxu0 0.0
    %2414 = vmatpush1.msra.mxu0 0.0
    %2415 = vmatprep.subr.mxu0 0.0
    %2416 = vmatpush1.msra.mxu0 0.0
    %2417 = vmatprep.subr.mxu0 0.0
    %2418 = vmatpush1.msra.mxu0 0.0
    %2419 = vmatprep.subr.mxu0 0.0
    %2420 = vmatpush1.msra.mxu0 0.0
    %2421 = vmatprep.subr.mxu0 0.0
    %2422 = vmatpush1.msra.mxu0 0.0
    %2423 = vmatprep.subr.mxu0 0.0
    %2424 = vmatpush1.msra.mxu0 0.0
    %2425 = vmatprep.subr.mxu0 0.0
    %2426 = vmatpush1.msra.mxu0 0.0
    %2427 = vmatprep.subr.mxu0 0.0
    %2428 = vmatpush1.msra.mxu0 0.0
    %2429 = vmatprep.subr.mxu0 0.0
    %2430 = vmatpush1.msra.mxu0 0.0
    %2431 = vmatprep.subr.mxu0 0.0
    %2432 = vmatpush1.msra.mxu0 0.0
    %2433 = vmatprep.subr.mxu0 0.0
    %2434 = vmatpush1.msra.mxu0 0.0
    %2435 = vmatprep.subr.mxu0 0.0
    %2436 = vmatpush1.msra.mxu0 0.0
    %2437 = vmatprep.subr.mxu0 0.0
    %2438 = vmatpush1.msra.mxu0 0.0
    %2439 = vmatprep.subr.mxu0 0.0
    %2440 = vmatpush1.msra.mxu0 0.0
    %2441 = vmatprep.subr.mxu0 0.0
    %2442 = vmatpush1.msra.mxu0 0.0
    %2443 = vmatprep.subr.mxu0 0.0
    %2444 = vmatpush1.msra.mxu0 0.0
    %2445 = vmatprep.subr.mxu0 0.0
    %2446 = vmatpush1.msra.mxu0 0.0
    %2447 = vmatprep.subr.mxu0 0.0
    %2448 = vmatpush1.msra.mxu0 0.0
    %2449 = vmatprep.mubr.f32.mxu0 0.0
    %2450 = vmatmul.mubr.f32.gmra.mrb[0].mxu0 %v2383
    %v2451 = vpop.f32.mrb[0].mxu0
    %v2452 = vadd.f32 0.0, %v2451
    %v2453 = vpop.f32.mrb[0].mxu0
    %2454 = vdwg.mxu0
    %v2456 = vrot.slane %v2452, 4
    %v2458 = vadd.f32 %v1941, %v2456
    %v2459 = vxor.u32 %v2458, 2147483648
    %v2460 = vmul.f32 %v2459, 1.442695
    %v2461 = vpow.pop %v2460
    %v2462 = vadd.f32 %v2461, 1.0
    %v2463 = vrcp.pop %v2462
    %v2464 = vmul.f32 1.0, %v2463
    %v2465 = vtanh.pop %v2458
    %v2467 = vrot.slane %v2265, 6
    %v2469 = vmul.f32 %v2464, %v2467
    %2471 = vrot.lane.b32.xlu0 %v2465, 64
    %v2472 = vpop.permute.xlu0 %2471
    %v2474 = vmul.f32 %v2464, %v2472
    %2476 = vrot.lane.b32.xlu0 %v2474, 32
    %v2477 = vpop.permute.xlu0 %2476
    %v2479 = vadd.f32 %v2469, %v2477
    %v2480 = vtanh.pop %v2479
    %2482 = vrot.lane.b32.xlu0 %v2480, 64
    %v2483 = vpop.permute.xlu0 %2482
    %v2485 = vmul.f32 %v2464, %v2483
    %2487 = vrot.lane.b32.xlu0 %v2485, 32
    %v2488 = vpop.permute.xlu0 %2487
    %v2491 = vrot.slane %v2379, 4
    %2492 = vrot.lane.b32.xlu0 %v2491, 64
    %v2493 = vpop.permute.xlu0 %2492
    %v2495 = vsel %vm1867, %v2488, %v2493
    %v2497 = vrot.slane %v2495, 4
    %v2498 = vsel %vm2071, %v2497, 0
    %2500 = vmatprep.subr.mxu0 0.0
    %2501 = vmatpush1.msra.mxu0 %v1953
    %2502 = vmatprep.subr.mxu0 0.0
    %2503 = vmatpush1.msra.mxu0 %v1954
    %2504 = vmatprep.subr.mxu0 0.0
    %2505 = vmatpush1.msra.mxu0 %v1955
    %2506 = vmatprep.subr.mxu0 0.0
    %2507 = vmatpush1.msra.mxu0 %v1956
    %2508 = vmatprep.subr.mxu0 0.0
    %2509 = vmatpush1.msra.mxu0 %v1957
    %2510 = vmatprep.subr.mxu0 0.0
    %2511 = vmatpush1.msra.mxu0 %v1958
    %2512 = vmatprep.subr.mxu0 0.0
    %2513 = vmatpush1.msra.mxu0 %v1959
    %2514 = vmatprep.subr.mxu0 0.0
    %2515 = vmatpush1.msra.mxu0 %v1960
    %2516 = vmatprep.subr.mxu0 0.0
    %2517 = vmatpush1.msra.mxu0 0.0
    %2518 = vmatprep.subr.mxu0 0.0
    %2519 = vmatpush1.msra.mxu0 0.0
    %2520 = vmatprep.subr.mxu0 0.0
    %2521 = vmatpush1.msra.mxu0 0.0
    %2522 = vmatprep.subr.mxu0 0.0
    %2523 = vmatpush1.msra.mxu0 0.0
    %2524 = vmatprep.subr.mxu0 0.0
    %2525 = vmatpush1.msra.mxu0 0.0
    %2526 = vmatprep.subr.mxu0 0.0
    %2527 = vmatpush1.msra.mxu0 0.0
    %2528 = vmatprep.subr.mxu0 0.0
    %2529 = vmatpush1.msra.mxu0 0.0
    %2530 = vmatprep.subr.mxu0 0.0
    %2531 = vmatpush1.msra.mxu0 0.0
    %2532 = vmatprep.subr.mxu0 0.0
    %2533 = vmatpush1.msra.mxu0 0.0
    %2534 = vmatprep.subr.mxu0 0.0
    %2535 = vmatpush1.msra.mxu0 0.0
    %2536 = vmatprep.subr.mxu0 0.0
    %2537 = vmatpush1.msra.mxu0 0.0
    %2538 = vmatprep.subr.mxu0 0.0
    %2539 = vmatpush1.msra.mxu0 0.0
    %2540 = vmatprep.subr.mxu0 0.0
    %2541 = vmatpush1.msra.mxu0 0.0
    %2542 = vmatprep.subr.mxu0 0.0
    %2543 = vmatpush1.msra.mxu0 0.0
    %2544 = vmatprep.subr.mxu0 0.0
    %2545 = vmatpush1.msra.mxu0 0.0
    %2546 = vmatprep.subr.mxu0 0.0
    %2547 = vmatpush1.msra.mxu0 0.0
    %2548 = vmatprep.subr.mxu0 0.0
    %2549 = vmatpush1.msra.mxu0 0.0
    %2550 = vmatprep.subr.mxu0 0.0
    %2551 = vmatpush1.msra.mxu0 0.0
    %2552 = vmatprep.subr.mxu0 0.0
    %2553 = vmatpush1.msra.mxu0 0.0
    %2554 = vmatprep.subr.mxu0 0.0
    %2555 = vmatpush1.msra.mxu0 0.0
    %2556 = vmatprep.subr.mxu0 0.0
    %2557 = vmatpush1.msra.mxu0 0.0
    %2558 = vmatprep.subr.mxu0 0.0
    %2559 = vmatpush1.msra.mxu0 0.0
    %2560 = vmatprep.subr.mxu0 0.0
    %2561 = vmatpush1.msra.mxu0 0.0
    %2562 = vmatprep.subr.mxu0 0.0
    %2563 = vmatpush1.msra.mxu0 0.0
    %2564 = vmatprep.mubr.f32.mxu0 0.0
    %2565 = vmatmul.mubr.f32.gmra.mrb[0].mxu0 %v2498
    %v2566 = vpop.f32.mrb[0].mxu0
    %v2567 = vadd.f32 %v2069, %v2566
    %v2568 = vpop.f32.mrb[0].mxu0
    %2569 = vdwg.mxu0
    %v2570 = vxor.u32 %v2567, 2147483648
    %v2571 = vmul.f32 %v2570, 1.442695
    %v2572 = vpow.pop %v2571
    %v2573 = vadd.f32 %v2572, 1.0
    %v2574 = vrcp.pop %v2573
    %v2575 = vmul.f32 1.0, %v2574
    %v2576 = vtanh.pop %v2567
    %v2577 = vmul.f32 %v2575, %v2373
    %2579 = vrot.lane.b32.xlu0 %v2576, 64
    %v2580 = vpop.permute.xlu0 %2579
    %v2582 = vmul.f32 %v2575, %v2580
    %2584 = vrot.lane.b32.xlu0 %v2582, 32
    %v2585 = vpop.permute.xlu0 %2584
    %v2587 = vadd.f32 %v2577, %v2585
    %v2588 = vtanh.pop %v2587
    %2590 = vrot.lane.b32.xlu0 %v2588, 64
    %v2591 = vpop.permute.xlu0 %2590
    %v2593 = vmul.f32 %v2575, %v2591
    %v2594 = vrot.slane %v2485, 4
    %2595 = vrot.lane.b32.xlu0 %v2594, 32
    %v2596 = vpop.permute.xlu0 %2595
    %v2597 = vsel %vm1867, %v2596, 0
    %2599 = vmatprep.subr.mxu0 0.0
    %2600 = vmatpush1.msra.mxu0 %v1949
    %2601 = vmatprep.subr.mxu0 0.0
    %2602 = vmatpush1.msra.mxu0 %v1950
    %2603 = vmatprep.subr.mxu0 0.0
    %2604 = vmatpush1.msra.mxu0 %v1951
    %2605 = vmatprep.subr.mxu0 0.0
    %2606 = vmatpush1.msra.mxu0 %v1952
    %2607 = vmatprep.subr.mxu0 0.0
    %2608 = vmatpush1.msra.mxu0 0.0
    %2609 = vmatprep.subr.mxu0 0.0
    %2610 = vmatpush1.msra.mxu0 0.0
    %2611 = vmatprep.subr.mxu0 0.0
    %2612 = vmatpush1.msra.mxu0 0.0
    %2613 = vmatprep.subr.mxu0 0.0
    %2614 = vmatpush1.msra.mxu0 0.0
    %2615 = vmatprep.subr.mxu0 0.0
    %2616 = vmatpush1.msra.mxu0 0.0
    %2617 = vmatprep.subr.mxu0 0.0
    %2618 = vmatpush1.msra.mxu0 0.0
    %2619 = vmatprep.subr.mxu0 0.0
    %2620 = vmatpush1.msra.mxu0 0.0
    %2621 = vmatprep.subr.mxu0 0.0
    %2622 = vmatpush1.msra.mxu0 0.0
    %2623 = vmatprep.subr.mxu0 0.0
    %2624 = vmatpush1.msra.mxu0 0.0
    %2625 = vmatprep.subr.mxu0 0.0
    %2626 = vmatpush1.msra.mxu0 0.0
    %2627 = vmatprep.subr.mxu0 0.0
    %2628 = vmatpush1.msra.mxu0 0.0
    %2629 = vmatprep.subr.mxu0 0.0
    %2630 = vmatpush1.msra.mxu0 0.0
    %2631 = vmatprep.subr.mxu0 0.0
    %2632 = vmatpush1.msra.mxu0 0.0
    %2633 = vmatprep.subr.mxu0 0.0
    %2634 = vmatpush1.msra.mxu0 0.0
    %2635 = vmatprep.subr.mxu0 0.0
    %2636 = vmatpush1.msra.mxu0 0.0
    %2637 = vmatprep.subr.mxu0 0.0
    %2638 = vmatpush1.msra.mxu0 0.0
    %2639 = vmatprep.subr.mxu0 0.0
    %2640 = vmatpush1.msra.mxu0 0.0
    %2641 = vmatprep.subr.mxu0 0.0
    %2642 = vmatpush1.msra.mxu0 0.0
    %2643 = vmatprep.subr.mxu0 0.0
    %2644 = vmatpush1.msra.mxu0 0.0
    %2645 = vmatprep.subr.mxu0 0.0
    %2646 = vmatpush1.msra.mxu0 0.0
    %2647 = vmatprep.subr.mxu0 0.0
    %2648 = vmatpush1.msra.mxu0 0.0
    %2649 = vmatprep.subr.mxu0 0.0
    %2650 = vmatpush1.msra.mxu0 0.0
    %2651 = vmatprep.subr.mxu0 0.0
    %2652 = vmatpush1.msra.mxu0 0.0
    %2653 = vmatprep.subr.mxu0 0.0
    %2654 = vmatpush1.msra.mxu0 0.0
    %2655 = vmatprep.subr.mxu0 0.0
    %2656 = vmatpush1.msra.mxu0 0.0
    %2657 = vmatprep.subr.mxu0 0.0
    %2658 = vmatpush1.msra.mxu0 0.0
    %2659 = vmatprep.subr.mxu0 0.0
    %2660 = vmatpush1.msra.mxu0 0.0
    %2661 = vmatprep.subr.mxu0 0.0
    %2662 = vmatpush1.msra.mxu0 0.0
    %2663 = vmatprep.mubr.f32.mxu0 0.0
    %2664 = vmatmul.mubr.f32.gmra.mrb[0].mxu0 %v2597
    %v2665 = vpop.f32.mrb[0].mxu0
    %v2666 = vadd.f32 0.0, %v2665
    %v2667 = vpop.f32.mrb[0].mxu0
    %2668 = vdwg.mxu0
    %v2670 = vrot.slane %v2666, 2
    %v2672 = vadd.f32 %v1941, %v2670
    %v2673 = vxor.u32 %v2672, 2147483648
    %v2674 = vmul.f32 %v2673, 1.442695
    %v2675 = vpow.pop %v2674
    %v2676 = vadd.f32 %v2675, 1.0
    %v2677 = vrcp.pop %v2676
    %v2678 = vmul.f32 1.0, %v2677
    %v2679 = vtanh.pop %v2672
    %v2681 = vrot.slane %v2479, 6
    %v2683 = vmul.f32 %v2678, %v2681
    %2685 = vrot.lane.b32.xlu0 %v2679, 64
    %v2686 = vpop.permute.xlu0 %2685
    %v2688 = vmul.f32 %v2678, %v2686
    %2690 = vrot.lane.b32.xlu0 %v2688, 32
    %v2691 = vpop.permute.xlu0 %2690
    %v2693 = vadd.f32 %v2683, %v2691
    %v2694 = vtanh.pop %v2693
    %2696 = vrot.lane.b32.xlu0 %v2694, 64
    %v2697 = vpop.permute.xlu0 %2696
    %v2699 = vmul.f32 %v2678, %v2697
    %2701 = vrot.lane.b32.xlu0 %v2699, 32
    %v2702 = vpop.permute.xlu0 %2701
    %v2705 = vrot.slane %v2593, 2
    %2706 = vrot.lane.b32.xlu0 %v2705, 64
    %v2707 = vpop.permute.xlu0 %2706
    %v2709 = vsel %vm1867, %v2702, %v2707
    %v2711 = vrot.slane %v2709, 6
    %v2712 = vsel %vm2071, %v2711, 0
    %2714 = vmatprep.subr.mxu0 0.0
    %2715 = vmatpush1.msra.mxu0 %v1953
    %2716 = vmatprep.subr.mxu0 0.0
    %2717 = vmatpush1.msra.mxu0 %v1954
    %2718 = vmatprep.subr.mxu0 0.0
    %2719 = vmatpush1.msra.mxu0 %v1955
    %2720 = vmatprep.subr.mxu0 0.0
    %2721 = vmatpush1.msra.mxu0 %v1956
    %2722 = vmatprep.subr.mxu0 0.0
    %2723 = vmatpush1.msra.mxu0 %v1957
    %2724 = vmatprep.subr.mxu0 0.0
    %2725 = vmatpush1.msra.mxu0 %v1958
    %2726 = vmatprep.subr.mxu0 0.0
    %2727 = vmatpush1.msra.mxu0 %v1959
    %2728 = vmatprep.subr.mxu0 0.0
    %2729 = vmatpush1.msra.mxu0 %v1960
    %2730 = vmatprep.subr.mxu0 0.0
    %2731 = vmatpush1.msra.mxu0 0.0
    %2732 = vmatprep.subr.mxu0 0.0
    %2733 = vmatpush1.msra.mxu0 0.0
    %2734 = vmatprep.subr.mxu0 0.0
    %2735 = vmatpush1.msra.mxu0 0.0
    %2736 = vmatprep.subr.mxu0 0.0
    %2737 = vmatpush1.msra.mxu0 0.0
    %2738 = vmatprep.subr.mxu0 0.0
    %2739 = vmatpush1.msra.mxu0 0.0
    %2740 = vmatprep.subr.mxu0 0.0
    %2741 = vmatpush1.msra.mxu0 0.0
    %2742 = vmatprep.subr.mxu0 0.0
    %2743 = vmatpush1.msra.mxu0 0.0
    %2744 = vmatprep.subr.mxu0 0.0
    %2745 = vmatpush1.msra.mxu0 0.0
    %2746 = vmatprep.subr.mxu0 0.0
    %2747 = vmatpush1.msra.mxu0 0.0
    %2748 = vmatprep.subr.mxu0 0.0
    %2749 = vmatpush1.msra.mxu0 0.0
    %2750 = vmatprep.subr.mxu0 0.0
    %2751 = vmatpush1.msra.mxu0 0.0
    %2752 = vmatprep.subr.mxu0 0.0
    %2753 = vmatpush1.msra.mxu0 0.0
    %2754 = vmatprep.subr.mxu0 0.0
    %2755 = vmatpush1.msra.mxu0 0.0
    %2756 = vmatprep.subr.mxu0 0.0
    %2757 = vmatpush1.msra.mxu0 0.0
    %2758 = vmatprep.subr.mxu0 0.0
    %2759 = vmatpush1.msra.mxu0 0.0
    %2760 = vmatprep.subr.mxu0 0.0
    %2761 = vmatpush1.msra.mxu0 0.0
    %2762 = vmatprep.subr.mxu0 0.0
    %2763 = vmatpush1.msra.mxu0 0.0
    %2764 = vmatprep.subr.mxu0 0.0
    %2765 = vmatpush1.msra.mxu0 0.0
    %2766 = vmatprep.subr.mxu0 0.0
    %2767 = vmatpush1.msra.mxu0 0.0
    %2768 = vmatprep.subr.mxu0 0.0
    %2769 = vmatpush1.msra.mxu0 0.0
    %2770 = vmatprep.subr.mxu0 0.0
    %2771 = vmatpush1.msra.mxu0 0.0
    %2772 = vmatprep.subr.mxu0 0.0
    %2773 = vmatpush1.msra.mxu0 0.0
    %2774 = vmatprep.subr.mxu0 0.0
    %2775 = vmatpush1.msra.mxu0 0.0
    %2776 = vmatprep.subr.mxu0 0.0
    %2777 = vmatpush1.msra.mxu0 0.0
    %2778 = vmatprep.mubr.f32.mxu0 0.0
    %2779 = vmatmul.mubr.f32.gmra.mrb[0].mxu0 %v2712
    %v2780 = vpop.f32.mrb[0].mxu0
    %v2781 = vadd.f32 %v2069, %v2780
    %v2782 = vpop.f32.mrb[0].mxu0
    %2783 = vdwg.mxu0
    %v2784 = vxor.u32 %v2781, 2147483648
    %v2785 = vmul.f32 %v2784, 1.442695
    %v2786 = vpow.pop %v2785
    %v2787 = vadd.f32 %v2786, 1.0
    %v2788 = vrcp.pop %v2787
    %v2789 = vmul.f32 1.0, %v2788
    %v2790 = vtanh.pop %v2781
    %v2791 = vmul.f32 %v2789, %v2587
    %2793 = vrot.lane.b32.xlu0 %v2790, 64
    %v2794 = vpop.permute.xlu0 %2793
    %v2796 = vmul.f32 %v2789, %v2794
    %2798 = vrot.lane.b32.xlu0 %v2796, 32
    %v2799 = vpop.permute.xlu0 %2798
    %v2801 = vadd.f32 %v2791, %v2799
    %v2802 = vtanh.pop %v2801
    %2804 = vrot.lane.b32.xlu0 %v2802, 64
    %v2805 = vpop.permute.xlu0 %2804
    %v2807 = vmul.f32 %v2789, %v2805
    %v2808 = vrot.slane %v2699, 6
    %2809 = vrot.lane.b32.xlu0 %v2808, 32
    %v2810 = vpop.permute.xlu0 %2809
    %v2811 = vsel %vm1867, %v2810, 0
    %2813 = vmatprep.subr.mxu0 0.0
    %2814 = vmatpush1.msra.mxu0 %v1949
    %2815 = vmatprep.subr.mxu0 0.0
    %2816 = vmatpush1.msra.mxu0 %v1950
    %2817 = vmatprep.subr.mxu0 0.0
    %2818 = vmatpush1.msra.mxu0 %v1951
    %2819 = vmatprep.subr.mxu0 0.0
    %2820 = vmatpush1.msra.mxu0 %v1952
    %2821 = vmatprep.subr.mxu0 0.0
    %2822 = vmatpush1.msra.mxu0 0.0
    %2823 = vmatprep.subr.mxu0 0.0
    %2824 = vmatpush1.msra.mxu0 0.0
    %2825 = vmatprep.subr.mxu0 0.0
    %2826 = vmatpush1.msra.mxu0 0.0
    %2827 = vmatprep.subr.mxu0 0.0
    %2828 = vmatpush1.msra.mxu0 0.0
    %2829 = vmatprep.subr.mxu0 0.0
    %2830 = vmatpush1.msra.mxu0 0.0
    %2831 = vmatprep.subr.mxu0 0.0
    %2832 = vmatpush1.msra.mxu0 0.0
    %2833 = vmatprep.subr.mxu0 0.0
    %2834 = vmatpush1.msra.mxu0 0.0
    %2835 = vmatprep.subr.mxu0 0.0
    %2836 = vmatpush1.msra.mxu0 0.0
    %2837 = vmatprep.subr.mxu0 0.0
    %2838 = vmatpush1.msra.mxu0 0.0
    %2839 = vmatprep.subr.mxu0 0.0
    %2840 = vmatpush1.msra.mxu0 0.0
    %2841 = vmatprep.subr.mxu0 0.0
    %2842 = vmatpush1.msra.mxu0 0.0
    %2843 = vmatprep.subr.mxu0 0.0
    %2844 = vmatpush1.msra.mxu0 0.0
    %2845 = vmatprep.subr.mxu0 0.0
    %2846 = vmatpush1.msra.mxu0 0.0
    %2847 = vmatprep.subr.mxu0 0.0
    %2848 = vmatpush1.msra.mxu0 0.0
    %2849 = vmatprep.subr.mxu0 0.0
    %2850 = vmatpush1.msra.mxu0 0.0
    %2851 = vmatprep.subr.mxu0 0.0
    %2852 = vmatpush1.msra.mxu0 0.0
    %2853 = vmatprep.subr.mxu0 0.0
    %2854 = vmatpush1.msra.mxu0 0.0
    %2855 = vmatprep.subr.mxu0 0.0
    %2856 = vmatpush1.msra.mxu0 0.0
    %2857 = vmatprep.subr.mxu0 0.0
    %2858 = vmatpush1.msra.mxu0 0.0
    %2859 = vmatprep.subr.mxu0 0.0
    %2860 = vmatpush1.msra.mxu0 0.0
    %2861 = vmatprep.subr.mxu0 0.0
    %2862 = vmatpush1.msra.mxu0 0.0
    %2863 = vmatprep.subr.mxu0 0.0
    %2864 = vmatpush1.msra.mxu0 0.0
    %2865 = vmatprep.subr.mxu0 0.0
    %2866 = vmatpush1.msra.mxu0 0.0
    %2867 = vmatprep.subr.mxu0 0.0
    %2868 = vmatpush1.msra.mxu0 0.0
    %2869 = vmatprep.subr.mxu0 0.0
    %2870 = vmatpush1.msra.mxu0 0.0
    %2871 = vmatprep.subr.mxu0 0.0
    %2872 = vmatpush1.msra.mxu0 0.0
    %2873 = vmatprep.subr.mxu0 0.0
    %2874 = vmatpush1.msra.mxu0 0.0
    %2875 = vmatprep.subr.mxu0 0.0
    %2876 = vmatpush1.msra.mxu0 0.0
    %2877 = vmatprep.mubr.f32.mxu0 0.0
    %2878 = vmatmul.mubr.f32.gmra.mrb[0].mxu0 %v2811
    %v2879 = vpop.f32.mrb[0].mxu0
    %v2880 = vadd.f32 0.0, %v2879
    %v2881 = vpop.f32.mrb[0].mxu0
    %2882 = vdwg.mxu0
    %v2883 = vadd.f32 %v1946, %v2880
    %v2884 = vxor.u32 %v2883, 2147483648
    %v2885 = vmul.f32 %v2884, 1.442695
    %v2886 = vpow.pop %v2885
    %v2887 = vadd.f32 %v2886, 1.0
    %v2888 = vrcp.pop %v2887
    %v2889 = vmul.f32 1.0, %v2888
    %v2890 = vtanh.pop %v2883
    %v2892 = vrot.slane %v2693, 6
    %v2894 = vmul.f32 %v2889, %v2892
    %2896 = vrot.lane.b32.xlu0 %v2890, 64
    %v2897 = vpop.permute.xlu0 %2896
    %v2899 = vmul.f32 %v2889, %v2897
    %2901 = vrot.lane.b32.xlu0 %v2899, 32
    %v2902 = vpop.permute.xlu0 %2901
    %v2904 = vadd.f32 %v2894, %v2902
    %v2905 = vtanh.pop %v2904
    %2907 = vrot.lane.b32.xlu0 %v2905, 64
    %v2908 = vpop.permute.xlu0 %2907
    %v2910 = vmul.f32 %v2889, %v2908
    %2912 = vrot.lane.b32.xlu0 %v2910, 32
    %v2913 = vpop.permute.xlu0 %2912
    %2916 = vrot.lane.b32.xlu0 %v2807, 64
    %v2917 = vpop.permute.xlu0 %2916
    %v2919 = vsel %vm1867, %v2913, %v2917
    %v2921 = vsel %vm2071, %v2919, 0
    %2923 = vmatprep.subr.mxu0 0.0
    %2924 = vmatpush1.msra.mxu0 %v1953
    %2925 = vmatprep.subr.mxu0 0.0
    %2926 = vmatpush1.msra.mxu0 %v1954
    %2927 = vmatprep.subr.mxu0 0.0
    %2928 = vmatpush1.msra.mxu0 %v1955
    %2929 = vmatprep.subr.mxu0 0.0
    %2930 = vmatpush1.msra.mxu0 %v1956
    %2931 = vmatprep.subr.mxu0 0.0
    %2932 = vmatpush1.msra.mxu0 %v1957
    %2933 = vmatprep.subr.mxu0 0.0
    %2934 = vmatpush1.msra.mxu0 %v1958
    %2935 = vmatprep.subr.mxu0 0.0
    %2936 = vmatpush1.msra.mxu0 %v1959
    %2937 = vmatprep.subr.mxu0 0.0
    %2938 = vmatpush1.msra.mxu0 %v1960
    %2939 = vmatprep.subr.mxu0 0.0
    %2940 = vmatpush1.msra.mxu0 0.0
    %2941 = vmatprep.subr.mxu0 0.0
    %2942 = vmatpush1.msra.mxu0 0.0
    %2943 = vmatprep.subr.mxu0 0.0
    %2944 = vmatpush1.msra.mxu0 0.0
    %2945 = vmatprep.subr.mxu0 0.0
    %2946 = vmatpush1.msra.mxu0 0.0
    %2947 = vmatprep.subr.mxu0 0.0
    %2948 = vmatpush1.msra.mxu0 0.0
    %2949 = vmatprep.subr.mxu0 0.0
    %2950 = vmatpush1.msra.mxu0 0.0
    %2951 = vmatprep.subr.mxu0 0.0
    %2952 = vmatpush1.msra.mxu0 0.0
    %2953 = vmatprep.subr.mxu0 0.0
    %2954 = vmatpush1.msra.mxu0 0.0
    %2955 = vmatprep.subr.mxu0 0.0
    %2956 = vmatpush1.msra.mxu0 0.0
    %2957 = vmatprep.subr.mxu0 0.0
    %2958 = vmatpush1.msra.mxu0 0.0
    %2959 = vmatprep.subr.mxu0 0.0
    %2960 = vmatpush1.msra.mxu0 0.0
    %2961 = vmatprep.subr.mxu0 0.0
    %2962 = vmatpush1.msra.mxu0 0.0
    %2963 = vmatprep.subr.mxu0 0.0
    %2964 = vmatpush1.msra.mxu0 0.0
    %2965 = vmatprep.subr.mxu0 0.0
    %2966 = vmatpush1.msra.mxu0 0.0
    %2967 = vmatprep.subr.mxu0 0.0
    %2968 = vmatpush1.msra.mxu0 0.0
    %2969 = vmatprep.subr.mxu0 0.0
    %2970 = vmatpush1.msra.mxu0 0.0
    %2971 = vmatprep.subr.mxu0 0.0
    %2972 = vmatpush1.msra.mxu0 0.0
    %2973 = vmatprep.subr.mxu0 0.0
    %2974 = vmatpush1.msra.mxu0 0.0
    %2975 = vmatprep.subr.mxu0 0.0
    %2976 = vmatpush1.msra.mxu0 0.0
    %2977 = vmatprep.subr.mxu0 0.0
    %2978 = vmatpush1.msra.mxu0 0.0
    %2979 = vmatprep.subr.mxu0 0.0
    %2980 = vmatpush1.msra.mxu0 0.0
    %2981 = vmatprep.subr.mxu0 0.0
    %2982 = vmatpush1.msra.mxu0 0.0
    %2983 = vmatprep.subr.mxu0 0.0
    %2984 = vmatpush1.msra.mxu0 0.0
    %2985 = vmatprep.subr.mxu0 0.0
    %2986 = vmatpush1.msra.mxu0 0.0
    %2987 = vmatprep.mubr.f32.mxu0 0.0
    %2988 = vmatmul.mubr.f32.gmra.mrb[0].mxu0 %v2921
    %v2989 = vpop.f32.mrb[0].mxu0
    %v2990 = vadd.f32 %v2069, %v2989
    %v2991 = vpop.f32.mrb[0].mxu0
    %2992 = vdwg.mxu0
    %v2993 = vxor.u32 %v2990, 2147483648
    %v2994 = vmul.f32 %v2993, 1.442695
    %v2995 = vpow.pop %v2994
    %v2996 = vadd.f32 %v2995, 1.0
    %v2997 = vrcp.pop %v2996
    %v2998 = vmul.f32 1.0, %v2997
    %v2999 = vtanh.pop %v2990
    %v3000 = vmul.f32 %v2998, %v2801
    %3002 = vrot.lane.b32.xlu0 %v2999, 64
    %v3003 = vpop.permute.xlu0 %3002
    %v3005 = vmul.f32 %v2998, %v3003
    %3007 = vrot.lane.b32.xlu0 %v3005, 32
    %v3008 = vpop.permute.xlu0 %3007
    %v3010 = vadd.f32 %v3000, %v3008
    %v3011 = vtanh.pop %v3010
    %3013 = vrot.lane.b32.xlu0 %v3011, 64
    %v3014 = vpop.permute.xlu0 %3013
    %v3016 = vmul.f32 %v2998, %v3014
    %v3017 = vsel %vm1867, %v2913, 0
    %3019 = vmatprep.subr.mxu0 0.0
    %3020 = vmatpush1.msra.mxu0 %v1949
    %3021 = vmatprep.subr.mxu0 0.0
    %3022 = vmatpush1.msra.mxu0 %v1950
    %3023 = vmatprep.subr.mxu0 0.0
    %3024 = vmatpush1.msra.mxu0 %v1951
    %3025 = vmatprep.subr.mxu0 0.0
    %3026 = vmatpush1.msra.mxu0 %v1952
    %3027 = vmatprep.subr.mxu0 0.0
    %3028 = vmatpush1.msra.mxu0 0.0
    %3029 = vmatprep.subr.mxu0 0.0
    %3030 = vmatpush1.msra.mxu0 0.0
    %3031 = vmatprep.subr.mxu0 0.0
    %3032 = vmatpush1.msra.mxu0 0.0
    %3033 = vmatprep.subr.mxu0 0.0
    %3034 = vmatpush1.msra.mxu0 0.0
    %3035 = vmatprep.subr.mxu0 0.0
    %3036 = vmatpush1.msra.mxu0 0.0
    %3037 = vmatprep.subr.mxu0 0.0
    %3038 = vmatpush1.msra.mxu0 0.0
    %3039 = vmatprep.subr.mxu0 0.0
    %3040 = vmatpush1.msra.mxu0 0.0
    %3041 = vmatprep.subr.mxu0 0.0
    %3042 = vmatpush1.msra.mxu0 0.0
    %3043 = vmatprep.subr.mxu0 0.0
    %3044 = vmatpush1.msra.mxu0 0.0
    %3045 = vmatprep.subr.mxu0 0.0
    %3046 = vmatpush1.msra.mxu0 0.0
    %3047 = vmatprep.subr.mxu0 0.0
    %3048 = vmatpush1.msra.mxu0 0.0
    %3049 = vmatprep.subr.mxu0 0.0
    %3050 = vmatpush1.msra.mxu0 0.0
    %3051 = vmatprep.subr.mxu0 0.0
    %3052 = vmatpush1.msra.mxu0 0.0
    %3053 = vmatprep.subr.mxu0 0.0
    %3054 = vmatpush1.msra.mxu0 0.0
    %3055 = vmatprep.subr.mxu0 0.0
    %3056 = vmatpush1.msra.mxu0 0.0
    %3057 = vmatprep.subr.mxu0 0.0
    %3058 = vmatpush1.msra.mxu0 0.0
    %3059 = vmatprep.subr.mxu0 0.0
    %3060 = vmatpush1.msra.mxu0 0.0
    %3061 = vmatprep.subr.mxu0 0.0
    %3062 = vmatpush1.msra.mxu0 0.0
    %3063 = vmatprep.subr.mxu0 0.0
    %3064 = vmatpush1.msra.mxu0 0.0
    %3065 = vmatprep.subr.mxu0 0.0
    %3066 = vmatpush1.msra.mxu0 0.0
    %3067 = vmatprep.subr.mxu0 0.0
    %3068 = vmatpush1.msra.mxu0 0.0
    %3069 = vmatprep.subr.mxu0 0.0
    %3070 = vmatpush1.msra.mxu0 0.0
    %3071 = vmatprep.subr.mxu0 0.0
    %3072 = vmatpush1.msra.mxu0 0.0
    %3073 = vmatprep.subr.mxu0 0.0
    %3074 = vmatpush1.msra.mxu0 0.0
    %3075 = vmatprep.subr.mxu0 0.0
    %3076 = vmatpush1.msra.mxu0 0.0
    %3077 = vmatprep.subr.mxu0 0.0
    %3078 = vmatpush1.msra.mxu0 0.0
    %3079 = vmatprep.subr.mxu0 0.0
    %3080 = vmatpush1.msra.mxu0 0.0
    %3081 = vmatprep.subr.mxu0 0.0
    %3082 = vmatpush1.msra.mxu0 0.0
    %3083 = vmatprep.mubr.f32.mxu0 0.0
    %3084 = vmatmul.mubr.f32.gmra.mrb[0].mxu0 %v3017
    %v3085 = vpop.f32.mrb[0].mxu0
    %v3086 = vadd.f32 0.0, %v3085
    %v3087 = vpop.f32.mrb[0].mxu0
    %3088 = vdwg.mxu0
    %v3090 = vrot.slane %v3086, 6
    %v3092 = vadd.f32 %v1946, %v3090
    %v3093 = vxor.u32 %v3092, 2147483648
    %v3094 = vmul.f32 %v3093, 1.442695
    %v3095 = vpow.pop %v3094
    %v3096 = vadd.f32 %v3095, 1.0
    %v3097 = vrcp.pop %v3096
    %v3098 = vmul.f32 1.0, %v3097
    %v3099 = vtanh.pop %v3092
    %v3101 = vrot.slane %v2904, 6
    %v3103 = vmul.f32 %v3098, %v3101
    %3105 = vrot.lane.b32.xlu0 %v3099, 64
    %v3106 = vpop.permute.xlu0 %3105
    %v3108 = vmul.f32 %v3098, %v3106
    %3110 = vrot.lane.b32.xlu0 %v3108, 32
    %v3111 = vpop.permute.xlu0 %3110
    %v3113 = vadd.f32 %v3103, %v3111
    %v3114 = vtanh.pop %v3113
    %3116 = vrot.lane.b32.xlu0 %v3114, 64
    %v3117 = vpop.permute.xlu0 %3116
    %v3119 = vmul.f32 %v3098, %v3117
    %3121 = vrot.lane.b32.xlu0 %v3119, 32
    %v3122 = vpop.permute.xlu0 %3121
    %v3125 = vrot.slane %v3016, 6
    %3126 = vrot.lane.b32.xlu0 %v3125, 64
    %v3127 = vpop.permute.xlu0 %3126
    %v3129 = vsel %vm1867, %v3122, %v3127
    %v3131 = vrot.slane %v3129, 2
    %v3132 = vsel %vm2071, %v3131, 0
    %3134 = vmatprep.subr.mxu0 0.0
    %3135 = vmatpush1.msra.mxu0 %v1953
    %3136 = vmatprep.subr.mxu0 0.0
    %3137 = vmatpush1.msra.mxu0 %v1954
    %3138 = vmatprep.subr.mxu0 0.0
    %3139 = vmatpush1.msra.mxu0 %v1955
    %3140 = vmatprep.subr.mxu0 0.0
    %3141 = vmatpush1.msra.mxu0 %v1956
    %3142 = vmatprep.subr.mxu0 0.0
    %3143 = vmatpush1.msra.mxu0 %v1957
    %3144 = vmatprep.subr.mxu0 0.0
    %3145 = vmatpush1.msra.mxu0 %v1958
    %3146 = vmatprep.subr.mxu0 0.0
    %3147 = vmatpush1.msra.mxu0 %v1959
    %3148 = vmatprep.subr.mxu0 0.0
    %3149 = vmatpush1.msra.mxu0 %v1960
    %3150 = vmatprep.subr.mxu0 0.0
    %3151 = vmatpush1.msra.mxu0 0.0
    %3152 = vmatprep.subr.mxu0 0.0
    %3153 = vmatpush1.msra.mxu0 0.0
    %3154 = vmatprep.subr.mxu0 0.0
    %3155 = vmatpush1.msra.mxu0 0.0
    %3156 = vmatprep.subr.mxu0 0.0
    %3157 = vmatpush1.msra.mxu0 0.0
    %3158 = vmatprep.subr.mxu0 0.0
    %3159 = vmatpush1.msra.mxu0 0.0
    %3160 = vmatprep.subr.mxu0 0.0
    %3161 = vmatpush1.msra.mxu0 0.0
    %3162 = vmatprep.subr.mxu0 0.0
    %3163 = vmatpush1.msra.mxu0 0.0
    %3164 = vmatprep.subr.mxu0 0.0
    %3165 = vmatpush1.msra.mxu0 0.0
    %3166 = vmatprep.subr.mxu0 0.0
    %3167 = vmatpush1.msra.mxu0 0.0
    %3168 = vmatprep.subr.mxu0 0.0
    %3169 = vmatpush1.msra.mxu0 0.0
    %3170 = vmatprep.subr.mxu0 0.0
    %3171 = vmatpush1.msra.mxu0 0.0
    %3172 = vmatprep.subr.mxu0 0.0
    %3173 = vmatpush1.msra.mxu0 0.0
    %3174 = vmatprep.subr.mxu0 0.0
    %3175 = vmatpush1.msra.mxu0 0.0
    %3176 = vmatprep.subr.mxu0 0.0
    %3177 = vmatpush1.msra.mxu0 0.0
    %3178 = vmatprep.subr.mxu0 0.0
    %3179 = vmatpush1.msra.mxu0 0.0
    %3180 = vmatprep.subr.mxu0 0.0
    %3181 = vmatpush1.msra.mxu0 0.0
    %3182 = vmatprep.subr.mxu0 0.0
    %3183 = vmatpush1.msra.mxu0 0.0
    %3184 = vmatprep.subr.mxu0 0.0
    %3185 = vmatpush1.msra.mxu0 0.0
    %3186 = vmatprep.subr.mxu0 0.0
    %3187 = vmatpush1.msra.mxu0 0.0
    %3188 = vmatprep.subr.mxu0 0.0
    %3189 = vmatpush1.msra.mxu0 0.0
    %3190 = vmatprep.subr.mxu0 0.0
    %3191 = vmatpush1.msra.mxu0 0.0
    %3192 = vmatprep.subr.mxu0 0.0
    %3193 = vmatpush1.msra.mxu0 0.0
    %3194 = vmatprep.subr.mxu0 0.0
    %3195 = vmatpush1.msra.mxu0 0.0
    %3196 = vmatprep.subr.mxu0 0.0
    %3197 = vmatpush1.msra.mxu0 0.0
    %3198 = vmatprep.mubr.f32.mxu0 0.0
    %3199 = vmatmul.mubr.f32.gmra.mrb[0].mxu0 %v3132
    %v3200 = vpop.f32.mrb[0].mxu0
    %v3201 = vadd.f32 %v2069, %v3200
    %v3202 = vpop.f32.mrb[0].mxu0
    %3203 = vdwg.mxu0
    %v3204 = vxor.u32 %v3201, 2147483648
    %v3205 = vmul.f32 %v3204, 1.442695
    %v3206 = vpow.pop %v3205
    %v3207 = vadd.f32 %v3206, 1.0
    %v3208 = vrcp.pop %v3207
    %v3209 = vmul.f32 1.0, %v3208
    %v3210 = vtanh.pop %v3201
    %v3211 = vmul.f32 %v3209, %v3010
    %3213 = vrot.lane.b32.xlu0 %v3210, 64
    %v3214 = vpop.permute.xlu0 %3213
    %v3216 = vmul.f32 %v3209, %v3214
    %3218 = vrot.lane.b32.xlu0 %v3216, 32
    %v3219 = vpop.permute.xlu0 %3218
    %v3221 = vadd.f32 %v3211, %v3219
    %v3222 = vtanh.pop %v3221
    %3224 = vrot.lane.b32.xlu0 %v3222, 64
    %v3225 = vpop.permute.xlu0 %3224
    %v3227 = vmul.f32 %v3209, %v3225
    %v3228 = vrot.slane %v3119, 2
    %3229 = vrot.lane.b32.xlu0 %v3228, 32
    %v3230 = vpop.permute.xlu0 %3229
    %v3231 = vsel %vm1867, %v3230, 0
    %3233 = vmatprep.subr.mxu0 0.0
    %3234 = vmatpush1.msra.mxu0 %v1949
    %3235 = vmatprep.subr.mxu0 0.0
    %3236 = vmatpush1.msra.mxu0 %v1950
    %3237 = vmatprep.subr.mxu0 0.0
    %3238 = vmatpush1.msra.mxu0 %v1951
    %3239 = vmatprep.subr.mxu0 0.0
    %3240 = vmatpush1.msra.mxu0 %v1952
    %3241 = vmatprep.subr.mxu0 0.0
    %3242 = vmatpush1.msra.mxu0 0.0
    %3243 = vmatprep.subr.mxu0 0.0
    %3244 = vmatpush1.msra.mxu0 0.0
    %3245 = vmatprep.subr.mxu0 0.0
    %3246 = vmatpush1.msra.mxu0 0.0
    %3247 = vmatprep.subr.mxu0 0.0
    %3248 = vmatpush1.msra.mxu0 0.0
    %3249 = vmatprep.subr.mxu0 0.0
    %3250 = vmatpush1.msra.mxu0 0.0
    %3251 = vmatprep.subr.mxu0 0.0
    %3252 = vmatpush1.msra.mxu0 0.0
    %3253 = vmatprep.subr.mxu0 0.0
    %3254 = vmatpush1.msra.mxu0 0.0
    %3255 = vmatprep.subr.mxu0 0.0
    %3256 = vmatpush1.msra.mxu0 0.0
    %3257 = vmatprep.subr.mxu0 0.0
    %3258 = vmatpush1.msra.mxu0 0.0
    %3259 = vmatprep.subr.mxu0 0.0
    %3260 = vmatpush1.msra.mxu0 0.0
    %3261 = vmatprep.subr.mxu0 0.0
    %3262 = vmatpush1.msra.mxu0 0.0
    %3263 = vmatprep.subr.mxu0 0.0
    %3264 = vmatpush1.msra.mxu0 0.0
    %3265 = vmatprep.subr.mxu0 0.0
    %3266 = vmatpush1.msra.mxu0 0.0
    %3267 = vmatprep.subr.mxu0 0.0
    %3268 = vmatpush1.msra.mxu0 0.0
    %3269 = vmatprep.subr.mxu0 0.0
    %3270 = vmatpush1.msra.mxu0 0.0
    %3271 = vmatprep.subr.mxu0 0.0
    %3272 = vmatpush1.msra.mxu0 0.0
    %3273 = vmatprep.subr.mxu0 0.0
    %3274 = vmatpush1.msra.mxu0 0.0
    %3275 = vmatprep.subr.mxu0 0.0
    %3276 = vmatpush1.msra.mxu0 0.0
    %3277 = vmatprep.subr.mxu0 0.0
    %3278 = vmatpush1.msra.mxu0 0.0
    %3279 = vmatprep.subr.mxu0 0.0
    %3280 = vmatpush1.msra.mxu0 0.0
    %3281 = vmatprep.subr.mxu0 0.0
    %3282 = vmatpush1.msra.mxu0 0.0
    %3283 = vmatprep.subr.mxu0 0.0
    %3284 = vmatpush1.msra.mxu0 0.0
    %3285 = vmatprep.subr.mxu0 0.0
    %3286 = vmatpush1.msra.mxu0 0.0
    %3287 = vmatprep.subr.mxu0 0.0
    %3288 = vmatpush1.msra.mxu0 0.0
    %3289 = vmatprep.subr.mxu0 0.0
    %3290 = vmatpush1.msra.mxu0 0.0
    %3291 = vmatprep.subr.mxu0 0.0
    %3292 = vmatpush1.msra.mxu0 0.0
    %3293 = vmatprep.subr.mxu0 0.0
    %3294 = vmatpush1.msra.mxu0 0.0
    %3295 = vmatprep.subr.mxu0 0.0
    %3296 = vmatpush1.msra.mxu0 0.0
    %3297 = vmatprep.mubr.f32.mxu0 0.0
    %3298 = vmatmul.mubr.f32.gmra.mrb[0].mxu0 %v3231
    %v3299 = vpop.f32.mrb[0].mxu0
    %v3300 = vadd.f32 0.0, %v3299
    %v3301 = vpop.f32.mrb[0].mxu0
    %3302 = vdwg.mxu0
    %v3304 = vrot.slane %v3300, 4
    %v3306 = vadd.f32 %v1946, %v3304
    %v3307 = vxor.u32 %v3306, 2147483648
    %v3308 = vmul.f32 %v3307, 1.442695
    %v3309 = vpow.pop %v3308
    %v3310 = vadd.f32 %v3309, 1.0
    %v3311 = vrcp.pop %v3310
    %v3312 = vmul.f32 1.0, %v3311
    %v3313 = vtanh.pop %v3306
    %v3315 = vrot.slane %v3113, 6
    %v3317 = vmul.f32 %v3312, %v3315
    %3319 = vrot.lane.b32.xlu0 %v3313, 64
    %v3320 = vpop.permute.xlu0 %3319
    %v3322 = vmul.f32 %v3312, %v3320
    %3324 = vrot.lane.b32.xlu0 %v3322, 32
    %v3325 = vpop.permute.xlu0 %3324
    %v3327 = vadd.f32 %v3317, %v3325
    %v3328 = vtanh.pop %v3327
    %3330 = vrot.lane.b32.xlu0 %v3328, 64
    %v3331 = vpop.permute.xlu0 %3330
    %v3333 = vmul.f32 %v3312, %v3331
    %3335 = vrot.lane.b32.xlu0 %v3333, 32
    %v3336 = vpop.permute.xlu0 %3335
    %v3339 = vrot.slane %v3227, 4
    %3340 = vrot.lane.b32.xlu0 %v3339, 64
    %v3341 = vpop.permute.xlu0 %3340
    %v3343 = vsel %vm1867, %v3336, %v3341
    %v3345 = vrot.slane %v3343, 4
    %v3346 = vsel %vm2071, %v3345, 0
    %3348 = vmatprep.subr.mxu0 0.0
    %3349 = vmatpush1.msra.mxu0 %v1953
    %3350 = vmatprep.subr.mxu0 0.0
    %3351 = vmatpush1.msra.mxu0 %v1954
    %3352 = vmatprep.subr.mxu0 0.0
    %3353 = vmatpush1.msra.mxu0 %v1955
    %3354 = vmatprep.subr.mxu0 0.0
    %3355 = vmatpush1.msra.mxu0 %v1956
    %3356 = vmatprep.subr.mxu0 0.0
    %3357 = vmatpush1.msra.mxu0 %v1957
    %3358 = vmatprep.subr.mxu0 0.0
    %3359 = vmatpush1.msra.mxu0 %v1958
    %3360 = vmatprep.subr.mxu0 0.0
    %3361 = vmatpush1.msra.mxu0 %v1959
    %3362 = vmatprep.subr.mxu0 0.0
    %3363 = vmatpush1.msra.mxu0 %v1960
    %3364 = vmatprep.subr.mxu0 0.0
    %3365 = vmatpush1.msra.mxu0 0.0
    %3366 = vmatprep.subr.mxu0 0.0
    %3367 = vmatpush1.msra.mxu0 0.0
    %3368 = vmatprep.subr.mxu0 0.0
    %3369 = vmatpush1.msra.mxu0 0.0
    %3370 = vmatprep.subr.mxu0 0.0
    %3371 = vmatpush1.msra.mxu0 0.0
    %3372 = vmatprep.subr.mxu0 0.0
    %3373 = vmatpush1.msra.mxu0 0.0
    %3374 = vmatprep.subr.mxu0 0.0
    %3375 = vmatpush1.msra.mxu0 0.0
    %3376 = vmatprep.subr.mxu0 0.0
    %3377 = vmatpush1.msra.mxu0 0.0
    %3378 = vmatprep.subr.mxu0 0.0
    %3379 = vmatpush1.msra.mxu0 0.0
    %3380 = vmatprep.subr.mxu0 0.0
    %3381 = vmatpush1.msra.mxu0 0.0
    %3382 = vmatprep.subr.mxu0 0.0
    %3383 = vmatpush1.msra.mxu0 0.0
    %3384 = vmatprep.subr.mxu0 0.0
    %3385 = vmatpush1.msra.mxu0 0.0
    %3386 = vmatprep.subr.mxu0 0.0
    %3387 = vmatpush1.msra.mxu0 0.0
    %3388 = vmatprep.subr.mxu0 0.0
    %3389 = vmatpush1.msra.mxu0 0.0
    %3390 = vmatprep.subr.mxu0 0.0
    %3391 = vmatpush1.msra.mxu0 0.0
    %3392 = vmatprep.subr.mxu0 0.0
    %3393 = vmatpush1.msra.mxu0 0.0
    %3394 = vmatprep.subr.mxu0 0.0
    %3395 = vmatpush1.msra.mxu0 0.0
    %3396 = vmatprep.subr.mxu0 0.0
    %3397 = vmatpush1.msra.mxu0 0.0
    %3398 = vmatprep.subr.mxu0 0.0
    %3399 = vmatpush1.msra.mxu0 0.0
    %3400 = vmatprep.subr.mxu0 0.0
    %3401 = vmatpush1.msra.mxu0 0.0
    %3402 = vmatprep.subr.mxu0 0.0
    %3403 = vmatpush1.msra.mxu0 0.0
    %3404 = vmatprep.subr.mxu0 0.0
    %3405 = vmatpush1.msra.mxu0 0.0
    %3406 = vmatprep.subr.mxu0 0.0
    %3407 = vmatpush1.msra.mxu0 0.0
    %3408 = vmatprep.subr.mxu0 0.0
    %3409 = vmatpush1.msra.mxu0 0.0
    %3410 = vmatprep.subr.mxu0 0.0
    %3411 = vmatpush1.msra.mxu0 0.0
    %3412 = vmatprep.mubr.f32.mxu0 0.0
    %3413 = vmatmul.mubr.f32.gmra.mrb[0].mxu0 %v3346
    %v3414 = vpop.f32.mrb[0].mxu0
    %v3415 = vadd.f32 %v2069, %v3414
    %v3416 = vpop.f32.mrb[0].mxu0
    %3417 = vdwg.mxu0
    %v3418 = vxor.u32 %v3415, 2147483648
    %v3419 = vmul.f32 %v3418, 1.442695
    %v3420 = vpow.pop %v3419
    %v3421 = vadd.f32 %v3420, 1.0
    %v3422 = vrcp.pop %v3421
    %v3423 = vmul.f32 1.0, %v3422
    %v3424 = vtanh.pop %v3415
    %v3425 = vmul.f32 %v3423, %v3221
    %3427 = vrot.lane.b32.xlu0 %v3424, 64
    %v3428 = vpop.permute.xlu0 %3427
    %v3430 = vmul.f32 %v3423, %v3428
    %3432 = vrot.lane.b32.xlu0 %v3430, 32
    %v3433 = vpop.permute.xlu0 %3432
    %v3435 = vadd.f32 %v3425, %v3433
    %v3436 = vtanh.pop %v3435
    %3438 = vrot.lane.b32.xlu0 %v3436, 64
    %v3439 = vpop.permute.xlu0 %3438
    %v3441 = vmul.f32 %v3423, %v3439
    %v3442 = vrot.slane %v3333, 4
    %3443 = vrot.lane.b32.xlu0 %v3442, 32
    %v3444 = vpop.permute.xlu0 %3443
    %v3445 = vsel %vm1867, %v3444, 0
    %3447 = vmatprep.subr.mxu0 0.0
    %3448 = vmatpush1.msra.mxu0 %v1949
    %3449 = vmatprep.subr.mxu0 0.0
    %3450 = vmatpush1.msra.mxu0 %v1950
    %3451 = vmatprep.subr.mxu0 0.0
    %3452 = vmatpush1.msra.mxu0 %v1951
    %3453 = vmatprep.subr.mxu0 0.0
    %3454 = vmatpush1.msra.mxu0 %v1952
    %3455 = vmatprep.subr.mxu0 0.0
    %3456 = vmatpush1.msra.mxu0 0.0
    %3457 = vmatprep.subr.mxu0 0.0
    %3458 = vmatpush1.msra.mxu0 0.0
    %3459 = vmatprep.subr.mxu0 0.0
    %3460 = vmatpush1.msra.mxu0 0.0
    %3461 = vmatprep.subr.mxu0 0.0
    %3462 = vmatpush1.msra.mxu0 0.0
    %3463 = vmatprep.subr.mxu0 0.0
    %3464 = vmatpush1.msra.mxu0 0.0
    %3465 = vmatprep.subr.mxu0 0.0
    %3466 = vmatpush1.msra.mxu0 0.0
    %3467 = vmatprep.subr.mxu0 0.0
    %3468 = vmatpush1.msra.mxu0 0.0
    %3469 = vmatprep.subr.mxu0 0.0
    %3470 = vmatpush1.msra.mxu0 0.0
    %3471 = vmatprep.subr.mxu0 0.0
    %3472 = vmatpush1.msra.mxu0 0.0
    %3473 = vmatprep.subr.mxu0 0.0
    %3474 = vmatpush1.msra.mxu0 0.0
    %3475 = vmatprep.subr.mxu0 0.0
    %3476 = vmatpush1.msra.mxu0 0.0
    %3477 = vmatprep.subr.mxu0 0.0
    %3478 = vmatpush1.msra.mxu0 0.0
    %3479 = vmatprep.subr.mxu0 0.0
    %3480 = vmatpush1.msra.mxu0 0.0
    %3481 = vmatprep.subr.mxu0 0.0
    %3482 = vmatpush1.msra.mxu0 0.0
    %3483 = vmatprep.subr.mxu0 0.0
    %3484 = vmatpush1.msra.mxu0 0.0
    %3485 = vmatprep.subr.mxu0 0.0
    %3486 = vmatpush1.msra.mxu0 0.0
    %3487 = vmatprep.subr.mxu0 0.0
    %3488 = vmatpush1.msra.mxu0 0.0
    %3489 = vmatprep.subr.mxu0 0.0
    %3490 = vmatpush1.msra.mxu0 0.0
    %3491 = vmatprep.subr.mxu0 0.0
    %3492 = vmatpush1.msra.mxu0 0.0
    %3493 = vmatprep.subr.mxu0 0.0
    %3494 = vmatpush1.msra.mxu0 0.0
    %3495 = vmatprep.subr.mxu0 0.0
    %3496 = vmatpush1.msra.mxu0 0.0
    %3497 = vmatprep.subr.mxu0 0.0
    %3498 = vmatpush1.msra.mxu0 0.0
    %3499 = vmatprep.subr.mxu0 0.0
    %3500 = vmatpush1.msra.mxu0 0.0
    %3501 = vmatprep.subr.mxu0 0.0
    %3502 = vmatpush1.msra.mxu0 0.0
    %3503 = vmatprep.subr.mxu0 0.0
    %3504 = vmatpush1.msra.mxu0 0.0
    %3505 = vmatprep.subr.mxu0 0.0
    %3506 = vmatpush1.msra.mxu0 0.0
    %3507 = vmatprep.subr.mxu0 0.0
    %3508 = vmatpush1.msra.mxu0 0.0
    %3509 = vmatprep.subr.mxu0 0.0
    %3510 = vmatpush1.msra.mxu0 0.0
    %3511 = vmatprep.mubr.f32.mxu0 0.0
    %3512 = vmatmul.mubr.f32.gmra.mrb[0].mxu0 %v3445
    %v3513 = vpop.f32.mrb[0].mxu0
    %v3514 = vadd.f32 0.0, %v3513
    %v3515 = vpop.f32.mrb[0].mxu0
    %3516 = vdwg.mxu0
    %v3518 = vrot.slane %v3514, 2
    %v3520 = vadd.f32 %v1946, %v3518
    %v3521 = vxor.u32 %v3520, 2147483648
    %v3522 = vmul.f32 %v3521, 1.442695
    %v3523 = vpow.pop %v3522
    %v3524 = vadd.f32 %v3523, 1.0
    %v3525 = vrcp.pop %v3524
    %v3526 = vmul.f32 1.0, %v3525
    %v3527 = vtanh.pop %v3520
    %v3529 = vrot.slane %v3327, 6
    %v3531 = vmul.f32 %v3526, %v3529
    %3533 = vrot.lane.b32.xlu0 %v3527, 64
    %v3534 = vpop.permute.xlu0 %3533
    %v3536 = vmul.f32 %v3526, %v3534
    %3538 = vrot.lane.b32.xlu0 %v3536, 32
    %v3539 = vpop.permute.xlu0 %3538
    %v3541 = vadd.f32 %v3531, %v3539
    %v3542 = vtanh.pop %v3541
    %3544 = vrot.lane.b32.xlu0 %v3542, 64
    %v3545 = vpop.permute.xlu0 %3544
    %v3547 = vmul.f32 %v3526, %v3545
    %3549 = vrot.lane.b32.xlu0 %v3547, 32
    %v3550 = vpop.permute.xlu0 %3549
    %v3553 = vrot.slane %v3441, 2
    %3554 = vrot.lane.b32.xlu0 %v3553, 64
    %v3555 = vpop.permute.xlu0 %3554
    %v3557 = vsel %vm1867, %v3550, %v3555
    %v3559 = vrot.slane %v3557, 6
    %v3560 = vsel %vm2071, %v3559, 0
    %3562 = vmatprep.subr.mxu0 0.0
    %3563 = vmatpush1.msra.mxu0 %v1953
    %3564 = vmatprep.subr.mxu0 0.0
    %3565 = vmatpush1.msra.mxu0 %v1954
    %3566 = vmatprep.subr.mxu0 0.0
    %3567 = vmatpush1.msra.mxu0 %v1955
    %3568 = vmatprep.subr.mxu0 0.0
    %3569 = vmatpush1.msra.mxu0 %v1956
    %3570 = vmatprep.subr.mxu0 0.0
    %3571 = vmatpush1.msra.mxu0 %v1957
    %3572 = vmatprep.subr.mxu0 0.0
    %3573 = vmatpush1.msra.mxu0 %v1958
    %3574 = vmatprep.subr.mxu0 0.0
    %3575 = vmatpush1.msra.mxu0 %v1959
    %3576 = vmatprep.subr.mxu0 0.0
    %3577 = vmatpush1.msra.mxu0 %v1960
    %3578 = vmatprep.subr.mxu0 0.0
    %3579 = vmatpush1.msra.mxu0 0.0
    %3580 = vmatprep.subr.mxu0 0.0
    %3581 = vmatpush1.msra.mxu0 0.0
    %3582 = vmatprep.subr.mxu0 0.0
    %3583 = vmatpush1.msra.mxu0 0.0
    %3584 = vmatprep.subr.mxu0 0.0
    %3585 = vmatpush1.msra.mxu0 0.0
    %3586 = vmatprep.subr.mxu0 0.0
    %3587 = vmatpush1.msra.mxu0 0.0
    %3588 = vmatprep.subr.mxu0 0.0
    %3589 = vmatpush1.msra.mxu0 0.0
    %3590 = vmatprep.subr.mxu0 0.0
    %3591 = vmatpush1.msra.mxu0 0.0
    %3592 = vmatprep.subr.mxu0 0.0
    %3593 = vmatpush1.msra.mxu0 0.0
    %3594 = vmatprep.subr.mxu0 0.0
    %3595 = vmatpush1.msra.mxu0 0.0
    %3596 = vmatprep.subr.mxu0 0.0
    %3597 = vmatpush1.msra.mxu0 0.0
    %3598 = vmatprep.subr.mxu0 0.0
    %3599 = vmatpush1.msra.mxu0 0.0
    %3600 = vmatprep.subr.mxu0 0.0
    %3601 = vmatpush1.msra.mxu0 0.0
    %3602 = vmatprep.subr.mxu0 0.0
    %3603 = vmatpush1.msra.mxu0 0.0
    %3604 = vmatprep.subr.mxu0 0.0
    %3605 = vmatpush1.msra.mxu0 0.0
    %3606 = vmatprep.subr.mxu0 0.0
    %3607 = vmatpush1.msra.mxu0 0.0
    %3608 = vmatprep.subr.mxu0 0.0
    %3609 = vmatpush1.msra.mxu0 0.0
    %3610 = vmatprep.subr.mxu0 0.0
    %3611 = vmatpush1.msra.mxu0 0.0
    %3612 = vmatprep.subr.mxu0 0.0
    %3613 = vmatpush1.msra.mxu0 0.0
    %3614 = vmatprep.subr.mxu0 0.0
    %3615 = vmatpush1.msra.mxu0 0.0
    %3616 = vmatprep.subr.mxu0 0.0
    %3617 = vmatpush1.msra.mxu0 0.0
    %3618 = vmatprep.subr.mxu0 0.0
    %3619 = vmatpush1.msra.mxu0 0.0
    %3620 = vmatprep.subr.mxu0 0.0
    %3621 = vmatpush1.msra.mxu0 0.0
    %3622 = vmatprep.subr.mxu0 0.0
    %3623 = vmatpush1.msra.mxu0 0.0
    %3624 = vmatprep.subr.mxu0 0.0
    %3625 = vmatpush1.msra.mxu0 0.0
    %3626 = vmatprep.mubr.f32.mxu0 0.0
    %3627 = vmatmul.mubr.f32.gmra.mrb[0].mxu0 %v3560
    %v3628 = vpop.f32.mrb[0].mxu0
    %v3629 = vadd.f32 %v2069, %v3628
    %v3630 = vpop.f32.mrb[0].mxu0
    %3631 = vdwg.mxu0
    %v3632 = vxor.u32 %v3629, 2147483648
    %v3633 = vmul.f32 %v3632, 1.442695
    %v3634 = vpow.pop %v3633
    %v3635 = vadd.f32 %v3634, 1.0
    %v3636 = vrcp.pop %v3635
    %v3637 = vmul.f32 1.0, %v3636
    %v3638 = vtanh.pop %v3629
    %v3639 = vmul.f32 %v3637, %v3435
    %3641 = vrot.lane.b32.xlu0 %v3638, 64
    %v3642 = vpop.permute.xlu0 %3641
    %v3644 = vmul.f32 %v3637, %v3642
    %3646 = vrot.lane.b32.xlu0 %v3644, 32
    %v3647 = vpop.permute.xlu0 %3646
    %v3649 = vadd.f32 %v3639, %v3647
    %v3650 = vtanh.pop %v3649
    %3652 = vrot.lane.b32.xlu0 %v3650, 64
    %v3653 = vpop.permute.xlu0 %3652
    %v3655 = vmul.f32 %v3637, %v3653
    %v3656 = vld [vmem:[%s12] sm:$0xff]
    %v3657 = vld [vmem:[%s12 + $0x8] sm:$0xff]
    %v3658 = vld [vmem:[%s12 + $0x10] sm:$0xff]
    %v3659 = vld [vmem:[%s12 + $0x18] sm:$0xff]
    %v3660 = vld [vmem:[#allocation2] sm:$0x1]
    %v3662 = vlaneseq
    %v3663 = vshrl.u32 %v3662, 7
    %v3664 = vsub.s32 0, %v3663
    %v3665 = vrot.slane %v3660, %v3664
    %3668 = vrot.lane.b32.xlu0 %v3655, 32
    %v3669 = vpop.permute.xlu0 %3668
    %v3670 = vsel %vm1867, %v3669, 0
    %3672 = vmatprep.subr.mxu0 0.0
    %3673 = vmatpush1.msra.mxu0 %v3656
    %3674 = vmatprep.subr.mxu0 0.0
    %3675 = vmatpush1.msra.mxu0 %v3657
    %3676 = vmatprep.subr.mxu0 0.0
    %3677 = vmatpush1.msra.mxu0 %v3658
    %3678 = vmatprep.subr.mxu0 0.0
    %3679 = vmatpush1.msra.mxu0 %v3659
    %3680 = vmatprep.subr.mxu0 0.0
    %3681 = vmatpush1.msra.mxu0 0.0
    %3682 = vmatprep.subr.mxu0 0.0
    %3683 = vmatpush1.msra.mxu0 0.0
    %3684 = vmatprep.subr.mxu0 0.0
    %3685 = vmatpush1.msra.mxu0 0.0
    %3686 = vmatprep.subr.mxu0 0.0
    %3687 = vmatpush1.msra.mxu0 0.0
    %3688 = vmatprep.subr.mxu0 0.0
    %3689 = vmatpush1.msra.mxu0 0.0
    %3690 = vmatprep.subr.mxu0 0.0
    %3691 = vmatpush1.msra.mxu0 0.0
    %3692 = vmatprep.subr.mxu0 0.0
    %3693 = vmatpush1.msra.mxu0 0.0
    %3694 = vmatprep.subr.mxu0 0.0
    %3695 = vmatpush1.msra.mxu0 0.0
    %3696 = vmatprep.subr.mxu0 0.0
    %3697 = vmatpush1.msra.mxu0 0.0
    %3698 = vmatprep.subr.mxu0 0.0
    %3699 = vmatpush1.msra.mxu0 0.0
    %3700 = vmatprep.subr.mxu0 0.0
    %3701 = vmatpush1.msra.mxu0 0.0
    %3702 = vmatprep.subr.mxu0 0.0
    %3703 = vmatpush1.msra.mxu0 0.0
    %3704 = vmatprep.subr.mxu0 0.0
    %3705 = vmatpush1.msra.mxu0 0.0
    %3706 = vmatprep.subr.mxu0 0.0
    %3707 = vmatpush1.msra.mxu0 0.0
    %3708 = vmatprep.subr.mxu0 0.0
    %3709 = vmatpush1.msra.mxu0 0.0
    %3710 = vmatprep.subr.mxu0 0.0
    %3711 = vmatpush1.msra.mxu0 0.0
    %3712 = vmatprep.subr.mxu0 0.0
    %3713 = vmatpush1.msra.mxu0 0.0
    %3714 = vmatprep.subr.mxu0 0.0
    %3715 = vmatpush1.msra.mxu0 0.0
    %3716 = vmatprep.subr.mxu0 0.0
    %3717 = vmatpush1.msra.mxu0 0.0
    %3718 = vmatprep.subr.mxu0 0.0
    %3719 = vmatpush1.msra.mxu0 0.0
    %3720 = vmatprep.subr.mxu0 0.0
    %3721 = vmatpush1.msra.mxu0 0.0
    %3722 = vmatprep.subr.mxu0 0.0
    %3723 = vmatpush1.msra.mxu0 0.0
    %3724 = vmatprep.subr.mxu0 0.0
    %3725 = vmatpush1.msra.mxu0 0.0
    %3726 = vmatprep.subr.mxu0 0.0
    %3727 = vmatpush1.msra.mxu0 0.0
    %3728 = vmatprep.subr.mxu0 0.0
    %3729 = vmatpush1.msra.mxu0 0.0
    %3730 = vmatprep.subr.mxu0 0.0
    %3731 = vmatpush1.msra.mxu0 0.0
    %3732 = vmatprep.subr.mxu0 0.0
    %3733 = vmatpush1.msra.mxu0 0.0
    %3734 = vmatprep.subr.mxu0 0.0
    %3735 = vmatpush1.msra.mxu0 0.0
    %3736 = vmatprep.mubr.f32.mxu0 0.0
    %3737 = vmatmul.mubr.f32.gmra.mrb[0].mxu0 %v3670
    %v3738 = vpop.f32.mrb[0].mxu0
    %v3739 = vadd.f32 %v3665, %v3738
    %v3740 = vpop.f32.mrb[0].mxu0
    %3741 = vdwg.mxu0
    %vm3742 = vcmask 1024
    %3743 = vst.msk [vmem:[%s14] sm:$0x3] %vm3742, %v3739
    %vm3744 = vcmask 261126
    %3745 = vst.msk [vmem:[#allocation18 - $0x6] sm:$0xc0] %vm3744, %v3550
    %s3747 = scalar_lea.vmem [#allocation18], 2
    %vm3748 = vcmask 254976
    %3749 = vst.msk [vmem:[%s3747] sm:$0x3] %vm3748, %v3669
    %3751 = vrot.lane.b32.xlu0 %v3541, 96
    %v3752 = vpop.permute.xlu0 %3751
    %3754 = vst.msk [vmem:[#allocation19 - $0x6] sm:$0xc0] %vm3744, %v3752
    %3756 = vrot.lane.b32.xlu0 %v3649, 96
    %v3757 = vpop.permute.xlu0 %3756
    %s3759 = scalar_lea.vmem [#allocation19], 2
    %3760 = vst.msk [vmem:[%s3759] sm:$0x3] %vm3748, %v3757
    // Predicated region
    $region94: #{tpu_custom_call.1} parent=1 // pred_check
      _
    $region95: #{tpu_custom_call.1} parent=1 // pred_check_branch
      %3762 = sbr.rel (0) target = $region97
    $region96: #{tpu_custom_call.1} parent=1 // pred_region
      _
    $region97: #{tpu_custom_call.1} parent=1 // pred_fallthru
      _
    // Predicated region
    $region98: #{tpu_custom_call.1} parent=1 // pred_check
      _
    $region99: #{tpu_custom_call.1} parent=1 // pred_check_branch
      %3764 = sbr.rel (0) target = $region101
    $region100: #{tpu_custom_call.1} parent=1 // pred_region
      %s3766 = ssub.s32 64, 64
      %3767 = vsyncadd [#allocation5], %s3766
      %s3768 = sshll.u32 [#allocation18], 4
      %s3769 = int_to_ptr.vmem [resolvable:$true] %s3768
      %3774 = dma.vmem_to_hbm [thread:$0]  %s3769, 64, %s15, [#allocation5], 32, 32, 2
    $region101: #{tpu_custom_call.1} parent=1 // pred_fallthru
      _
    // Predicated region
    $region102: #{tpu_custom_call.1} parent=1 // pred_check
      _
    $region103: #{tpu_custom_call.1} parent=1 // pred_check_branch
      %3776 = sbr.rel (0) target = $region105
    $region104: #{tpu_custom_call.1} parent=1 // pred_region
      %s3778 = ssub.s32 64, 64
      %3779 = vsyncadd [#allocation20], %s3778
      %s3780 = sshll.u32 [#allocation19], 4
      %s3781 = int_to_ptr.vmem [resolvable:$true] %s3780
      %3786 = dma.vmem_to_hbm [thread:$0]  %s3781, 64, %s16, [#allocation20], 32, 32, 2
    $region105: #{tpu_custom_call.1} parent=1 // pred_fallthru
      _
    // Predicated region
    $region106: #{tpu_custom_call.1} parent=1 // pred_check
      _
    $region107: #{tpu_custom_call.1} parent=1 // pred_check_branch
      %3788 = sbr.rel (0) target = $region109
    $region108: #{tpu_custom_call.1} parent=1 // pred_region
      _
    $region109: #{tpu_custom_call.1} parent=1 // pred_fallthru
      _
    // Predicated region
    $region110: #{tpu_custom_call.1} parent=1 // pred_check
      _
    $region111: #{tpu_custom_call.1} parent=1 // pred_check_branch
      %3790 = sbr.rel (0) target = $region113
    $region112: #{tpu_custom_call.1} parent=1 // pred_region
      %3791 = dma.done [#allocation5], 64
    $region113: #{tpu_custom_call.1} parent=1 // pred_fallthru
      _
    // Predicated region
    $region114: #{tpu_custom_call.1} parent=1 // pred_check
      _
    $region115: #{tpu_custom_call.1} parent=1 // pred_check_branch
      %3793 = sbr.rel (0) target = $region117
    $region116: #{tpu_custom_call.1} parent=1 // pred_region
      %3794 = dma.done [#allocation20], 64
    $region117: #{tpu_custom_call.1} parent=1 // pred_fallthru
      _
    %3795 = vsyncpa [#allocation4], 1
    %3796 = vsyncpa [#allocation7], 1
    %3797 = vsyncpa [#allocation10], 1
    %3798 = vsyncpa [#allocation13], 1
    %3799 = vsyncpa [#allocation16], 1
    %3800 = vsyncpa [#allocation5], 1
    %3801 = vsyncpa [#allocation20], 1

</llo_original>
